<compile_context>
chip_gen: v7x
topology: tpu7x:2x2x1
jax: 0.10.0
libtpu: 0.0.40
codegen_flags: <defaults>
</compile_context>

<pallas_src>
import functools

import jax
import jax.numpy as jnp
import numpy as np
from jax import lax
from jax.experimental import pallas as pl
from jax.experimental.pallas import tpu as pltpu

BP = 8  # batch rows per grid step == sublane tile height


# -----------------------------------------------------------------------------
# Fused kernel: whole model for one batch-chunk of BP rows.
# -----------------------------------------------------------------------------
def _fused_kernel(x_ref, w1_ref, b1_ref, w2_ref, b2_ref,
                  wih_ref, bih_ref, whh_ref, bhh_ref,
                  wfc_ref, bfc_ref, out_ref, gx_ref, *, T, H):
    # x_ref  : (1, T*BP, Cin)   time-major rows: row t*BP + b  <->  (time t, batch b)
    # w{1,2} : (3, Cin_l, Cout_l) conv tap weights; tap k multiplies x[t-1+k] (padding=1)
    # wih    : (C2, 3H), whh: (H, 3H), wfc: (H, n_classes)  -- pre-transposed in wrapper
    # out_ref: (1, BP, n_classes)
    # gx_ref : (T*BP, 3H) f32 VMEM scratch holding the hoisted GRU input projection
    M = T * BP
    mm_dtype = w1_ref.dtype  # matmul operand dtype (f32 or bf16); accumulation always f32

    def conv3_relu(inp, w_taps_ref, b_row_ref):
        # Shifted tap slabs via 8-row (tile-aligned) concatenation; the inserted zero rows
        # implement the sequence-end halo in-kernel. (No unaligned sublane slices.)
        zrow = jnp.zeros((BP, inp.shape[-1]), dtype=mm_dtype)
        cur = inp.astype(mm_dtype)
        prev = jnp.concatenate([zrow, cur[:M - BP, :]], axis=0)   # x[t-1, b]
        nxt = jnp.concatenate([cur[BP:, :], zrow], axis=0)        # x[t+1, b]
        acc = jnp.dot(prev, w_taps_ref[0], preferred_element_type=jnp.float32)
        acc = acc + jnp.dot(cur, w_taps_ref[1], preferred_element_type=jnp.float32)
        acc = acc + jnp.dot(nxt, w_taps_ref[2], preferred_element_type=jnp.float32)
        return jnp.maximum(acc + b_row_ref[...], 0.0)

    x = x_ref[0]                          # (M, Cin)
    y1 = conv3_relu(x, w1_ref, b1_ref)    # (M, 64)
    y2 = conv3_relu(y1, w2_ref, b2_ref)   # (M, 128)

    # GRU input projection for ALL timesteps at once (b_ih folded in) -> VMEM scratch.
    gx_ref[...] = (jnp.dot(y2.astype(mm_dtype), wih_ref[...],
                           preferred_element_type=jnp.float32) + bih_ref[...])

    bhh = jnp.broadcast_to(bhh_ref[...], (BP, 3 * H))   # hoisted broadcast (not per step)

    def step(t, h):  # h: (BP, H) f32 carried in registers; PyTorch gate order r, z, n
        off = pl.multiple_of(t * BP, BP)
        gx_t = gx_ref[pl.ds(off, BP), :]                         # (BP, 3H), aligned slice
        gh = jnp.dot(h.astype(mm_dtype), whh_ref[...],
                     preferred_element_type=jnp.float32) + bhh
        r = jax.nn.sigmoid(gx_t[:, 0:H] + gh[:, 0:H])
        z = jax.nn.sigmoid(gx_t[:, H:2 * H] + gh[:, H:2 * H])
        n = jnp.tanh(gx_t[:, 2 * H:3 * H] + r * gh[:, 2 * H:3 * H])
        return (1.0 - z) * n + z * h

    h_fin = lax.fori_loop(0, T, step, jnp.zeros((BP, H), jnp.float32),
                          unroll=T <= 64)

    out_ref[0] = (jnp.dot(h_fin.astype(mm_dtype), wfc_ref[...],
                          preferred_element_type=jnp.float32) + bfc_ref[...])


# -----------------------------------------------------------------------------
# Wrapper: layout prep on the tiny raw input + single pallas_call.
# -----------------------------------------------------------------------------
@functools.partial(jax.jit, static_argnames=("use_bf16_matmul",))
def conv_rnn_classifier(x_ncl, params, use_bf16_matmul=False):
    """x_ncl: (B, Cin, T) float32 -- PyTorch NCL layout at the boundary."""
    B, Cin, T = x_ncl.shape
    H = params["w_hh"].shape[1]
    C1 = params["conv1_w"].shape[0]
    C2 = params["conv2_w"].shape[0]
    NC = params["fc_w"].shape[0]
    NB = pl.cdiv(B, BP)
    mm_dtype = jnp.bfloat16 if use_bf16_matmul else jnp.float32

    # NCL -> (batch-chunk, time-major rows, channel); only touches the tiny raw input.
    x_btc = jnp.transpose(x_ncl, (0, 2, 1))                         # (B, T, Cin)
    x_btc = jnp.pad(x_btc, ((0, NB * BP - B), (0, 0), (0, 0)))      # pad batch to 8k rows
    x_rows = (x_btc.reshape(NB, BP, T, Cin)
              .transpose(0, 2, 1, 3)
              .reshape(NB, T * BP, Cin))

    def conv_taps(w):  # (Cout, Cin, 3) -> (3, Cin, Cout); tap k multiplies x[t-1+k]
        return jnp.transpose(w, (2, 1, 0)).astype(mm_dtype)

    args = (
        x_rows,
        conv_taps(params["conv1_w"]), params["conv1_b"].reshape(1, C1),
        conv_taps(params["conv2_w"]), params["conv2_b"].reshape(1, C2),
        params["w_ih"].T.astype(mm_dtype), params["b_ih"].reshape(1, 3 * H),
        params["w_hh"].T.astype(mm_dtype), params["b_hh"].reshape(1, 3 * H),
        params["fc_w"].T.astype(mm_dtype), params["fc_b"].reshape(1, NC),
    )

    kernel = functools.partial(_fused_kernel, T=T, H=H)

    out = pl.pallas_call(
        kernel,
        out_shape=jax.ShapeDtypeStruct((NB, BP, NC), jnp.float32),
        grid_spec=pltpu.PrefetchScalarGridSpec(
            num_scalar_prefetch=0,
            grid=(NB,),
            in_specs=[
                pl.BlockSpec((1, T * BP, Cin), lambda i: (i, 0, 0)),
                pl.BlockSpec((3, Cin, C1), lambda i: (0, 0, 0)),
                pl.BlockSpec((1, C1), lambda i: (0, 0)),
                pl.BlockSpec((3, C1, C2), lambda i: (0, 0, 0)),
                pl.BlockSpec((1, C2), lambda i: (0, 0)),
                pl.BlockSpec((C2, 3 * H), lambda i: (0, 0)),
                pl.BlockSpec((1, 3 * H), lambda i: (0, 0)),
                pl.BlockSpec((H, 3 * H), lambda i: (0, 0)),
                pl.BlockSpec((1, 3 * H), lambda i: (0, 0)),
                pl.BlockSpec((H, NC), lambda i: (0, 0)),
                pl.BlockSpec((1, NC), lambda i: (0, 0)),
            ],
            out_specs=pl.BlockSpec((1, BP, NC), lambda i: (i, 0, 0)),
            # NOTE(v7x): for very long sequences, gx scratch grows as T*BP*3H*4 bytes
            # (~12 KiB per timestep); chunk the time axis before it nears the 64 MiB VMEM.
            scratch_shapes=[pltpu.VMEM((T * BP, 3 * H), jnp.float32)],
        ),
        compiler_params=pltpu.CompilerParams(dimension_semantics=("parallel",)),
    )(*args)

    return out.reshape(NB * BP, NC)[:B]   # drop the batch-padding rows


# -----------------------------------------------------------------------------
# Pure-JAX reference for validation (PyTorch semantics).
# -----------------------------------------------------------------------------
def reference_forward(x_ncl, params):
    def conv1d(x, w, b):
        y = jax.lax.conv_general_dilated(
            x, w, window_strides=(1,), padding=((1, 1),),
            dimension_numbers=("NCH", "OIH", "NCH"))
        return y + b[None, :, None]

    h = jax.nn.relu(conv1d(x_ncl, params["conv1_w"], params["conv1_b"]))
    h = jax.nn.relu(conv1d(h, params["conv2_w"], params["conv2_b"]))
    seq = jnp.transpose(h, (0, 2, 1))  # (B, T, 128)
    B, T, _ = seq.shape
    H = params["w_hh"].shape[1]
    hid = jnp.zeros((B, H), jnp.float32)
    for t in range(T):
        x_t = seq[:, t, :]
        gx = x_t @ params["w_ih"].T + params["b_ih"]
        gh = hid @ params["w_hh"].T + params["b_hh"]
        r = jax.nn.sigmoid(gx[:, :H] + gh[:, :H])
        z = jax.nn.sigmoid(gx[:, H:2 * H] + gh[:, H:2 * H])
        n = jnp.tanh(gx[:, 2 * H:] + r * gh[:, 2 * H:])
        hid = (1.0 - z) * n + z * hid
    return hid @ params["fc_w"].T + params["fc_b"]


# -----------------------------------------------------------------------------
# Deterministic parameter init (shapes from the module's __init__).
# -----------------------------------------------------------------------------
def init_params(key, input_size=12, hidden_size=128, num_classes=71):
    ks = jax.random.split(key, 10)

    def u(k, shape, scale):
        return jax.random.uniform(k, shape, jnp.float32, -scale, scale)

    return {
        "conv1_w": u(ks[0], (64, input_size, 3), 1.0 / np.sqrt(input_size * 3)),
        "conv1_b": u(ks[1], (64,), 1.0 / np.sqrt(input_size * 3)),
        "conv2_w": u(ks[2], (128, 64, 3), 1.0 / np.sqrt(64 * 3)),
        "conv2_b": u(ks[3], (128,), 1.0 / np.sqrt(64 * 3)),
        "w_ih": u(ks[4], (3 * hidden_size, 128), 1.0 / np.sqrt(hidden_size)),
        "w_hh": u(ks[5], (3 * hidden_size, hidden_size), 1.0 / np.sqrt(hidden_size)),
        "b_ih": u(ks[6], (3 * hidden_size,), 1.0 / np.sqrt(hidden_size)),
        "b_hh": u(ks[7], (3 * hidden_size,), 1.0 / np.sqrt(hidden_size)),
        "fc_w": u(ks[8], (num_classes, hidden_size), 1.0 / np.sqrt(hidden_size)),
        "fc_b": u(ks[9], (num_classes,), 1.0 / np.sqrt(hidden_size)),
    }


if __name__ == "__main__":
    B, Cin, T = 2, 12, 16
    key = jax.random.PRNGKey(0)
    k_x, k_p = jax.random.split(key)
    x = jax.random.normal(k_x, (B, Cin, T), jnp.float32)
    params = init_params(k_p)

    out = conv_rnn_classifier(x, params)   # f32 matmuls (set use_bf16_matmul=True on v6e/v7x)
    out = jax.block_until_ready(out)

    ref = reference_forward(x, params)
    np.testing.assert_allclose(np.asarray(out), np.asarray(ref), rtol=1e-4, atol=1e-4)
    assert out.shape == (B, 71)
    print("KERNEL_OK")
</pallas_src>

<mosaic_0001>
module attributes {stable_mosaic.version = 11 : i64} {
  func.func @_fused_kernel(%arg0: i32, %arg1: memref<1x128x12xf32, #tpu.memory_space<vmem>>, %arg2: memref<3x12x64xf32, #tpu.memory_space<vmem>>, %arg3: memref<1x64xf32, #tpu.memory_space<vmem>>, %arg4: memref<3x64x128xf32, #tpu.memory_space<vmem>>, %arg5: memref<1x128xf32, #tpu.memory_space<vmem>>, %arg6: memref<128x384xf32, #tpu.memory_space<vmem>>, %arg7: memref<1x384xf32, #tpu.memory_space<vmem>>, %arg8: memref<128x384xf32, #tpu.memory_space<vmem>>, %arg9: memref<1x384xf32, #tpu.memory_space<vmem>>, %arg10: memref<128x71xf32, #tpu.memory_space<vmem>>, %arg11: memref<1x71xf32, #tpu.memory_space<vmem>>, %arg12: memref<1x8x71xf32, #tpu.memory_space<vmem>>, %arg13: memref<128x384xf32, #tpu.memory_space<vmem>>) attributes {dimension_semantics = [#tpu.dimension_semantics<parallel>], iteration_bounds = array<i64: 1>, scalar_prefetch = 0 : i64, scratch_operands = 1 : i64, tpu.core_type = #tpu.core_type<tc>, window_params = [{transform_indices = @transform_0, window_bounds = array<i64: 1, 128, 12>}, {pipeline_mode = #tpu.pipeline_mode<synchronous>, transform_indices = @transform_1, window_bounds = array<i64: 3, 12, 64>}, {pipeline_mode = #tpu.pipeline_mode<synchronous>, transform_indices = @transform_2, window_bounds = array<i64: 1, 64>}, {pipeline_mode = #tpu.pipeline_mode<synchronous>, transform_indices = @transform_3, window_bounds = array<i64: 3, 64, 128>}, {pipeline_mode = #tpu.pipeline_mode<synchronous>, transform_indices = @transform_4, window_bounds = array<i64: 1, 128>}, {pipeline_mode = #tpu.pipeline_mode<synchronous>, transform_indices = @transform_5, window_bounds = array<i64: 128, 384>}, {pipeline_mode = #tpu.pipeline_mode<synchronous>, transform_indices = @transform_6, window_bounds = array<i64: 1, 384>}, {pipeline_mode = #tpu.pipeline_mode<synchronous>, transform_indices = @transform_7, window_bounds = array<i64: 128, 384>}, {pipeline_mode = #tpu.pipeline_mode<synchronous>, transform_indices = @transform_8, window_bounds = array<i64: 1, 384>}, {pipeline_mode = #tpu.pipeline_mode<synchronous>, transform_indices = @transform_9, window_bounds = array<i64: 128, 71>}, {pipeline_mode = #tpu.pipeline_mode<synchronous>, transform_indices = @transform_10, window_bounds = array<i64: 1, 71>}, {transform_indices = @transform_11, window_bounds = array<i64: 1, 8, 71>}]} {
    %c0 = arith.constant 0 : index
    %c0_0 = arith.constant 0 : index
    %c0_1 = arith.constant 0 : index
    %0 = vector.load %arg1[%c0, %c0_0, %c0_1] : memref<1x128x12xf32, #tpu.memory_space<vmem>>, vector<1x128x12xf32>
    %1 = vector.shape_cast %0 : vector<1x128x12xf32> to vector<128x12xf32>
    %cst = arith.constant 0.000000e+00 : f32
    %2 = vector.broadcast %cst : f32 to vector<8x12xf32>
    %3 = vector.extract_strided_slice %1 {offsets = [0, 0], sizes = [120, 12], strides = [1, 1]} : vector<128x12xf32> to vector<120x12xf32>
    %4 = tpu.concatenate %2, %3 in 0 : vector<8x12xf32>, vector<120x12xf32> -> vector<128x12xf32>
    %5 = vector.extract_strided_slice %1 {offsets = [8, 0], sizes = [120, 12], strides = [1, 1]} : vector<128x12xf32> to vector<120x12xf32>
    %6 = tpu.concatenate %5, %2 in 0 : vector<120x12xf32>, vector<8x12xf32> -> vector<128x12xf32>
    %c0_2 = arith.constant 0 : index
    %c0_3 = arith.constant 0 : index
    %c0_4 = arith.constant 0 : index
    %7 = vector.load %arg2[%c0_2, %c0_3, %c0_4] : memref<3x12x64xf32, #tpu.memory_space<vmem>>, vector<1x12x64xf32>
    %8 = vector.shape_cast %7 : vector<1x12x64xf32> to vector<12x64xf32>
    %cst_5 = arith.constant dense<0.000000e+00> : vector<128x64xf32>
    %9 = tpu.matmul %4, %8, %cst_5 {dimension_numbers = #tpu.dot_dimension_numbers<[1], [0], [0], [1], [0, 0, 1, 1], [], []>} : vector<128x12xf32>, vector<12x64xf32>, vector<128x64xf32> -> vector<128x64xf32>
    %c1 = arith.constant 1 : index
    %c0_6 = arith.constant 0 : index
    %c0_7 = arith.constant 0 : index
    %10 = vector.load %arg2[%c1, %c0_6, %c0_7] : memref<3x12x64xf32, #tpu.memory_space<vmem>>, vector<1x12x64xf32>
    %11 = vector.shape_cast %10 : vector<1x12x64xf32> to vector<12x64xf32>
    %cst_8 = arith.constant dense<0.000000e+00> : vector<128x64xf32>
    %12 = tpu.matmul %1, %11, %cst_8 {dimension_numbers = #tpu.dot_dimension_numbers<[1], [0], [0], [1], [0, 0, 1, 1], [], []>} : vector<128x12xf32>, vector<12x64xf32>, vector<128x64xf32> -> vector<128x64xf32>
    %13 = arith.addf %9, %12 : vector<128x64xf32>
    %c2 = arith.constant 2 : index
    %c0_9 = arith.constant 0 : index
    %c0_10 = arith.constant 0 : index
    %14 = vector.load %arg2[%c2, %c0_9, %c0_10] : memref<3x12x64xf32, #tpu.memory_space<vmem>>, vector<1x12x64xf32>
    %15 = vector.shape_cast %14 : vector<1x12x64xf32> to vector<12x64xf32>
    %cst_11 = arith.constant dense<0.000000e+00> : vector<128x64xf32>
    %16 = tpu.matmul %6, %15, %cst_11 {dimension_numbers = #tpu.dot_dimension_numbers<[1], [0], [0], [1], [0, 0, 1, 1], [], []>} : vector<128x12xf32>, vector<12x64xf32>, vector<128x64xf32> -> vector<128x64xf32>
    %17 = arith.addf %13, %16 : vector<128x64xf32>
    %c0_12 = arith.constant 0 : index
    %c0_13 = arith.constant 0 : index
    %18 = vector.load %arg3[%c0_12, %c0_13] : memref<1x64xf32, #tpu.memory_space<vmem>>, vector<1x64xf32>
    %19 = vector.broadcast %18 : vector<1x64xf32> to vector<128x64xf32>
    %20 = arith.addf %17, %19 : vector<128x64xf32>
    %cst_14 = arith.constant 0.000000e+00 : f32
    %21 = vector.broadcast %cst_14 : f32 to vector<128x64xf32>
    %22 = arith.maximumf %20, %21 : vector<128x64xf32>
    %cst_15 = arith.constant 0.000000e+00 : f32
    %23 = vector.broadcast %cst_15 : f32 to vector<8x64xf32>
    %24 = vector.extract_strided_slice %22 {offsets = [0, 0], sizes = [120, 64], strides = [1, 1]} : vector<128x64xf32> to vector<120x64xf32>
    %25 = tpu.concatenate %23, %24 in 0 : vector<8x64xf32>, vector<120x64xf32> -> vector<128x64xf32>
    %26 = vector.extract_strided_slice %22 {offsets = [8, 0], sizes = [120, 64], strides = [1, 1]} : vector<128x64xf32> to vector<120x64xf32>
    %27 = tpu.concatenate %26, %23 in 0 : vector<120x64xf32>, vector<8x64xf32> -> vector<128x64xf32>
    %c0_16 = arith.constant 0 : index
    %c0_17 = arith.constant 0 : index
    %c0_18 = arith.constant 0 : index
    %28 = vector.load %arg4[%c0_16, %c0_17, %c0_18] : memref<3x64x128xf32, #tpu.memory_space<vmem>>, vector<1x64x128xf32>
    %29 = vector.shape_cast %28 : vector<1x64x128xf32> to vector<64x128xf32>
    %cst_19 = arith.constant dense<0.000000e+00> : vector<128x128xf32>
    %30 = tpu.matmul %25, %29, %cst_19 {dimension_numbers = #tpu.dot_dimension_numbers<[1], [0], [0], [1], [0, 0, 1, 1], [], []>} : vector<128x64xf32>, vector<64x128xf32>, vector<128x128xf32> -> vector<128x128xf32>
    %c1_20 = arith.constant 1 : index
    %c0_21 = arith.constant 0 : index
    %c0_22 = arith.constant 0 : index
    %31 = vector.load %arg4[%c1_20, %c0_21, %c0_22] : memref<3x64x128xf32, #tpu.memory_space<vmem>>, vector<1x64x128xf32>
    %32 = vector.shape_cast %31 : vector<1x64x128xf32> to vector<64x128xf32>
    %cst_23 = arith.constant dense<0.000000e+00> : vector<128x128xf32>
    %33 = tpu.matmul %22, %32, %cst_23 {dimension_numbers = #tpu.dot_dimension_numbers<[1], [0], [0], [1], [0, 0, 1, 1], [], []>} : vector<128x64xf32>, vector<64x128xf32>, vector<128x128xf32> -> vector<128x128xf32>
    %34 = arith.addf %30, %33 : vector<128x128xf32>
    %c2_24 = arith.constant 2 : index
    %c0_25 = arith.constant 0 : index
    %c0_26 = arith.constant 0 : index
    %35 = vector.load %arg4[%c2_24, %c0_25, %c0_26] : memref<3x64x128xf32, #tpu.memory_space<vmem>>, vector<1x64x128xf32>
    %36 = vector.shape_cast %35 : vector<1x64x128xf32> to vector<64x128xf32>
    %cst_27 = arith.constant dense<0.000000e+00> : vector<128x128xf32>
    %37 = tpu.matmul %27, %36, %cst_27 {dimension_numbers = #tpu.dot_dimension_numbers<[1], [0], [0], [1], [0, 0, 1, 1], [], []>} : vector<128x64xf32>, vector<64x128xf32>, vector<128x128xf32> -> vector<128x128xf32>
    %38 = arith.addf %34, %37 : vector<128x128xf32>
    %c0_28 = arith.constant 0 : index
    %c0_29 = arith.constant 0 : index
    %39 = vector.load %arg5[%c0_28, %c0_29] : memref<1x128xf32, #tpu.memory_space<vmem>>, vector<1x128xf32>
    %40 = vector.broadcast %39 : vector<1x128xf32> to vector<128x128xf32>
    %41 = arith.addf %38, %40 : vector<128x128xf32>
    %cst_30 = arith.constant 0.000000e+00 : f32
    %42 = vector.broadcast %cst_30 : f32 to vector<128x128xf32>
    %43 = arith.maximumf %41, %42 : vector<128x128xf32>
    %c0_31 = arith.constant 0 : index
    %c0_32 = arith.constant 0 : index
    %44 = vector.load %arg6[%c0_31, %c0_32] : memref<128x384xf32, #tpu.memory_space<vmem>>, vector<128x384xf32>
    %cst_33 = arith.constant dense<0.000000e+00> : vector<128x384xf32>
    %45 = tpu.matmul %43, %44, %cst_33 {dimension_numbers = #tpu.dot_dimension_numbers<[1], [0], [0], [1], [0, 0, 1, 1], [], []>} : vector<128x128xf32>, vector<128x384xf32>, vector<128x384xf32> -> vector<128x384xf32>
    %c0_34 = arith.constant 0 : index
    %c0_35 = arith.constant 0 : index
    %46 = vector.load %arg7[%c0_34, %c0_35] : memref<1x384xf32, #tpu.memory_space<vmem>>, vector<1x384xf32>
    %47 = vector.broadcast %46 : vector<1x384xf32> to vector<128x384xf32>
    %48 = arith.addf %45, %47 : vector<128x384xf32>
    %c0_36 = arith.constant 0 : index
    %c0_37 = arith.constant 0 : index
    %49 = vector.load %arg13[%c0_36, %c0_37] : memref<128x384xf32, #tpu.memory_space<vmem>>, vector<128x384xf32>
    tpu.vector_store %arg13[%c0_36, %c0_37], %48 {strides = array<i32>} : memref<128x384xf32, #tpu.memory_space<vmem>>, vector<128x384xf32>,
    %c0_38 = arith.constant 0 : index
    %c0_39 = arith.constant 0 : index
    %50 = vector.load %arg9[%c0_38, %c0_39] : memref<1x384xf32, #tpu.memory_space<vmem>>, vector<1x384xf32>
    %51 = vector.shape_cast %50 : vector<1x384xf32> to vector<1x384xf32>
    %52 = vector.broadcast %51 : vector<1x384xf32> to vector<8x384xf32>
    %cst_40 = arith.constant 0.000000e+00 : f32
    %53 = vector.broadcast %cst_40 : f32 to vector<8x128xf32>
    %c0_i32 = arith.constant 0 : i32
    %c8_i32 = arith.constant 8 : i32
    %54 = arith.muli %c0_i32, %c8_i32 : i32
    %55 = tpu.assume_multiple %54, 8 : i32
    %56 = arith.index_cast %55 : i32 to index
    %c0_41 = arith.constant 0 : index
    %57 = vector.load %arg13[%56, %c0_41] : memref<128x384xf32, #tpu.memory_space<vmem>>, vector<8x384xf32>
    %c0_42 = arith.constant 0 : index
    %c0_43 = arith.constant 0 : index
    %58 = vector.load %arg8[%c0_42, %c0_43] : memref<128x384xf32, #tpu.memory_space<vmem>>, vector<128x384xf32>
    %cst_44 = arith.constant dense<0.000000e+00> : vector<8x384xf32>
    %59 = tpu.matmul %53, %58, %cst_44 {dimension_numbers = #tpu.dot_dimension_numbers<[1], [0], [0], [1], [0, 0, 1, 1], [], []>} : vector<8x128xf32>, vector<128x384xf32>, vector<8x384xf32> -> vector<8x384xf32>
    %60 = arith.addf %59, %52 : vector<8x384xf32>
    %61 = vector.extract_strided_slice %57 {offsets = [0, 0], sizes = [8, 128], strides = [1, 1]} : vector<8x384xf32> to vector<8x128xf32>
    %62 = vector.extract_strided_slice %60 {offsets = [0, 0], sizes = [8, 128], strides = [1, 1]} : vector<8x384xf32> to vector<8x128xf32>
    %63 = arith.addf %61, %62 : vector<8x128xf32>
    %64 = arith.negf %63 : vector<8x128xf32>
    %65 = math.exp %64 : vector<8x128xf32>
    %cst_45 = arith.constant 1.000000e+00 : f32
    %66 = vector.broadcast %cst_45 : f32 to vector<8x128xf32>
    %67 = arith.addf %66, %65 : vector<8x128xf32>
    %68 = arith.divf %66, %67 : vector<8x128xf32>
    %69 = vector.extract_strided_slice %57 {offsets = [0, 128], sizes = [8, 128], strides = [1, 1]} : vector<8x384xf32> to vector<8x128xf32>
    %70 = vector.extract_strided_slice %60 {offsets = [0, 128], sizes = [8, 128], strides = [1, 1]} : vector<8x384xf32> to vector<8x128xf32>
    %71 = arith.addf %69, %70 : vector<8x128xf32>
    %72 = arith.negf %71 : vector<8x128xf32>
    %73 = math.exp %72 : vector<8x128xf32>
    %cst_46 = arith.constant 1.000000e+00 : f32
    %74 = vector.broadcast %cst_46 : f32 to vector<8x128xf32>
    %75 = arith.addf %74, %73 : vector<8x128xf32>
    %76 = arith.divf %74, %75 : vector<8x128xf32>
    %77 = vector.extract_strided_slice %57 {offsets = [0, 256], sizes = [8, 128], strides = [1, 1]} : vector<8x384xf32> to vector<8x128xf32>
    %78 = vector.extract_strided_slice %60 {offsets = [0, 256], sizes = [8, 128], strides = [1, 1]} : vector<8x384xf32> to vector<8x128xf32>
    %79 = arith.mulf %68, %78 : vector<8x128xf32>
    %80 = arith.addf %77, %79 : vector<8x128xf32>
    %81 = math.tanh %80 : vector<8x128xf32>
    %cst_47 = arith.constant 1.000000e+00 : f32
    %82 = vector.broadcast %cst_47 : f32 to vector<8x128xf32>
    %83 = arith.subf %82, %76 : vector<8x128xf32>
    %84 = arith.mulf %83, %81 : vector<8x128xf32>
    %85 = arith.mulf %76, %53 : vector<8x128xf32>
    %86 = arith.addf %84, %85 : vector<8x128xf32>
    %c1_i32 = arith.constant 1 : i32
    %c8_i32_48 = arith.constant 8 : i32
    %87 = arith.muli %c1_i32, %c8_i32_48 : i32
    %88 = tpu.assume_multiple %87, 8 : i32
    %89 = arith.index_cast %88 : i32 to index
    %c0_49 = arith.constant 0 : index
    %90 = vector.load %arg13[%89, %c0_49] : memref<128x384xf32, #tpu.memory_space<vmem>>, vector<8x384xf32>
    %c0_50 = arith.constant 0 : index
    %c0_51 = arith.constant 0 : index
    %91 = vector.load %arg8[%c0_50, %c0_51] : memref<128x384xf32, #tpu.memory_space<vmem>>, vector<128x384xf32>
    %cst_52 = arith.constant dense<0.000000e+00> : vector<8x384xf32>
    %92 = tpu.matmul %86, %91, %cst_52 {dimension_numbers = #tpu.dot_dimension_numbers<[1], [0], [0], [1], [0, 0, 1, 1], [], []>} : vector<8x128xf32>, vector<128x384xf32>, vector<8x384xf32> -> vector<8x384xf32>
    %93 = arith.addf %92, %52 : vector<8x384xf32>
    %94 = vector.extract_strided_slice %90 {offsets = [0, 0], sizes = [8, 128], strides = [1, 1]} : vector<8x384xf32> to vector<8x128xf32>
    %95 = vector.extract_strided_slice %93 {offsets = [0, 0], sizes = [8, 128], strides = [1, 1]} : vector<8x384xf32> to vector<8x128xf32>
    %96 = arith.addf %94, %95 : vector<8x128xf32>
    %97 = arith.negf %96 : vector<8x128xf32>
    %98 = math.exp %97 : vector<8x128xf32>
    %cst_53 = arith.constant 1.000000e+00 : f32
    %99 = vector.broadcast %cst_53 : f32 to vector<8x128xf32>
    %100 = arith.addf %99, %98 : vector<8x128xf32>
    %101 = arith.divf %99, %100 : vector<8x128xf32>
    %102 = vector.extract_strided_slice %90 {offsets = [0, 128], sizes = [8, 128], strides = [1, 1]} : vector<8x384xf32> to vector<8x128xf32>
    %103 = vector.extract_strided_slice %93 {offsets = [0, 128], sizes = [8, 128], strides = [1, 1]} : vector<8x384xf32> to vector<8x128xf32>
    %104 = arith.addf %102, %103 : vector<8x128xf32>
    %105 = arith.negf %104 : vector<8x128xf32>
    %106 = math.exp %105 : vector<8x128xf32>
    %cst_54 = arith.constant 1.000000e+00 : f32
    %107 = vector.broadcast %cst_54 : f32 to vector<8x128xf32>
    %108 = arith.addf %107, %106 : vector<8x128xf32>
    %109 = arith.divf %107, %108 : vector<8x128xf32>
    %110 = vector.extract_strided_slice %90 {offsets = [0, 256], sizes = [8, 128], strides = [1, 1]} : vector<8x384xf32> to vector<8x128xf32>
    %111 = vector.extract_strided_slice %93 {offsets = [0, 256], sizes = [8, 128], strides = [1, 1]} : vector<8x384xf32> to vector<8x128xf32>
    %112 = arith.mulf %101, %111 : vector<8x128xf32>
    %113 = arith.addf %110, %112 : vector<8x128xf32>
    %114 = math.tanh %113 : vector<8x128xf32>
    %cst_55 = arith.constant 1.000000e+00 : f32
    %115 = vector.broadcast %cst_55 : f32 to vector<8x128xf32>
    %116 = arith.subf %115, %109 : vector<8x128xf32>
    %117 = arith.mulf %116, %114 : vector<8x128xf32>
    %118 = arith.mulf %109, %86 : vector<8x128xf32>
    %119 = arith.addf %117, %118 : vector<8x128xf32>
    %c2_i32 = arith.constant 2 : i32
    %c8_i32_56 = arith.constant 8 : i32
    %120 = arith.muli %c2_i32, %c8_i32_56 : i32
    %121 = tpu.assume_multiple %120, 8 : i32
    %122 = arith.index_cast %121 : i32 to index
    %c0_57 = arith.constant 0 : index
    %123 = vector.load %arg13[%122, %c0_57] : memref<128x384xf32, #tpu.memory_space<vmem>>, vector<8x384xf32>
    %c0_58 = arith.constant 0 : index
    %c0_59 = arith.constant 0 : index
    %124 = vector.load %arg8[%c0_58, %c0_59] : memref<128x384xf32, #tpu.memory_space<vmem>>, vector<128x384xf32>
    %cst_60 = arith.constant dense<0.000000e+00> : vector<8x384xf32>
    %125 = tpu.matmul %119, %124, %cst_60 {dimension_numbers = #tpu.dot_dimension_numbers<[1], [0], [0], [1], [0, 0, 1, 1], [], []>} : vector<8x128xf32>, vector<128x384xf32>, vector<8x384xf32> -> vector<8x384xf32>
    %126 = arith.addf %125, %52 : vector<8x384xf32>
    %127 = vector.extract_strided_slice %123 {offsets = [0, 0], sizes = [8, 128], strides = [1, 1]} : vector<8x384xf32> to vector<8x128xf32>
    %128 = vector.extract_strided_slice %126 {offsets = [0, 0], sizes = [8, 128], strides = [1, 1]} : vector<8x384xf32> to vector<8x128xf32>
    %129 = arith.addf %127, %128 : vector<8x128xf32>
    %130 = arith.negf %129 : vector<8x128xf32>
    %131 = math.exp %130 : vector<8x128xf32>
    %cst_61 = arith.constant 1.000000e+00 : f32
    %132 = vector.broadcast %cst_61 : f32 to vector<8x128xf32>
    %133 = arith.addf %132, %131 : vector<8x128xf32>
    %134 = arith.divf %132, %133 : vector<8x128xf32>
    %135 = vector.extract_strided_slice %123 {offsets = [0, 128], sizes = [8, 128], strides = [1, 1]} : vector<8x384xf32> to vector<8x128xf32>
    %136 = vector.extract_strided_slice %126 {offsets = [0, 128], sizes = [8, 128], strides = [1, 1]} : vector<8x384xf32> to vector<8x128xf32>
    %137 = arith.addf %135, %136 : vector<8x128xf32>
    %138 = arith.negf %137 : vector<8x128xf32>
    %139 = math.exp %138 : vector<8x128xf32>
    %cst_62 = arith.constant 1.000000e+00 : f32
    %140 = vector.broadcast %cst_62 : f32 to vector<8x128xf32>
    %141 = arith.addf %140, %139 : vector<8x128xf32>
    %142 = arith.divf %140, %141 : vector<8x128xf32>
    %143 = vector.extract_strided_slice %123 {offsets = [0, 256], sizes = [8, 128], strides = [1, 1]} : vector<8x384xf32> to vector<8x128xf32>
    %144 = vector.extract_strided_slice %126 {offsets = [0, 256], sizes = [8, 128], strides = [1, 1]} : vector<8x384xf32> to vector<8x128xf32>
    %145 = arith.mulf %134, %144 : vector<8x128xf32>
    %146 = arith.addf %143, %145 : vector<8x128xf32>
    %147 = math.tanh %146 : vector<8x128xf32>
    %cst_63 = arith.constant 1.000000e+00 : f32
    %148 = vector.broadcast %cst_63 : f32 to vector<8x128xf32>
    %149 = arith.subf %148, %142 : vector<8x128xf32>
    %150 = arith.mulf %149, %147 : vector<8x128xf32>
    %151 = arith.mulf %142, %119 : vector<8x128xf32>
    %152 = arith.addf %150, %151 : vector<8x128xf32>
    %c3_i32 = arith.constant 3 : i32
    %c8_i32_64 = arith.constant 8 : i32
    %153 = arith.muli %c3_i32, %c8_i32_64 : i32
    %154 = tpu.assume_multiple %153, 8 : i32
    %155 = arith.index_cast %154 : i32 to index
    %c0_65 = arith.constant 0 : index
    %156 = vector.load %arg13[%155, %c0_65] : memref<128x384xf32, #tpu.memory_space<vmem>>, vector<8x384xf32>
    %c0_66 = arith.constant 0 : index
    %c0_67 = arith.constant 0 : index
    %157 = vector.load %arg8[%c0_66, %c0_67] : memref<128x384xf32, #tpu.memory_space<vmem>>, vector<128x384xf32>
    %cst_68 = arith.constant dense<0.000000e+00> : vector<8x384xf32>
    %158 = tpu.matmul %152, %157, %cst_68 {dimension_numbers = #tpu.dot_dimension_numbers<[1], [0], [0], [1], [0, 0, 1, 1], [], []>} : vector<8x128xf32>, vector<128x384xf32>, vector<8x384xf32> -> vector<8x384xf32>
    %159 = arith.addf %158, %52 : vector<8x384xf32>
    %160 = vector.extract_strided_slice %156 {offsets = [0, 0], sizes = [8, 128], strides = [1, 1]} : vector<8x384xf32> to vector<8x128xf32>
    %161 = vector.extract_strided_slice %159 {offsets = [0, 0], sizes = [8, 128], strides = [1, 1]} : vector<8x384xf32> to vector<8x128xf32>
    %162 = arith.addf %160, %161 : vector<8x128xf32>
    %163 = arith.negf %162 : vector<8x128xf32>
    %164 = math.exp %163 : vector<8x128xf32>
    %cst_69 = arith.constant 1.000000e+00 : f32
    %165 = vector.broadcast %cst_69 : f32 to vector<8x128xf32>
    %166 = arith.addf %165, %164 : vector<8x128xf32>
    %167 = arith.divf %165, %166 : vector<8x128xf32>
    %168 = vector.extract_strided_slice %156 {offsets = [0, 128], sizes = [8, 128], strides = [1, 1]} : vector<8x384xf32> to vector<8x128xf32>
    %169 = vector.extract_strided_slice %159 {offsets = [0, 128], sizes = [8, 128], strides = [1, 1]} : vector<8x384xf32> to vector<8x128xf32>
    %170 = arith.addf %168, %169 : vector<8x128xf32>
    %171 = arith.negf %170 : vector<8x128xf32>
    %172 = math.exp %171 : vector<8x128xf32>
    %cst_70 = arith.constant 1.000000e+00 : f32
    %173 = vector.broadcast %cst_70 : f32 to vector<8x128xf32>
    %174 = arith.addf %173, %172 : vector<8x128xf32>
    %175 = arith.divf %173, %174 : vector<8x128xf32>
    %176 = vector.extract_strided_slice %156 {offsets = [0, 256], sizes = [8, 128], strides = [1, 1]} : vector<8x384xf32> to vector<8x128xf32>
    %177 = vector.extract_strided_slice %159 {offsets = [0, 256], sizes = [8, 128], strides = [1, 1]} : vector<8x384xf32> to vector<8x128xf32>
    %178 = arith.mulf %167, %177 : vector<8x128xf32>
    %179 = arith.addf %176, %178 : vector<8x128xf32>
    %180 = math.tanh %179 : vector<8x128xf32>
    %cst_71 = arith.constant 1.000000e+00 : f32
    %181 = vector.broadcast %cst_71 : f32 to vector<8x128xf32>
    %182 = arith.subf %181, %175 : vector<8x128xf32>
    %183 = arith.mulf %182, %180 : vector<8x128xf32>
    %184 = arith.mulf %175, %152 : vector<8x128xf32>
    %185 = arith.addf %183, %184 : vector<8x128xf32>
    %c4_i32 = arith.constant 4 : i32
    %c8_i32_72 = arith.constant 8 : i32
    %186 = arith.muli %c4_i32, %c8_i32_72 : i32
    %187 = tpu.assume_multiple %186, 8 : i32
    %188 = arith.index_cast %187 : i32 to index
    %c0_73 = arith.constant 0 : index
    %189 = vector.load %arg13[%188, %c0_73] : memref<128x384xf32, #tpu.memory_space<vmem>>, vector<8x384xf32>
    %c0_74 = arith.constant 0 : index
    %c0_75 = arith.constant 0 : index
    %190 = vector.load %arg8[%c0_74, %c0_75] : memref<128x384xf32, #tpu.memory_space<vmem>>, vector<128x384xf32>
    %cst_76 = arith.constant dense<0.000000e+00> : vector<8x384xf32>
    %191 = tpu.matmul %185, %190, %cst_76 {dimension_numbers = #tpu.dot_dimension_numbers<[1], [0], [0], [1], [0, 0, 1, 1], [], []>} : vector<8x128xf32>, vector<128x384xf32>, vector<8x384xf32> -> vector<8x384xf32>
    %192 = arith.addf %191, %52 : vector<8x384xf32>
    %193 = vector.extract_strided_slice %189 {offsets = [0, 0], sizes = [8, 128], strides = [1, 1]} : vector<8x384xf32> to vector<8x128xf32>
    %194 = vector.extract_strided_slice %192 {offsets = [0, 0], sizes = [8, 128], strides = [1, 1]} : vector<8x384xf32> to vector<8x128xf32>
    %195 = arith.addf %193, %194 : vector<8x128xf32>
    %196 = arith.negf %195 : vector<8x128xf32>
    %197 = math.exp %196 : vector<8x128xf32>
    %cst_77 = arith.constant 1.000000e+00 : f32
    %198 = vector.broadcast %cst_77 : f32 to vector<8x128xf32>
    %199 = arith.addf %198, %197 : vector<8x128xf32>
    %200 = arith.divf %198, %199 : vector<8x128xf32>
    %201 = vector.extract_strided_slice %189 {offsets = [0, 128], sizes = [8, 128], strides = [1, 1]} : vector<8x384xf32> to vector<8x128xf32>
    %202 = vector.extract_strided_slice %192 {offsets = [0, 128], sizes = [8, 128], strides = [1, 1]} : vector<8x384xf32> to vector<8x128xf32>
    %203 = arith.addf %201, %202 : vector<8x128xf32>
    %204 = arith.negf %203 : vector<8x128xf32>
    %205 = math.exp %204 : vector<8x128xf32>
    %cst_78 = arith.constant 1.000000e+00 : f32
    %206 = vector.broadcast %cst_78 : f32 to vector<8x128xf32>
    %207 = arith.addf %206, %205 : vector<8x128xf32>
    %208 = arith.divf %206, %207 : vector<8x128xf32>
    %209 = vector.extract_strided_slice %189 {offsets = [0, 256], sizes = [8, 128], strides = [1, 1]} : vector<8x384xf32> to vector<8x128xf32>
    %210 = vector.extract_strided_slice %192 {offsets = [0, 256], sizes = [8, 128], strides = [1, 1]} : vector<8x384xf32> to vector<8x128xf32>
    %211 = arith.mulf %200, %210 : vector<8x128xf32>
    %212 = arith.addf %209, %211 : vector<8x128xf32>
    %213 = math.tanh %212 : vector<8x128xf32>
    %cst_79 = arith.constant 1.000000e+00 : f32
    %214 = vector.broadcast %cst_79 : f32 to vector<8x128xf32>
    %215 = arith.subf %214, %208 : vector<8x128xf32>
    %216 = arith.mulf %215, %213 : vector<8x128xf32>
    %217 = arith.mulf %208, %185 : vector<8x128xf32>
    %218 = arith.addf %216, %217 : vector<8x128xf32>
    %c5_i32 = arith.constant 5 : i32
    %c8_i32_80 = arith.constant 8 : i32
    %219 = arith.muli %c5_i32, %c8_i32_80 : i32
    %220 = tpu.assume_multiple %219, 8 : i32
    %221 = arith.index_cast %220 : i32 to index
    %c0_81 = arith.constant 0 : index
    %222 = vector.load %arg13[%221, %c0_81] : memref<128x384xf32, #tpu.memory_space<vmem>>, vector<8x384xf32>
    %c0_82 = arith.constant 0 : index
    %c0_83 = arith.constant 0 : index
    %223 = vector.load %arg8[%c0_82, %c0_83] : memref<128x384xf32, #tpu.memory_space<vmem>>, vector<128x384xf32>
    %cst_84 = arith.constant dense<0.000000e+00> : vector<8x384xf32>
    %224 = tpu.matmul %218, %223, %cst_84 {dimension_numbers = #tpu.dot_dimension_numbers<[1], [0], [0], [1], [0, 0, 1, 1], [], []>} : vector<8x128xf32>, vector<128x384xf32>, vector<8x384xf32> -> vector<8x384xf32>
    %225 = arith.addf %224, %52 : vector<8x384xf32>
    %226 = vector.extract_strided_slice %222 {offsets = [0, 0], sizes = [8, 128], strides = [1, 1]} : vector<8x384xf32> to vector<8x128xf32>
    %227 = vector.extract_strided_slice %225 {offsets = [0, 0], sizes = [8, 128], strides = [1, 1]} : vector<8x384xf32> to vector<8x128xf32>
    %228 = arith.addf %226, %227 : vector<8x128xf32>
    %229 = arith.negf %228 : vector<8x128xf32>
    %230 = math.exp %229 : vector<8x128xf32>
    %cst_85 = arith.constant 1.000000e+00 : f32
    %231 = vector.broadcast %cst_85 : f32 to vector<8x128xf32>
    %232 = arith.addf %231, %230 : vector<8x128xf32>
    %233 = arith.divf %231, %232 : vector<8x128xf32>
    %234 = vector.extract_strided_slice %222 {offsets = [0, 128], sizes = [8, 128], strides = [1, 1]} : vector<8x384xf32> to vector<8x128xf32>
    %235 = vector.extract_strided_slice %225 {offsets = [0, 128], sizes = [8, 128], strides = [1, 1]} : vector<8x384xf32> to vector<8x128xf32>
    %236 = arith.addf %234, %235 : vector<8x128xf32>
    %237 = arith.negf %236 : vector<8x128xf32>
    %238 = math.exp %237 : vector<8x128xf32>
    %cst_86 = arith.constant 1.000000e+00 : f32
    %239 = vector.broadcast %cst_86 : f32 to vector<8x128xf32>
    %240 = arith.addf %239, %238 : vector<8x128xf32>
    %241 = arith.divf %239, %240 : vector<8x128xf32>
    %242 = vector.extract_strided_slice %222 {offsets = [0, 256], sizes = [8, 128], strides = [1, 1]} : vector<8x384xf32> to vector<8x128xf32>
    %243 = vector.extract_strided_slice %225 {offsets = [0, 256], sizes = [8, 128], strides = [1, 1]} : vector<8x384xf32> to vector<8x128xf32>
    %244 = arith.mulf %233, %243 : vector<8x128xf32>
    %245 = arith.addf %242, %244 : vector<8x128xf32>
    %246 = math.tanh %245 : vector<8x128xf32>
    %cst_87 = arith.constant 1.000000e+00 : f32
    %247 = vector.broadcast %cst_87 : f32 to vector<8x128xf32>
    %248 = arith.subf %247, %241 : vector<8x128xf32>
    %249 = arith.mulf %248, %246 : vector<8x128xf32>
    %250 = arith.mulf %241, %218 : vector<8x128xf32>
    %251 = arith.addf %249, %250 : vector<8x128xf32>
    %c6_i32 = arith.constant 6 : i32
    %c8_i32_88 = arith.constant 8 : i32
    %252 = arith.muli %c6_i32, %c8_i32_88 : i32
    %253 = tpu.assume_multiple %252, 8 : i32
    %254 = arith.index_cast %253 : i32 to index
    %c0_89 = arith.constant 0 : index
    %255 = vector.load %arg13[%254, %c0_89] : memref<128x384xf32, #tpu.memory_space<vmem>>, vector<8x384xf32>
    %c0_90 = arith.constant 0 : index
    %c0_91 = arith.constant 0 : index
    %256 = vector.load %arg8[%c0_90, %c0_91] : memref<128x384xf32, #tpu.memory_space<vmem>>, vector<128x384xf32>
    %cst_92 = arith.constant dense<0.000000e+00> : vector<8x384xf32>
    %257 = tpu.matmul %251, %256, %cst_92 {dimension_numbers = #tpu.dot_dimension_numbers<[1], [0], [0], [1], [0, 0, 1, 1], [], []>} : vector<8x128xf32>, vector<128x384xf32>, vector<8x384xf32> -> vector<8x384xf32>
    %258 = arith.addf %257, %52 : vector<8x384xf32>
    %259 = vector.extract_strided_slice %255 {offsets = [0, 0], sizes = [8, 128], strides = [1, 1]} : vector<8x384xf32> to vector<8x128xf32>
    %260 = vector.extract_strided_slice %258 {offsets = [0, 0], sizes = [8, 128], strides = [1, 1]} : vector<8x384xf32> to vector<8x128xf32>
    %261 = arith.addf %259, %260 : vector<8x128xf32>
    %262 = arith.negf %261 : vector<8x128xf32>
    %263 = math.exp %262 : vector<8x128xf32>
    %cst_93 = arith.constant 1.000000e+00 : f32
    %264 = vector.broadcast %cst_93 : f32 to vector<8x128xf32>
    %265 = arith.addf %264, %263 : vector<8x128xf32>
    %266 = arith.divf %264, %265 : vector<8x128xf32>
    %267 = vector.extract_strided_slice %255 {offsets = [0, 128], sizes = [8, 128], strides = [1, 1]} : vector<8x384xf32> to vector<8x128xf32>
    %268 = vector.extract_strided_slice %258 {offsets = [0, 128], sizes = [8, 128], strides = [1, 1]} : vector<8x384xf32> to vector<8x128xf32>
    %269 = arith.addf %267, %268 : vector<8x128xf32>
    %270 = arith.negf %269 : vector<8x128xf32>
    %271 = math.exp %270 : vector<8x128xf32>
    %cst_94 = arith.constant 1.000000e+00 : f32
    %272 = vector.broadcast %cst_94 : f32 to vector<8x128xf32>
    %273 = arith.addf %272, %271 : vector<8x128xf32>
    %274 = arith.divf %272, %273 : vector<8x128xf32>
    %275 = vector.extract_strided_slice %255 {offsets = [0, 256], sizes = [8, 128], strides = [1, 1]} : vector<8x384xf32> to vector<8x128xf32>
    %276 = vector.extract_strided_slice %258 {offsets = [0, 256], sizes = [8, 128], strides = [1, 1]} : vector<8x384xf32> to vector<8x128xf32>
    %277 = arith.mulf %266, %276 : vector<8x128xf32>
    %278 = arith.addf %275, %277 : vector<8x128xf32>
    %279 = math.tanh %278 : vector<8x128xf32>
    %cst_95 = arith.constant 1.000000e+00 : f32
    %280 = vector.broadcast %cst_95 : f32 to vector<8x128xf32>
    %281 = arith.subf %280, %274 : vector<8x128xf32>
    %282 = arith.mulf %281, %279 : vector<8x128xf32>
    %283 = arith.mulf %274, %251 : vector<8x128xf32>
    %284 = arith.addf %282, %283 : vector<8x128xf32>
    %c7_i32 = arith.constant 7 : i32
    %c8_i32_96 = arith.constant 8 : i32
    %285 = arith.muli %c7_i32, %c8_i32_96 : i32
    %286 = tpu.assume_multiple %285, 8 : i32
    %287 = arith.index_cast %286 : i32 to index
    %c0_97 = arith.constant 0 : index
    %288 = vector.load %arg13[%287, %c0_97] : memref<128x384xf32, #tpu.memory_space<vmem>>, vector<8x384xf32>
    %c0_98 = arith.constant 0 : index
    %c0_99 = arith.constant 0 : index
    %289 = vector.load %arg8[%c0_98, %c0_99] : memref<128x384xf32, #tpu.memory_space<vmem>>, vector<128x384xf32>
    %cst_100 = arith.constant dense<0.000000e+00> : vector<8x384xf32>
    %290 = tpu.matmul %284, %289, %cst_100 {dimension_numbers = #tpu.dot_dimension_numbers<[1], [0], [0], [1], [0, 0, 1, 1], [], []>} : vector<8x128xf32>, vector<128x384xf32>, vector<8x384xf32> -> vector<8x384xf32>
    %291 = arith.addf %290, %52 : vector<8x384xf32>
    %292 = vector.extract_strided_slice %288 {offsets = [0, 0], sizes = [8, 128], strides = [1, 1]} : vector<8x384xf32> to vector<8x128xf32>
    %293 = vector.extract_strided_slice %291 {offsets = [0, 0], sizes = [8, 128], strides = [1, 1]} : vector<8x384xf32> to vector<8x128xf32>
    %294 = arith.addf %292, %293 : vector<8x128xf32>
    %295 = arith.negf %294 : vector<8x128xf32>
    %296 = math.exp %295 : vector<8x128xf32>
    %cst_101 = arith.constant 1.000000e+00 : f32
    %297 = vector.broadcast %cst_101 : f32 to vector<8x128xf32>
    %298 = arith.addf %297, %296 : vector<8x128xf32>
    %299 = arith.divf %297, %298 : vector<8x128xf32>
    %300 = vector.extract_strided_slice %288 {offsets = [0, 128], sizes = [8, 128], strides = [1, 1]} : vector<8x384xf32> to vector<8x128xf32>
    %301 = vector.extract_strided_slice %291 {offsets = [0, 128], sizes = [8, 128], strides = [1, 1]} : vector<8x384xf32> to vector<8x128xf32>
    %302 = arith.addf %300, %301 : vector<8x128xf32>
    %303 = arith.negf %302 : vector<8x128xf32>
    %304 = math.exp %303 : vector<8x128xf32>
    %cst_102 = arith.constant 1.000000e+00 : f32
    %305 = vector.broadcast %cst_102 : f32 to vector<8x128xf32>
    %306 = arith.addf %305, %304 : vector<8x128xf32>
    %307 = arith.divf %305, %306 : vector<8x128xf32>
    %308 = vector.extract_strided_slice %288 {offsets = [0, 256], sizes = [8, 128], strides = [1, 1]} : vector<8x384xf32> to vector<8x128xf32>
    %309 = vector.extract_strided_slice %291 {offsets = [0, 256], sizes = [8, 128], strides = [1, 1]} : vector<8x384xf32> to vector<8x128xf32>
    %310 = arith.mulf %299, %309 : vector<8x128xf32>
    %311 = arith.addf %308, %310 : vector<8x128xf32>
    %312 = math.tanh %311 : vector<8x128xf32>
    %cst_103 = arith.constant 1.000000e+00 : f32
    %313 = vector.broadcast %cst_103 : f32 to vector<8x128xf32>
    %314 = arith.subf %313, %307 : vector<8x128xf32>
    %315 = arith.mulf %314, %312 : vector<8x128xf32>
    %316 = arith.mulf %307, %284 : vector<8x128xf32>
    %317 = arith.addf %315, %316 : vector<8x128xf32>
    %c8_i32_104 = arith.constant 8 : i32
    %c8_i32_105 = arith.constant 8 : i32
    %318 = arith.muli %c8_i32_104, %c8_i32_105 : i32
    %319 = tpu.assume_multiple %318, 8 : i32
    %320 = arith.index_cast %319 : i32 to index
    %c0_106 = arith.constant 0 : index
    %321 = vector.load %arg13[%320, %c0_106] : memref<128x384xf32, #tpu.memory_space<vmem>>, vector<8x384xf32>
    %c0_107 = arith.constant 0 : index
    %c0_108 = arith.constant 0 : index
    %322 = vector.load %arg8[%c0_107, %c0_108] : memref<128x384xf32, #tpu.memory_space<vmem>>, vector<128x384xf32>
    %cst_109 = arith.constant dense<0.000000e+00> : vector<8x384xf32>
    %323 = tpu.matmul %317, %322, %cst_109 {dimension_numbers = #tpu.dot_dimension_numbers<[1], [0], [0], [1], [0, 0, 1, 1], [], []>} : vector<8x128xf32>, vector<128x384xf32>, vector<8x384xf32> -> vector<8x384xf32>
    %324 = arith.addf %323, %52 : vector<8x384xf32>
    %325 = vector.extract_strided_slice %321 {offsets = [0, 0], sizes = [8, 128], strides = [1, 1]} : vector<8x384xf32> to vector<8x128xf32>
    %326 = vector.extract_strided_slice %324 {offsets = [0, 0], sizes = [8, 128], strides = [1, 1]} : vector<8x384xf32> to vector<8x128xf32>
    %327 = arith.addf %325, %326 : vector<8x128xf32>
    %328 = arith.negf %327 : vector<8x128xf32>
    %329 = math.exp %328 : vector<8x128xf32>
    %cst_110 = arith.constant 1.000000e+00 : f32
    %330 = vector.broadcast %cst_110 : f32 to vector<8x128xf32>
    %331 = arith.addf %330, %329 : vector<8x128xf32>
    %332 = arith.divf %330, %331 : vector<8x128xf32>
    %333 = vector.extract_strided_slice %321 {offsets = [0, 128], sizes = [8, 128], strides = [1, 1]} : vector<8x384xf32> to vector<8x128xf32>
    %334 = vector.extract_strided_slice %324 {offsets = [0, 128], sizes = [8, 128], strides = [1, 1]} : vector<8x384xf32> to vector<8x128xf32>
    %335 = arith.addf %333, %334 : vector<8x128xf32>
    %336 = arith.negf %335 : vector<8x128xf32>
    %337 = math.exp %336 : vector<8x128xf32>
    %cst_111 = arith.constant 1.000000e+00 : f32
    %338 = vector.broadcast %cst_111 : f32 to vector<8x128xf32>
    %339 = arith.addf %338, %337 : vector<8x128xf32>
    %340 = arith.divf %338, %339 : vector<8x128xf32>
    %341 = vector.extract_strided_slice %321 {offsets = [0, 256], sizes = [8, 128], strides = [1, 1]} : vector<8x384xf32> to vector<8x128xf32>
    %342 = vector.extract_strided_slice %324 {offsets = [0, 256], sizes = [8, 128], strides = [1, 1]} : vector<8x384xf32> to vector<8x128xf32>
    %343 = arith.mulf %332, %342 : vector<8x128xf32>
    %344 = arith.addf %341, %343 : vector<8x128xf32>
    %345 = math.tanh %344 : vector<8x128xf32>
    %cst_112 = arith.constant 1.000000e+00 : f32
    %346 = vector.broadcast %cst_112 : f32 to vector<8x128xf32>
    %347 = arith.subf %346, %340 : vector<8x128xf32>
    %348 = arith.mulf %347, %345 : vector<8x128xf32>
    %349 = arith.mulf %340, %317 : vector<8x128xf32>
    %350 = arith.addf %348, %349 : vector<8x128xf32>
    %c9_i32 = arith.constant 9 : i32
    %c8_i32_113 = arith.constant 8 : i32
    %351 = arith.muli %c9_i32, %c8_i32_113 : i32
    %352 = tpu.assume_multiple %351, 8 : i32
    %353 = arith.index_cast %352 : i32 to index
    %c0_114 = arith.constant 0 : index
    %354 = vector.load %arg13[%353, %c0_114] : memref<128x384xf32, #tpu.memory_space<vmem>>, vector<8x384xf32>
    %c0_115 = arith.constant 0 : index
    %c0_116 = arith.constant 0 : index
    %355 = vector.load %arg8[%c0_115, %c0_116] : memref<128x384xf32, #tpu.memory_space<vmem>>, vector<128x384xf32>
    %cst_117 = arith.constant dense<0.000000e+00> : vector<8x384xf32>
    %356 = tpu.matmul %350, %355, %cst_117 {dimension_numbers = #tpu.dot_dimension_numbers<[1], [0], [0], [1], [0, 0, 1, 1], [], []>} : vector<8x128xf32>, vector<128x384xf32>, vector<8x384xf32> -> vector<8x384xf32>
    %357 = arith.addf %356, %52 : vector<8x384xf32>
    %358 = vector.extract_strided_slice %354 {offsets = [0, 0], sizes = [8, 128], strides = [1, 1]} : vector<8x384xf32> to vector<8x128xf32>
    %359 = vector.extract_strided_slice %357 {offsets = [0, 0], sizes = [8, 128], strides = [1, 1]} : vector<8x384xf32> to vector<8x128xf32>
    %360 = arith.addf %358, %359 : vector<8x128xf32>
    %361 = arith.negf %360 : vector<8x128xf32>
    %362 = math.exp %361 : vector<8x128xf32>
    %cst_118 = arith.constant 1.000000e+00 : f32
    %363 = vector.broadcast %cst_118 : f32 to vector<8x128xf32>
    %364 = arith.addf %363, %362 : vector<8x128xf32>
    %365 = arith.divf %363, %364 : vector<8x128xf32>
    %366 = vector.extract_strided_slice %354 {offsets = [0, 128], sizes = [8, 128], strides = [1, 1]} : vector<8x384xf32> to vector<8x128xf32>
    %367 = vector.extract_strided_slice %357 {offsets = [0, 128], sizes = [8, 128], strides = [1, 1]} : vector<8x384xf32> to vector<8x128xf32>
    %368 = arith.addf %366, %367 : vector<8x128xf32>
    %369 = arith.negf %368 : vector<8x128xf32>
    %370 = math.exp %369 : vector<8x128xf32>
    %cst_119 = arith.constant 1.000000e+00 : f32
    %371 = vector.broadcast %cst_119 : f32 to vector<8x128xf32>
    %372 = arith.addf %371, %370 : vector<8x128xf32>
    %373 = arith.divf %371, %372 : vector<8x128xf32>
    %374 = vector.extract_strided_slice %354 {offsets = [0, 256], sizes = [8, 128], strides = [1, 1]} : vector<8x384xf32> to vector<8x128xf32>
    %375 = vector.extract_strided_slice %357 {offsets = [0, 256], sizes = [8, 128], strides = [1, 1]} : vector<8x384xf32> to vector<8x128xf32>
    %376 = arith.mulf %365, %375 : vector<8x128xf32>
    %377 = arith.addf %374, %376 : vector<8x128xf32>
    %378 = math.tanh %377 : vector<8x128xf32>
    %cst_120 = arith.constant 1.000000e+00 : f32
    %379 = vector.broadcast %cst_120 : f32 to vector<8x128xf32>
    %380 = arith.subf %379, %373 : vector<8x128xf32>
    %381 = arith.mulf %380, %378 : vector<8x128xf32>
    %382 = arith.mulf %373, %350 : vector<8x128xf32>
    %383 = arith.addf %381, %382 : vector<8x128xf32>
    %c10_i32 = arith.constant 10 : i32
    %c8_i32_121 = arith.constant 8 : i32
    %384 = arith.muli %c10_i32, %c8_i32_121 : i32
    %385 = tpu.assume_multiple %384, 8 : i32
    %386 = arith.index_cast %385 : i32 to index
    %c0_122 = arith.constant 0 : index
    %387 = vector.load %arg13[%386, %c0_122] : memref<128x384xf32, #tpu.memory_space<vmem>>, vector<8x384xf32>
    %c0_123 = arith.constant 0 : index
    %c0_124 = arith.constant 0 : index
    %388 = vector.load %arg8[%c0_123, %c0_124] : memref<128x384xf32, #tpu.memory_space<vmem>>, vector<128x384xf32>
    %cst_125 = arith.constant dense<0.000000e+00> : vector<8x384xf32>
    %389 = tpu.matmul %383, %388, %cst_125 {dimension_numbers = #tpu.dot_dimension_numbers<[1], [0], [0], [1], [0, 0, 1, 1], [], []>} : vector<8x128xf32>, vector<128x384xf32>, vector<8x384xf32> -> vector<8x384xf32>
    %390 = arith.addf %389, %52 : vector<8x384xf32>
    %391 = vector.extract_strided_slice %387 {offsets = [0, 0], sizes = [8, 128], strides = [1, 1]} : vector<8x384xf32> to vector<8x128xf32>
    %392 = vector.extract_strided_slice %390 {offsets = [0, 0], sizes = [8, 128], strides = [1, 1]} : vector<8x384xf32> to vector<8x128xf32>
    %393 = arith.addf %391, %392 : vector<8x128xf32>
    %394 = arith.negf %393 : vector<8x128xf32>
    %395 = math.exp %394 : vector<8x128xf32>
    %cst_126 = arith.constant 1.000000e+00 : f32
    %396 = vector.broadcast %cst_126 : f32 to vector<8x128xf32>
    %397 = arith.addf %396, %395 : vector<8x128xf32>
    %398 = arith.divf %396, %397 : vector<8x128xf32>
    %399 = vector.extract_strided_slice %387 {offsets = [0, 128], sizes = [8, 128], strides = [1, 1]} : vector<8x384xf32> to vector<8x128xf32>
    %400 = vector.extract_strided_slice %390 {offsets = [0, 128], sizes = [8, 128], strides = [1, 1]} : vector<8x384xf32> to vector<8x128xf32>
    %401 = arith.addf %399, %400 : vector<8x128xf32>
    %402 = arith.negf %401 : vector<8x128xf32>
    %403 = math.exp %402 : vector<8x128xf32>
    %cst_127 = arith.constant 1.000000e+00 : f32
    %404 = vector.broadcast %cst_127 : f32 to vector<8x128xf32>
    %405 = arith.addf %404, %403 : vector<8x128xf32>
    %406 = arith.divf %404, %405 : vector<8x128xf32>
    %407 = vector.extract_strided_slice %387 {offsets = [0, 256], sizes = [8, 128], strides = [1, 1]} : vector<8x384xf32> to vector<8x128xf32>
    %408 = vector.extract_strided_slice %390 {offsets = [0, 256], sizes = [8, 128], strides = [1, 1]} : vector<8x384xf32> to vector<8x128xf32>
    %409 = arith.mulf %398, %408 : vector<8x128xf32>
    %410 = arith.addf %407, %409 : vector<8x128xf32>
    %411 = math.tanh %410 : vector<8x128xf32>
    %cst_128 = arith.constant 1.000000e+00 : f32
    %412 = vector.broadcast %cst_128 : f32 to vector<8x128xf32>
    %413 = arith.subf %412, %406 : vector<8x128xf32>
    %414 = arith.mulf %413, %411 : vector<8x128xf32>
    %415 = arith.mulf %406, %383 : vector<8x128xf32>
    %416 = arith.addf %414, %415 : vector<8x128xf32>
    %c11_i32 = arith.constant 11 : i32
    %c8_i32_129 = arith.constant 8 : i32
    %417 = arith.muli %c11_i32, %c8_i32_129 : i32
    %418 = tpu.assume_multiple %417, 8 : i32
    %419 = arith.index_cast %418 : i32 to index
    %c0_130 = arith.constant 0 : index
    %420 = vector.load %arg13[%419, %c0_130] : memref<128x384xf32, #tpu.memory_space<vmem>>, vector<8x384xf32>
    %c0_131 = arith.constant 0 : index
    %c0_132 = arith.constant 0 : index
    %421 = vector.load %arg8[%c0_131, %c0_132] : memref<128x384xf32, #tpu.memory_space<vmem>>, vector<128x384xf32>
    %cst_133 = arith.constant dense<0.000000e+00> : vector<8x384xf32>
    %422 = tpu.matmul %416, %421, %cst_133 {dimension_numbers = #tpu.dot_dimension_numbers<[1], [0], [0], [1], [0, 0, 1, 1], [], []>} : vector<8x128xf32>, vector<128x384xf32>, vector<8x384xf32> -> vector<8x384xf32>
    %423 = arith.addf %422, %52 : vector<8x384xf32>
    %424 = vector.extract_strided_slice %420 {offsets = [0, 0], sizes = [8, 128], strides = [1, 1]} : vector<8x384xf32> to vector<8x128xf32>
    %425 = vector.extract_strided_slice %423 {offsets = [0, 0], sizes = [8, 128], strides = [1, 1]} : vector<8x384xf32> to vector<8x128xf32>
    %426 = arith.addf %424, %425 : vector<8x128xf32>
    %427 = arith.negf %426 : vector<8x128xf32>
    %428 = math.exp %427 : vector<8x128xf32>
    %cst_134 = arith.constant 1.000000e+00 : f32
    %429 = vector.broadcast %cst_134 : f32 to vector<8x128xf32>
    %430 = arith.addf %429, %428 : vector<8x128xf32>
    %431 = arith.divf %429, %430 : vector<8x128xf32>
    %432 = vector.extract_strided_slice %420 {offsets = [0, 128], sizes = [8, 128], strides = [1, 1]} : vector<8x384xf32> to vector<8x128xf32>
    %433 = vector.extract_strided_slice %423 {offsets = [0, 128], sizes = [8, 128], strides = [1, 1]} : vector<8x384xf32> to vector<8x128xf32>
    %434 = arith.addf %432, %433 : vector<8x128xf32>
    %435 = arith.negf %434 : vector<8x128xf32>
    %436 = math.exp %435 : vector<8x128xf32>
    %cst_135 = arith.constant 1.000000e+00 : f32
    %437 = vector.broadcast %cst_135 : f32 to vector<8x128xf32>
    %438 = arith.addf %437, %436 : vector<8x128xf32>
    %439 = arith.divf %437, %438 : vector<8x128xf32>
    %440 = vector.extract_strided_slice %420 {offsets = [0, 256], sizes = [8, 128], strides = [1, 1]} : vector<8x384xf32> to vector<8x128xf32>
    %441 = vector.extract_strided_slice %423 {offsets = [0, 256], sizes = [8, 128], strides = [1, 1]} : vector<8x384xf32> to vector<8x128xf32>
    %442 = arith.mulf %431, %441 : vector<8x128xf32>
    %443 = arith.addf %440, %442 : vector<8x128xf32>
    %444 = math.tanh %443 : vector<8x128xf32>
    %cst_136 = arith.constant 1.000000e+00 : f32
    %445 = vector.broadcast %cst_136 : f32 to vector<8x128xf32>
    %446 = arith.subf %445, %439 : vector<8x128xf32>
    %447 = arith.mulf %446, %444 : vector<8x128xf32>
    %448 = arith.mulf %439, %416 : vector<8x128xf32>
    %449 = arith.addf %447, %448 : vector<8x128xf32>
    %c12_i32 = arith.constant 12 : i32
    %c8_i32_137 = arith.constant 8 : i32
    %450 = arith.muli %c12_i32, %c8_i32_137 : i32
    %451 = tpu.assume_multiple %450, 8 : i32
    %452 = arith.index_cast %451 : i32 to index
    %c0_138 = arith.constant 0 : index
    %453 = vector.load %arg13[%452, %c0_138] : memref<128x384xf32, #tpu.memory_space<vmem>>, vector<8x384xf32>
    %c0_139 = arith.constant 0 : index
    %c0_140 = arith.constant 0 : index
    %454 = vector.load %arg8[%c0_139, %c0_140] : memref<128x384xf32, #tpu.memory_space<vmem>>, vector<128x384xf32>
    %cst_141 = arith.constant dense<0.000000e+00> : vector<8x384xf32>
    %455 = tpu.matmul %449, %454, %cst_141 {dimension_numbers = #tpu.dot_dimension_numbers<[1], [0], [0], [1], [0, 0, 1, 1], [], []>} : vector<8x128xf32>, vector<128x384xf32>, vector<8x384xf32> -> vector<8x384xf32>
    %456 = arith.addf %455, %52 : vector<8x384xf32>
    %457 = vector.extract_strided_slice %453 {offsets = [0, 0], sizes = [8, 128], strides = [1, 1]} : vector<8x384xf32> to vector<8x128xf32>
    %458 = vector.extract_strided_slice %456 {offsets = [0, 0], sizes = [8, 128], strides = [1, 1]} : vector<8x384xf32> to vector<8x128xf32>
    %459 = arith.addf %457, %458 : vector<8x128xf32>
    %460 = arith.negf %459 : vector<8x128xf32>
    %461 = math.exp %460 : vector<8x128xf32>
    %cst_142 = arith.constant 1.000000e+00 : f32
    %462 = vector.broadcast %cst_142 : f32 to vector<8x128xf32>
    %463 = arith.addf %462, %461 : vector<8x128xf32>
    %464 = arith.divf %462, %463 : vector<8x128xf32>
    %465 = vector.extract_strided_slice %453 {offsets = [0, 128], sizes = [8, 128], strides = [1, 1]} : vector<8x384xf32> to vector<8x128xf32>
    %466 = vector.extract_strided_slice %456 {offsets = [0, 128], sizes = [8, 128], strides = [1, 1]} : vector<8x384xf32> to vector<8x128xf32>
    %467 = arith.addf %465, %466 : vector<8x128xf32>
    %468 = arith.negf %467 : vector<8x128xf32>
    %469 = math.exp %468 : vector<8x128xf32>
    %cst_143 = arith.constant 1.000000e+00 : f32
    %470 = vector.broadcast %cst_143 : f32 to vector<8x128xf32>
    %471 = arith.addf %470, %469 : vector<8x128xf32>
    %472 = arith.divf %470, %471 : vector<8x128xf32>
    %473 = vector.extract_strided_slice %453 {offsets = [0, 256], sizes = [8, 128], strides = [1, 1]} : vector<8x384xf32> to vector<8x128xf32>
    %474 = vector.extract_strided_slice %456 {offsets = [0, 256], sizes = [8, 128], strides = [1, 1]} : vector<8x384xf32> to vector<8x128xf32>
    %475 = arith.mulf %464, %474 : vector<8x128xf32>
    %476 = arith.addf %473, %475 : vector<8x128xf32>
    %477 = math.tanh %476 : vector<8x128xf32>
    %cst_144 = arith.constant 1.000000e+00 : f32
    %478 = vector.broadcast %cst_144 : f32 to vector<8x128xf32>
    %479 = arith.subf %478, %472 : vector<8x128xf32>
    %480 = arith.mulf %479, %477 : vector<8x128xf32>
    %481 = arith.mulf %472, %449 : vector<8x128xf32>
    %482 = arith.addf %480, %481 : vector<8x128xf32>
    %c13_i32 = arith.constant 13 : i32
    %c8_i32_145 = arith.constant 8 : i32
    %483 = arith.muli %c13_i32, %c8_i32_145 : i32
    %484 = tpu.assume_multiple %483, 8 : i32
    %485 = arith.index_cast %484 : i32 to index
    %c0_146 = arith.constant 0 : index
    %486 = vector.load %arg13[%485, %c0_146] : memref<128x384xf32, #tpu.memory_space<vmem>>, vector<8x384xf32>
    %c0_147 = arith.constant 0 : index
    %c0_148 = arith.constant 0 : index
    %487 = vector.load %arg8[%c0_147, %c0_148] : memref<128x384xf32, #tpu.memory_space<vmem>>, vector<128x384xf32>
    %cst_149 = arith.constant dense<0.000000e+00> : vector<8x384xf32>
    %488 = tpu.matmul %482, %487, %cst_149 {dimension_numbers = #tpu.dot_dimension_numbers<[1], [0], [0], [1], [0, 0, 1, 1], [], []>} : vector<8x128xf32>, vector<128x384xf32>, vector<8x384xf32> -> vector<8x384xf32>
    %489 = arith.addf %488, %52 : vector<8x384xf32>
    %490 = vector.extract_strided_slice %486 {offsets = [0, 0], sizes = [8, 128], strides = [1, 1]} : vector<8x384xf32> to vector<8x128xf32>
    %491 = vector.extract_strided_slice %489 {offsets = [0, 0], sizes = [8, 128], strides = [1, 1]} : vector<8x384xf32> to vector<8x128xf32>
    %492 = arith.addf %490, %491 : vector<8x128xf32>
    %493 = arith.negf %492 : vector<8x128xf32>
    %494 = math.exp %493 : vector<8x128xf32>
    %cst_150 = arith.constant 1.000000e+00 : f32
    %495 = vector.broadcast %cst_150 : f32 to vector<8x128xf32>
    %496 = arith.addf %495, %494 : vector<8x128xf32>
    %497 = arith.divf %495, %496 : vector<8x128xf32>
    %498 = vector.extract_strided_slice %486 {offsets = [0, 128], sizes = [8, 128], strides = [1, 1]} : vector<8x384xf32> to vector<8x128xf32>
    %499 = vector.extract_strided_slice %489 {offsets = [0, 128], sizes = [8, 128], strides = [1, 1]} : vector<8x384xf32> to vector<8x128xf32>
    %500 = arith.addf %498, %499 : vector<8x128xf32>
    %501 = arith.negf %500 : vector<8x128xf32>
    %502 = math.exp %501 : vector<8x128xf32>
    %cst_151 = arith.constant 1.000000e+00 : f32
    %503 = vector.broadcast %cst_151 : f32 to vector<8x128xf32>
    %504 = arith.addf %503, %502 : vector<8x128xf32>
    %505 = arith.divf %503, %504 : vector<8x128xf32>
    %506 = vector.extract_strided_slice %486 {offsets = [0, 256], sizes = [8, 128], strides = [1, 1]} : vector<8x384xf32> to vector<8x128xf32>
    %507 = vector.extract_strided_slice %489 {offsets = [0, 256], sizes = [8, 128], strides = [1, 1]} : vector<8x384xf32> to vector<8x128xf32>
    %508 = arith.mulf %497, %507 : vector<8x128xf32>
    %509 = arith.addf %506, %508 : vector<8x128xf32>
    %510 = math.tanh %509 : vector<8x128xf32>
    %cst_152 = arith.constant 1.000000e+00 : f32
    %511 = vector.broadcast %cst_152 : f32 to vector<8x128xf32>
    %512 = arith.subf %511, %505 : vector<8x128xf32>
    %513 = arith.mulf %512, %510 : vector<8x128xf32>
    %514 = arith.mulf %505, %482 : vector<8x128xf32>
    %515 = arith.addf %513, %514 : vector<8x128xf32>
    %c14_i32 = arith.constant 14 : i32
    %c8_i32_153 = arith.constant 8 : i32
    %516 = arith.muli %c14_i32, %c8_i32_153 : i32
    %517 = tpu.assume_multiple %516, 8 : i32
    %518 = arith.index_cast %517 : i32 to index
    %c0_154 = arith.constant 0 : index
    %519 = vector.load %arg13[%518, %c0_154] : memref<128x384xf32, #tpu.memory_space<vmem>>, vector<8x384xf32>
    %c0_155 = arith.constant 0 : index
    %c0_156 = arith.constant 0 : index
    %520 = vector.load %arg8[%c0_155, %c0_156] : memref<128x384xf32, #tpu.memory_space<vmem>>, vector<128x384xf32>
    %cst_157 = arith.constant dense<0.000000e+00> : vector<8x384xf32>
    %521 = tpu.matmul %515, %520, %cst_157 {dimension_numbers = #tpu.dot_dimension_numbers<[1], [0], [0], [1], [0, 0, 1, 1], [], []>} : vector<8x128xf32>, vector<128x384xf32>, vector<8x384xf32> -> vector<8x384xf32>
    %522 = arith.addf %521, %52 : vector<8x384xf32>
    %523 = vector.extract_strided_slice %519 {offsets = [0, 0], sizes = [8, 128], strides = [1, 1]} : vector<8x384xf32> to vector<8x128xf32>
    %524 = vector.extract_strided_slice %522 {offsets = [0, 0], sizes = [8, 128], strides = [1, 1]} : vector<8x384xf32> to vector<8x128xf32>
    %525 = arith.addf %523, %524 : vector<8x128xf32>
    %526 = arith.negf %525 : vector<8x128xf32>
    %527 = math.exp %526 : vector<8x128xf32>
    %cst_158 = arith.constant 1.000000e+00 : f32
    %528 = vector.broadcast %cst_158 : f32 to vector<8x128xf32>
    %529 = arith.addf %528, %527 : vector<8x128xf32>
    %530 = arith.divf %528, %529 : vector<8x128xf32>
    %531 = vector.extract_strided_slice %519 {offsets = [0, 128], sizes = [8, 128], strides = [1, 1]} : vector<8x384xf32> to vector<8x128xf32>
    %532 = vector.extract_strided_slice %522 {offsets = [0, 128], sizes = [8, 128], strides = [1, 1]} : vector<8x384xf32> to vector<8x128xf32>
    %533 = arith.addf %531, %532 : vector<8x128xf32>
    %534 = arith.negf %533 : vector<8x128xf32>
    %535 = math.exp %534 : vector<8x128xf32>
    %cst_159 = arith.constant 1.000000e+00 : f32
    %536 = vector.broadcast %cst_159 : f32 to vector<8x128xf32>
    %537 = arith.addf %536, %535 : vector<8x128xf32>
    %538 = arith.divf %536, %537 : vector<8x128xf32>
    %539 = vector.extract_strided_slice %519 {offsets = [0, 256], sizes = [8, 128], strides = [1, 1]} : vector<8x384xf32> to vector<8x128xf32>
    %540 = vector.extract_strided_slice %522 {offsets = [0, 256], sizes = [8, 128], strides = [1, 1]} : vector<8x384xf32> to vector<8x128xf32>
    %541 = arith.mulf %530, %540 : vector<8x128xf32>
    %542 = arith.addf %539, %541 : vector<8x128xf32>
    %543 = math.tanh %542 : vector<8x128xf32>
    %cst_160 = arith.constant 1.000000e+00 : f32
    %544 = vector.broadcast %cst_160 : f32 to vector<8x128xf32>
    %545 = arith.subf %544, %538 : vector<8x128xf32>
    %546 = arith.mulf %545, %543 : vector<8x128xf32>
    %547 = arith.mulf %538, %515 : vector<8x128xf32>
    %548 = arith.addf %546, %547 : vector<8x128xf32>
    %c15_i32 = arith.constant 15 : i32
    %c8_i32_161 = arith.constant 8 : i32
    %549 = arith.muli %c15_i32, %c8_i32_161 : i32
    %550 = tpu.assume_multiple %549, 8 : i32
    %551 = arith.index_cast %550 : i32 to index
    %c0_162 = arith.constant 0 : index
    %552 = vector.load %arg13[%551, %c0_162] : memref<128x384xf32, #tpu.memory_space<vmem>>, vector<8x384xf32>
    %c0_163 = arith.constant 0 : index
    %c0_164 = arith.constant 0 : index
    %553 = vector.load %arg8[%c0_163, %c0_164] : memref<128x384xf32, #tpu.memory_space<vmem>>, vector<128x384xf32>
    %cst_165 = arith.constant dense<0.000000e+00> : vector<8x384xf32>
    %554 = tpu.matmul %548, %553, %cst_165 {dimension_numbers = #tpu.dot_dimension_numbers<[1], [0], [0], [1], [0, 0, 1, 1], [], []>} : vector<8x128xf32>, vector<128x384xf32>, vector<8x384xf32> -> vector<8x384xf32>
    %555 = arith.addf %554, %52 : vector<8x384xf32>
    %556 = vector.extract_strided_slice %552 {offsets = [0, 0], sizes = [8, 128], strides = [1, 1]} : vector<8x384xf32> to vector<8x128xf32>
    %557 = vector.extract_strided_slice %555 {offsets = [0, 0], sizes = [8, 128], strides = [1, 1]} : vector<8x384xf32> to vector<8x128xf32>
    %558 = arith.addf %556, %557 : vector<8x128xf32>
    %559 = arith.negf %558 : vector<8x128xf32>
    %560 = math.exp %559 : vector<8x128xf32>
    %cst_166 = arith.constant 1.000000e+00 : f32
    %561 = vector.broadcast %cst_166 : f32 to vector<8x128xf32>
    %562 = arith.addf %561, %560 : vector<8x128xf32>
    %563 = arith.divf %561, %562 : vector<8x128xf32>
    %564 = vector.extract_strided_slice %552 {offsets = [0, 128], sizes = [8, 128], strides = [1, 1]} : vector<8x384xf32> to vector<8x128xf32>
    %565 = vector.extract_strided_slice %555 {offsets = [0, 128], sizes = [8, 128], strides = [1, 1]} : vector<8x384xf32> to vector<8x128xf32>
    %566 = arith.addf %564, %565 : vector<8x128xf32>
    %567 = arith.negf %566 : vector<8x128xf32>
    %568 = math.exp %567 : vector<8x128xf32>
    %cst_167 = arith.constant 1.000000e+00 : f32
    %569 = vector.broadcast %cst_167 : f32 to vector<8x128xf32>
    %570 = arith.addf %569, %568 : vector<8x128xf32>
    %571 = arith.divf %569, %570 : vector<8x128xf32>
    %572 = vector.extract_strided_slice %552 {offsets = [0, 256], sizes = [8, 128], strides = [1, 1]} : vector<8x384xf32> to vector<8x128xf32>
    %573 = vector.extract_strided_slice %555 {offsets = [0, 256], sizes = [8, 128], strides = [1, 1]} : vector<8x384xf32> to vector<8x128xf32>
    %574 = arith.mulf %563, %573 : vector<8x128xf32>
    %575 = arith.addf %572, %574 : vector<8x128xf32>
    %576 = math.tanh %575 : vector<8x128xf32>
    %cst_168 = arith.constant 1.000000e+00 : f32
    %577 = vector.broadcast %cst_168 : f32 to vector<8x128xf32>
    %578 = arith.subf %577, %571 : vector<8x128xf32>
    %579 = arith.mulf %578, %576 : vector<8x128xf32>
    %580 = arith.mulf %571, %548 : vector<8x128xf32>
    %581 = arith.addf %579, %580 : vector<8x128xf32>
    %c16_i32 = arith.constant 16 : i32
    %c0_169 = arith.constant 0 : index
    %c0_170 = arith.constant 0 : index
    %582 = vector.load %arg10[%c0_169, %c0_170] : memref<128x71xf32, #tpu.memory_space<vmem>>, vector<128x71xf32>
    %cst_171 = arith.constant dense<0.000000e+00> : vector<8x71xf32>
    %583 = tpu.matmul %581, %582, %cst_171 {dimension_numbers = #tpu.dot_dimension_numbers<[1], [0], [0], [1], [0, 0, 1, 1], [], []>} : vector<8x128xf32>, vector<128x71xf32>, vector<8x71xf32> -> vector<8x71xf32>
    %c0_172 = arith.constant 0 : index
    %c0_173 = arith.constant 0 : index
    %584 = vector.load %arg11[%c0_172, %c0_173] : memref<1x71xf32, #tpu.memory_space<vmem>>, vector<1x71xf32>
    %585 = vector.broadcast %584 : vector<1x71xf32> to vector<8x71xf32>
    %586 = arith.addf %583, %585 : vector<8x71xf32>
    %c0_174 = arith.constant 0 : index
    %c0_175 = arith.constant 0 : index
    %c0_176 = arith.constant 0 : index
    %587 = vector.load %arg12[%c0_174, %c0_175, %c0_176] : memref<1x8x71xf32, #tpu.memory_space<vmem>>, vector<1x8x71xf32>
    %588 = vector.shape_cast %587 : vector<1x8x71xf32> to vector<8x71xf32>
    %589 = vector.shape_cast %586 : vector<8x71xf32> to vector<1x8x71xf32>
    tpu.vector_store %arg12[%c0_174, %c0_175, %c0_176], %589 {strides = array<i32>} : memref<1x8x71xf32, #tpu.memory_space<vmem>>, vector<1x8x71xf32>,
    return
  }
  func.func @transform_0(%arg0: i32) -> (i32, i32, i32) {
    %c0_i32 = arith.constant 0 : i32
    %c0_i32_0 = arith.constant 0 : i32
    %c0_i32_1 = arith.constant 0 : i32
    return %arg0, %c0_i32, %c0_i32_0 : i32, i32, i32
  }
  func.func @transform_1(%arg0: i32) -> (i32, i32, i32) {
    %c0_i32 = arith.constant 0 : i32
    %c0_i32_0 = arith.constant 0 : i32
    %c0_i32_1 = arith.constant 0 : i32
    %c0_i32_2 = arith.constant 0 : i32
    return %c0_i32, %c0_i32_0, %c0_i32_1 : i32, i32, i32
  }
  func.func @transform_2(%arg0: i32) -> (i32, i32) {
    %c0_i32 = arith.constant 0 : i32
    %c0_i32_0 = arith.constant 0 : i32
    %c0_i32_1 = arith.constant 0 : i32
    return %c0_i32, %c0_i32_0 : i32, i32
  }
  func.func @transform_3(%arg0: i32) -> (i32, i32, i32) {
    %c0_i32 = arith.constant 0 : i32
    %c0_i32_0 = arith.constant 0 : i32
    %c0_i32_1 = arith.constant 0 : i32
    %c0_i32_2 = arith.constant 0 : i32
    return %c0_i32, %c0_i32_0, %c0_i32_1 : i32, i32, i32
  }
  func.func @transform_4(%arg0: i32) -> (i32, i32) {
    %c0_i32 = arith.constant 0 : i32
    %c0_i32_0 = arith.constant 0 : i32
    %c0_i32_1 = arith.constant 0 : i32
    return %c0_i32, %c0_i32_0 : i32, i32
  }
  func.func @transform_5(%arg0: i32) -> (i32, i32) {
    %c0_i32 = arith.constant 0 : i32
    %c0_i32_0 = arith.constant 0 : i32
    %c0_i32_1 = arith.constant 0 : i32
    return %c0_i32, %c0_i32_0 : i32, i32
  }
  func.func @transform_6(%arg0: i32) -> (i32, i32) {
    %c0_i32 = arith.constant 0 : i32
    %c0_i32_0 = arith.constant 0 : i32
    %c0_i32_1 = arith.constant 0 : i32
    return %c0_i32, %c0_i32_0 : i32, i32
  }
  func.func @transform_7(%arg0: i32) -> (i32, i32) {
    %c0_i32 = arith.constant 0 : i32
    %c0_i32_0 = arith.constant 0 : i32
    %c0_i32_1 = arith.constant 0 : i32
    return %c0_i32, %c0_i32_0 : i32, i32
  }
  func.func @transform_8(%arg0: i32) -> (i32, i32) {
    %c0_i32 = arith.constant 0 : i32
    %c0_i32_0 = arith.constant 0 : i32
    %c0_i32_1 = arith.constant 0 : i32
    return %c0_i32, %c0_i32_0 : i32, i32
  }
  func.func @transform_9(%arg0: i32) -> (i32, i32) {
    %c0_i32 = arith.constant 0 : i32
    %c0_i32_0 = arith.constant 0 : i32
    %c0_i32_1 = arith.constant 0 : i32
    return %c0_i32, %c0_i32_0 : i32, i32
  }
  func.func @transform_10(%arg0: i32) -> (i32, i32) {
    %c0_i32 = arith.constant 0 : i32
    %c0_i32_0 = arith.constant 0 : i32
    %c0_i32_1 = arith.constant 0 : i32
    return %c0_i32, %c0_i32_0 : i32, i32
  }
  func.func @transform_11(%arg0: i32) -> (i32, i32, i32) {
    %c0_i32 = arith.constant 0 : i32
    %c0_i32_0 = arith.constant 0 : i32
    %c0_i32_1 = arith.constant 0 : i32
    return %arg0, %c0_i32, %c0_i32_0 : i32, i32, i32
  }
}

</mosaic_0001>

<llo_original>
// kernel: conv_rnn_classifier.1
$region0: #{conv_rnn_classifier.1}
  #allocation0 [shape = 'u32[]', space=smem, size = 0x4, offset = 0x4, fixed_abs, tag = 'smem constant byte address 0x4 - core index']
  #allocation1 [shape = 'u32[144,128]{1,0:T(1,128)}', space=vmem, size = 0x12000, scoped, tag = 'internal scratch']
  #allocation2 [shape = 'f32[128,384]{1,0:T(8,128)}', space=vmem, size = 0x30000, scoped, tag = 'scratch operand']
  %s0 = inlined_call_operand.vmem [shape: f32[1,128,12], index: 0, kind: input, shape index: {}]
  %s1 = inlined_call_operand.vmem [shape: f32[3,12,64], index: 1, kind: input, shape index: {}]
  %s2 = inlined_call_operand.vmem [shape: f32[1,64], index: 2, kind: input, shape index: {}]
  %s3 = inlined_call_operand.vmem [shape: f32[3,64,128], index: 3, kind: input, shape index: {}]
  %s4 = inlined_call_operand.vmem [shape: f32[1,128], index: 4, kind: input, shape index: {}]
  %s5 = inlined_call_operand.vmem [shape: f32[128,384], index: 5, kind: input, shape index: {}]
  %s6 = inlined_call_operand.vmem [shape: f32[1,384], index: 6, kind: input, shape index: {}]
  %s7 = inlined_call_operand.vmem [shape: f32[128,384], index: 7, kind: input, shape index: {}]
  %s8 = inlined_call_operand.vmem [shape: f32[1,384], index: 8, kind: input, shape index: {}]
  %s9 = inlined_call_operand.vmem [shape: f32[128,71], index: 9, kind: input, shape index: {}]
  %s10 = inlined_call_operand.vmem [shape: f32[1,71], index: 10, kind: input, shape index: {}]
  %s11 = inlined_call_operand.vmem [shape: f32[1,8,71], index: 11, kind: output, shape index: {}]
  %s12 = sld [smem:[#allocation0]]
  $region54: #{conv_rnn_classifier.1} parent=0
    _
  %s14 = ssub.s32 1, %s12
  %s15 = scalar_select 0, %s14, %s12
  // Predicated region
  $region2: #{conv_rnn_classifier.1} parent=0 // pred_check
    _
  $region3: #{conv_rnn_classifier.1} parent=0 // pred_check_branch
    %17 = sbr.rel (0) target = $region5
  $region4: #{conv_rnn_classifier.1} parent=0 // pred_region
    _
  $region5: #{conv_rnn_classifier.1} parent=0 // pred_fallthru
    _
  // Predicated region
  $region6: #{conv_rnn_classifier.1} parent=0 // pred_check
    _
  $region7: #{conv_rnn_classifier.1} parent=0 // pred_check_branch
    %19 = sbr.rel (0) target = $region9
  $region8: #{conv_rnn_classifier.1} parent=0 // pred_region
    _
  $region9: #{conv_rnn_classifier.1} parent=0 // pred_fallthru
    _
  // Predicated region
  $region10: #{conv_rnn_classifier.1} parent=0 // pred_check
    _
  $region11: #{conv_rnn_classifier.1} parent=0 // pred_check_branch
    %21 = sbr.rel (0) target = $region13
  $region12: #{conv_rnn_classifier.1} parent=0 // pred_region
    _
  $region13: #{conv_rnn_classifier.1} parent=0 // pred_fallthru
    _
  // Predicated region
  $region14: #{conv_rnn_classifier.1} parent=0 // pred_check
    _
  $region15: #{conv_rnn_classifier.1} parent=0 // pred_check_branch
    %23 = sbr.rel (0) target = $region17
  $region16: #{conv_rnn_classifier.1} parent=0 // pred_region
    _
  $region17: #{conv_rnn_classifier.1} parent=0 // pred_fallthru
    _
  // Predicated region
  $region18: #{conv_rnn_classifier.1} parent=0 // pred_check
    _
  $region19: #{conv_rnn_classifier.1} parent=0 // pred_check_branch
    %25 = sbr.rel (0) target = $region21
  $region20: #{conv_rnn_classifier.1} parent=0 // pred_region
    _
  $region21: #{conv_rnn_classifier.1} parent=0 // pred_fallthru
    _
  // Predicated region
  $region22: #{conv_rnn_classifier.1} parent=0 // pred_check
    _
  $region23: #{conv_rnn_classifier.1} parent=0 // pred_check_branch
    %27 = sbr.rel (0) target = $region25
  $region24: #{conv_rnn_classifier.1} parent=0 // pred_region
    _
  $region25: #{conv_rnn_classifier.1} parent=0 // pred_fallthru
    _
  // Predicated region
  $region26: #{conv_rnn_classifier.1} parent=0 // pred_check
    _
  $region27: #{conv_rnn_classifier.1} parent=0 // pred_check_branch
    %29 = sbr.rel (0) target = $region29
  $region28: #{conv_rnn_classifier.1} parent=0 // pred_region
    _
  $region29: #{conv_rnn_classifier.1} parent=0 // pred_fallthru
    _
  // Predicated region
  $region30: #{conv_rnn_classifier.1} parent=0 // pred_check
    _
  $region31: #{conv_rnn_classifier.1} parent=0 // pred_check_branch
    %31 = sbr.rel (0) target = $region33
  $region32: #{conv_rnn_classifier.1} parent=0 // pred_region
    _
  $region33: #{conv_rnn_classifier.1} parent=0 // pred_fallthru
    _
  // Predicated region
  $region34: #{conv_rnn_classifier.1} parent=0 // pred_check
    _
  $region35: #{conv_rnn_classifier.1} parent=0 // pred_check_branch
    %33 = sbr.rel (0) target = $region37
  $region36: #{conv_rnn_classifier.1} parent=0 // pred_region
    _
  $region37: #{conv_rnn_classifier.1} parent=0 // pred_fallthru
    _
  // Predicated region
  $region38: #{conv_rnn_classifier.1} parent=0 // pred_check
    _
  $region39: #{conv_rnn_classifier.1} parent=0 // pred_check_branch
    %35 = sbr.rel (0) target = $region41
  $region40: #{conv_rnn_classifier.1} parent=0 // pred_region
    _
  $region41: #{conv_rnn_classifier.1} parent=0 // pred_fallthru
    _
  // Predicated region
  $region42: #{conv_rnn_classifier.1} parent=0 // pred_check
    _
  $region43: #{conv_rnn_classifier.1} parent=0 // pred_check_branch
    %37 = sbr.rel (0) target = $region45
  $region44: #{conv_rnn_classifier.1} parent=0 // pred_region
    _
  $region45: #{conv_rnn_classifier.1} parent=0 // pred_fallthru
    _
  %v38 = vld [vmem:[%s0] sm:$0xff]
  %v39 = vld [vmem:[%s0 + $0x8] sm:$0xff]
  %v40 = vld [vmem:[%s0 + $0x10] sm:$0xff]
  %v41 = vld [vmem:[%s0 + $0x18] sm:$0xff]
  %v42 = vld [vmem:[%s0 + $0x20] sm:$0xff]
  %v43 = vld [vmem:[%s0 + $0x28] sm:$0xff]
  %v44 = vld [vmem:[%s0 + $0x30] sm:$0xff]
  %v45 = vld [vmem:[%s0 + $0x38] sm:$0xff]
  %v46 = vld [vmem:[%s0 + $0x40] sm:$0xff]
  %v47 = vld [vmem:[%s0 + $0x48] sm:$0xff]
  %v48 = vld [vmem:[%s0 + $0x50] sm:$0xff]
  %v49 = vld [vmem:[%s0 + $0x58] sm:$0xff]
  %v50 = vld [vmem:[%s0 + $0x60] sm:$0xff]
  %v51 = vld [vmem:[%s0 + $0x68] sm:$0xff]
  %v52 = vld [vmem:[%s0 + $0x70] sm:$0xff]
  %v53 = vld [vmem:[%s0 + $0x78] sm:$0xff]
  %v54 = vld [vmem:[%s1] sm:$0xff]
  %v55 = vld [vmem:[%s1 + $0x8] sm:$0xf]
  %s56 = scalar_lea.vmem %s1, 16
  %v57 = vld [vmem:[%s56] sm:$0xff]
  %v58 = vld [vmem:[%s56 + $0x8] sm:$0xf]
  %vm59 = vcmask 97280
  %v61 = vsel %vm59, %v38, 0
  %v64 = vsel %vm59, %v39, 0
  %v67 = vsel %vm59, %v40, 0
  %v70 = vsel %vm59, %v41, 0
  %v73 = vsel %vm59, %v42, 0
  %v76 = vsel %vm59, %v43, 0
  %v79 = vsel %vm59, %v44, 0
  %v82 = vsel %vm59, %v45, 0
  %v85 = vsel %vm59, %v46, 0
  %v88 = vsel %vm59, %v47, 0
  %v91 = vsel %vm59, %v48, 0
  %v94 = vsel %vm59, %v49, 0
  %v97 = vsel %vm59, %v50, 0
  %v100 = vsel %vm59, %v51, 0
  %v103 = vsel %vm59, %v52, 0
  %v106 = vsel %vm59, %v53, 0
  %vm108 = vcmask 1043456
  %v110 = vsel %vm108, %v58, 0
  %112 = vmatprep.subr.mxu0 0.0
  %113 = vmatpush1.msra.mxu0 %v57
  %114 = vmatprep.subr.mxu0 0.0
  %115 = vmatpush1.msra.mxu0 %v110
  %116 = vmatprep.subr.mxu0 0.0
  %117 = vmatpush1.msra.mxu0 0.0
  %118 = vmatprep.subr.mxu0 0.0
  %119 = vmatpush1.msra.mxu0 0.0
  %120 = vmatprep.subr.mxu0 0.0
  %121 = vmatpush1.msra.mxu0 0.0
  %122 = vmatprep.subr.mxu0 0.0
  %123 = vmatpush1.msra.mxu0 0.0
  %124 = vmatprep.subr.mxu0 0.0
  %125 = vmatpush1.msra.mxu0 0.0
  %126 = vmatprep.subr.mxu0 0.0
  %127 = vmatpush1.msra.mxu0 0.0
  %128 = vmatprep.subr.mxu0 0.0
  %129 = vmatpush1.msra.mxu0 0.0
  %130 = vmatprep.subr.mxu0 0.0
  %131 = vmatpush1.msra.mxu0 0.0
  %132 = vmatprep.subr.mxu0 0.0
  %133 = vmatpush1.msra.mxu0 0.0
  %134 = vmatprep.subr.mxu0 0.0
  %135 = vmatpush1.msra.mxu0 0.0
  %136 = vmatprep.subr.mxu0 0.0
  %137 = vmatpush1.msra.mxu0 0.0
  %138 = vmatprep.subr.mxu0 0.0
  %139 = vmatpush1.msra.mxu0 0.0
  %140 = vmatprep.subr.mxu0 0.0
  %141 = vmatpush1.msra.mxu0 0.0
  %142 = vmatprep.subr.mxu0 0.0
  %143 = vmatpush1.msra.mxu0 0.0
  %144 = vmatprep.subr.mxu0 0.0
  %145 = vmatpush1.msra.mxu0 0.0
  %146 = vmatprep.subr.mxu0 0.0
  %147 = vmatpush1.msra.mxu0 0.0
  %148 = vmatprep.subr.mxu0 0.0
  %149 = vmatpush1.msra.mxu0 0.0
  %150 = vmatprep.subr.mxu0 0.0
  %151 = vmatpush1.msra.mxu0 0.0
  %152 = vmatprep.subr.mxu0 0.0
  %153 = vmatpush1.msra.mxu0 0.0
  %154 = vmatprep.subr.mxu0 0.0
  %155 = vmatpush1.msra.mxu0 0.0
  %156 = vmatprep.subr.mxu0 0.0
  %157 = vmatpush1.msra.mxu0 0.0
  %158 = vmatprep.subr.mxu0 0.0
  %159 = vmatpush1.msra.mxu0 0.0
  %160 = vmatprep.subr.mxu0 0.0
  %161 = vmatpush1.msra.mxu0 0.0
  %162 = vmatprep.subr.mxu0 0.0
  %163 = vmatpush1.msra.mxu0 0.0
  %164 = vmatprep.subr.mxu0 0.0
  %165 = vmatpush1.msra.mxu0 0.0
  %166 = vmatprep.subr.mxu0 0.0
  %167 = vmatpush1.msra.mxu0 0.0
  %168 = vmatprep.subr.mxu0 0.0
  %169 = vmatpush1.msra.mxu0 0.0
  %170 = vmatprep.subr.mxu0 0.0
  %171 = vmatpush1.msra.mxu0 0.0
  %172 = vmatprep.subr.mxu0 0.0
  %173 = vmatpush1.msra.mxu0 0.0
  %174 = vmatprep.subr.mxu0 0.0
  %175 = vmatpush1.msra.mxu0 0.0
  %176 = vmatprep.mubr.f32.mxu0 0.0
  %177 = vmatmul.mubr.f32.gmra.mrb[0].mxu0 %v61
  %v178 = vpop.f32.mrb[0].mxu0
  %v179 = vadd.f32 0.0, %v178
  %v180 = vpop.f32.mrb[0].mxu0
  %181 = vmatprep.mubr.f32.mxu0 0.0
  %182 = vmatmul.mubr.f32.gmra.mrb[0].mxu0 %v64
  %v183 = vpop.f32.mrb[0].mxu0
  %v184 = vadd.f32 0.0, %v183
  %v185 = vpop.f32.mrb[0].mxu0
  %186 = vmatprep.mubr.f32.mxu0 0.0
  %187 = vmatmul.mubr.f32.gmra.mrb[0].mxu0 %v67
  %v188 = vpop.f32.mrb[0].mxu0
  %v189 = vadd.f32 0.0, %v188
  %v190 = vpop.f32.mrb[0].mxu0
  %191 = vmatprep.mubr.f32.mxu0 0.0
  %192 = vmatmul.mubr.f32.gmra.mrb[0].mxu0 %v70
  %v193 = vpop.f32.mrb[0].mxu0
  %v194 = vadd.f32 0.0, %v193
  %v195 = vpop.f32.mrb[0].mxu0
  %196 = vmatprep.mubr.f32.mxu0 0.0
  %197 = vmatmul.mubr.f32.gmra.mrb[0].mxu0 %v73
  %v198 = vpop.f32.mrb[0].mxu0
  %v199 = vadd.f32 0.0, %v198
  %v200 = vpop.f32.mrb[0].mxu0
  %201 = vmatprep.mubr.f32.mxu0 0.0
  %202 = vmatmul.mubr.f32.gmra.mrb[0].mxu0 %v76
  %v203 = vpop.f32.mrb[0].mxu0
  %v204 = vadd.f32 0.0, %v203
  %v205 = vpop.f32.mrb[0].mxu0
  %206 = vmatprep.mubr.f32.mxu0 0.0
  %207 = vmatmul.mubr.f32.gmra.mrb[0].mxu0 %v79
  %v208 = vpop.f32.mrb[0].mxu0
  %v209 = vadd.f32 0.0, %v208
  %v210 = vpop.f32.mrb[0].mxu0
  %211 = vmatprep.mubr.f32.mxu0 0.0
  %212 = vmatmul.mubr.f32.gmra.mrb[0].mxu0 %v82
  %v213 = vpop.f32.mrb[0].mxu0
  %v214 = vadd.f32 0.0, %v213
  %v215 = vpop.f32.mrb[0].mxu0
  %216 = vmatprep.mubr.f32.mxu0 0.0
  %217 = vmatmul.mubr.f32.gmra.mrb[0].mxu0 %v85
  %v218 = vpop.f32.mrb[0].mxu0
  %v219 = vadd.f32 0.0, %v218
  %v220 = vpop.f32.mrb[0].mxu0
  %221 = vmatprep.mubr.f32.mxu0 0.0
  %222 = vmatmul.mubr.f32.gmra.mrb[0].mxu0 %v88
  %v223 = vpop.f32.mrb[0].mxu0
  %v224 = vadd.f32 0.0, %v223
  %v225 = vpop.f32.mrb[0].mxu0
  %226 = vmatprep.mubr.f32.mxu0 0.0
  %227 = vmatmul.mubr.f32.gmra.mrb[0].mxu0 %v91
  %v228 = vpop.f32.mrb[0].mxu0
  %v229 = vadd.f32 0.0, %v228
  %v230 = vpop.f32.mrb[0].mxu0
  %231 = vmatprep.mubr.f32.mxu0 0.0
  %232 = vmatmul.mubr.f32.gmra.mrb[0].mxu0 %v94
  %v233 = vpop.f32.mrb[0].mxu0
  %v234 = vadd.f32 0.0, %v233
  %v235 = vpop.f32.mrb[0].mxu0
  %236 = vmatprep.mubr.f32.mxu0 0.0
  %237 = vmatmul.mubr.f32.gmra.mrb[0].mxu0 %v97
  %v238 = vpop.f32.mrb[0].mxu0
  %v239 = vadd.f32 0.0, %v238
  %v240 = vpop.f32.mrb[0].mxu0
  %241 = vmatprep.mubr.f32.mxu0 0.0
  %242 = vmatmul.mubr.f32.gmra.mrb[0].mxu0 %v100
  %v243 = vpop.f32.mrb[0].mxu0
  %v244 = vadd.f32 0.0, %v243
  %v245 = vpop.f32.mrb[0].mxu0
  %246 = vmatprep.mubr.f32.mxu0 0.0
  %247 = vmatmul.mubr.f32.gmra.mrb[0].mxu0 %v103
  %v248 = vpop.f32.mrb[0].mxu0
  %v249 = vadd.f32 0.0, %v248
  %v250 = vpop.f32.mrb[0].mxu0
  %251 = vmatprep.mubr.f32.mxu0 0.0
  %252 = vmatmul.mubr.f32.gmra.mrb[0].mxu0 %v106
  %v253 = vpop.f32.mrb[0].mxu0
  %v254 = vadd.f32 0.0, %v253
  %v255 = vpop.f32.mrb[0].mxu0
  %256 = vdwg.mxu0
  %v258 = vsel %vm59, 0.0, 0
  %v261 = vsel %vm108, %v55, 0
  %263 = vmatprep.subr.mxu0 0.0
  %264 = vmatpush1.msra.mxu0 %v54
  %265 = vmatprep.subr.mxu0 0.0
  %266 = vmatpush1.msra.mxu0 %v261
  %267 = vmatprep.subr.mxu0 0.0
  %268 = vmatpush1.msra.mxu0 0.0
  %269 = vmatprep.subr.mxu0 0.0
  %270 = vmatpush1.msra.mxu0 0.0
  %271 = vmatprep.subr.mxu0 0.0
  %272 = vmatpush1.msra.mxu0 0.0
  %273 = vmatprep.subr.mxu0 0.0
  %274 = vmatpush1.msra.mxu0 0.0
  %275 = vmatprep.subr.mxu0 0.0
  %276 = vmatpush1.msra.mxu0 0.0
  %277 = vmatprep.subr.mxu0 0.0
  %278 = vmatpush1.msra.mxu0 0.0
  %279 = vmatprep.subr.mxu0 0.0
  %280 = vmatpush1.msra.mxu0 0.0
  %281 = vmatprep.subr.mxu0 0.0
  %282 = vmatpush1.msra.mxu0 0.0
  %283 = vmatprep.subr.mxu0 0.0
  %284 = vmatpush1.msra.mxu0 0.0
  %285 = vmatprep.subr.mxu0 0.0
  %286 = vmatpush1.msra.mxu0 0.0
  %287 = vmatprep.subr.mxu0 0.0
  %288 = vmatpush1.msra.mxu0 0.0
  %289 = vmatprep.subr.mxu0 0.0
  %290 = vmatpush1.msra.mxu0 0.0
  %291 = vmatprep.subr.mxu0 0.0
  %292 = vmatpush1.msra.mxu0 0.0
  %293 = vmatprep.subr.mxu0 0.0
  %294 = vmatpush1.msra.mxu0 0.0
  %295 = vmatprep.subr.mxu0 0.0
  %296 = vmatpush1.msra.mxu0 0.0
  %297 = vmatprep.subr.mxu0 0.0
  %298 = vmatpush1.msra.mxu0 0.0
  %299 = vmatprep.subr.mxu0 0.0
  %300 = vmatpush1.msra.mxu0 0.0
  %301 = vmatprep.subr.mxu0 0.0
  %302 = vmatpush1.msra.mxu0 0.0
  %303 = vmatprep.subr.mxu0 0.0
  %304 = vmatpush1.msra.mxu0 0.0
  %305 = vmatprep.subr.mxu0 0.0
  %306 = vmatpush1.msra.mxu0 0.0
  %307 = vmatprep.subr.mxu0 0.0
  %308 = vmatpush1.msra.mxu0 0.0
  %309 = vmatprep.subr.mxu0 0.0
  %310 = vmatpush1.msra.mxu0 0.0
  %311 = vmatprep.subr.mxu0 0.0
  %312 = vmatpush1.msra.mxu0 0.0
  %313 = vmatprep.subr.mxu0 0.0
  %314 = vmatpush1.msra.mxu0 0.0
  %315 = vmatprep.subr.mxu0 0.0
  %316 = vmatpush1.msra.mxu0 0.0
  %317 = vmatprep.subr.mxu0 0.0
  %318 = vmatpush1.msra.mxu0 0.0
  %319 = vmatprep.subr.mxu0 0.0
  %320 = vmatpush1.msra.mxu0 0.0
  %321 = vmatprep.subr.mxu0 0.0
  %322 = vmatpush1.msra.mxu0 0.0
  %323 = vmatprep.subr.mxu0 0.0
  %324 = vmatpush1.msra.mxu0 0.0
  %325 = vmatprep.subr.mxu0 0.0
  %326 = vmatpush1.msra.mxu0 0.0
  %327 = vmatprep.mubr.f32.mxu0 0.0
  %328 = vmatmul.mubr.f32.gmra.mrb[0].mxu0 %v258
  %v329 = vpop.f32.mrb[0].mxu0
  %v330 = vadd.f32 %v179, %v329
  %v331 = vpop.f32.mrb[0].mxu0
  %332 = vmatprep.mubr.f32.mxu0 0.0
  %333 = vmatmul.mubr.f32.gmra.mrb[0].mxu0 %v61
  %v334 = vpop.f32.mrb[0].mxu0
  %v335 = vadd.f32 %v184, %v334
  %v336 = vpop.f32.mrb[0].mxu0
  %337 = vmatprep.mubr.f32.mxu0 0.0
  %338 = vmatmul.mubr.f32.gmra.mrb[0].mxu0 %v64
  %v339 = vpop.f32.mrb[0].mxu0
  %v340 = vadd.f32 %v189, %v339
  %v341 = vpop.f32.mrb[0].mxu0
  %342 = vmatprep.mubr.f32.mxu0 0.0
  %343 = vmatmul.mubr.f32.gmra.mrb[0].mxu0 %v67
  %v344 = vpop.f32.mrb[0].mxu0
  %v345 = vadd.f32 %v194, %v344
  %v346 = vpop.f32.mrb[0].mxu0
  %347 = vmatprep.mubr.f32.mxu0 0.0
  %348 = vmatmul.mubr.f32.gmra.mrb[0].mxu0 %v70
  %v349 = vpop.f32.mrb[0].mxu0
  %v350 = vadd.f32 %v199, %v349
  %v351 = vpop.f32.mrb[0].mxu0
  %352 = vmatprep.mubr.f32.mxu0 0.0
  %353 = vmatmul.mubr.f32.gmra.mrb[0].mxu0 %v73
  %v354 = vpop.f32.mrb[0].mxu0
  %v355 = vadd.f32 %v204, %v354
  %v356 = vpop.f32.mrb[0].mxu0
  %357 = vmatprep.mubr.f32.mxu0 0.0
  %358 = vmatmul.mubr.f32.gmra.mrb[0].mxu0 %v76
  %v359 = vpop.f32.mrb[0].mxu0
  %v360 = vadd.f32 %v209, %v359
  %v361 = vpop.f32.mrb[0].mxu0
  %362 = vmatprep.mubr.f32.mxu0 0.0
  %363 = vmatmul.mubr.f32.gmra.mrb[0].mxu0 %v79
  %v364 = vpop.f32.mrb[0].mxu0
  %v365 = vadd.f32 %v214, %v364
  %v366 = vpop.f32.mrb[0].mxu0
  %367 = vmatprep.mubr.f32.mxu0 0.0
  %368 = vmatmul.mubr.f32.gmra.mrb[0].mxu0 %v82
  %v369 = vpop.f32.mrb[0].mxu0
  %v370 = vadd.f32 %v219, %v369
  %v371 = vpop.f32.mrb[0].mxu0
  %372 = vmatprep.mubr.f32.mxu0 0.0
  %373 = vmatmul.mubr.f32.gmra.mrb[0].mxu0 %v85
  %v374 = vpop.f32.mrb[0].mxu0
  %v375 = vadd.f32 %v224, %v374
  %v376 = vpop.f32.mrb[0].mxu0
  %377 = vmatprep.mubr.f32.mxu0 0.0
  %378 = vmatmul.mubr.f32.gmra.mrb[0].mxu0 %v88
  %v379 = vpop.f32.mrb[0].mxu0
  %v380 = vadd.f32 %v229, %v379
  %v381 = vpop.f32.mrb[0].mxu0
  %382 = vmatprep.mubr.f32.mxu0 0.0
  %383 = vmatmul.mubr.f32.gmra.mrb[0].mxu0 %v91
  %v384 = vpop.f32.mrb[0].mxu0
  %v385 = vadd.f32 %v234, %v384
  %v386 = vpop.f32.mrb[0].mxu0
  %387 = vmatprep.mubr.f32.mxu0 0.0
  %388 = vmatmul.mubr.f32.gmra.mrb[0].mxu0 %v94
  %v389 = vpop.f32.mrb[0].mxu0
  %v390 = vadd.f32 %v239, %v389
  %v391 = vpop.f32.mrb[0].mxu0
  %392 = vmatprep.mubr.f32.mxu0 0.0
  %393 = vmatmul.mubr.f32.gmra.mrb[0].mxu0 %v97
  %v394 = vpop.f32.mrb[0].mxu0
  %v395 = vadd.f32 %v244, %v394
  %v396 = vpop.f32.mrb[0].mxu0
  %397 = vmatprep.mubr.f32.mxu0 0.0
  %398 = vmatmul.mubr.f32.gmra.mrb[0].mxu0 %v100
  %v399 = vpop.f32.mrb[0].mxu0
  %v400 = vadd.f32 %v249, %v399
  %v401 = vpop.f32.mrb[0].mxu0
  %402 = vmatprep.mubr.f32.mxu0 0.0
  %403 = vmatmul.mubr.f32.gmra.mrb[0].mxu0 %v103
  %v404 = vpop.f32.mrb[0].mxu0
  %v405 = vadd.f32 %v254, %v404
  %v406 = vpop.f32.mrb[0].mxu0
  %407 = vdwg.mxu0
  %s408 = scalar_lea.vmem %s1, 32
  %v409 = vld [vmem:[%s408] sm:$0xff]
  %v410 = vld [vmem:[%s408 + $0x8] sm:$0xf]
  %v412 = vsel %vm108, %v410, 0
  %414 = vmatprep.subr.mxu0 0.0
  %415 = vmatpush1.msra.mxu0 %v409
  %416 = vmatprep.subr.mxu0 0.0
  %417 = vmatpush1.msra.mxu0 %v412
  %418 = vmatprep.subr.mxu0 0.0
  %419 = vmatpush1.msra.mxu0 0.0
  %420 = vmatprep.subr.mxu0 0.0
  %421 = vmatpush1.msra.mxu0 0.0
  %422 = vmatprep.subr.mxu0 0.0
  %423 = vmatpush1.msra.mxu0 0.0
  %424 = vmatprep.subr.mxu0 0.0
  %425 = vmatpush1.msra.mxu0 0.0
  %426 = vmatprep.subr.mxu0 0.0
  %427 = vmatpush1.msra.mxu0 0.0
  %428 = vmatprep.subr.mxu0 0.0
  %429 = vmatpush1.msra.mxu0 0.0
  %430 = vmatprep.subr.mxu0 0.0
  %431 = vmatpush1.msra.mxu0 0.0
  %432 = vmatprep.subr.mxu0 0.0
  %433 = vmatpush1.msra.mxu0 0.0
  %434 = vmatprep.subr.mxu0 0.0
  %435 = vmatpush1.msra.mxu0 0.0
  %436 = vmatprep.subr.mxu0 0.0
  %437 = vmatpush1.msra.mxu0 0.0
  %438 = vmatprep.subr.mxu0 0.0
  %439 = vmatpush1.msra.mxu0 0.0
  %440 = vmatprep.subr.mxu0 0.0
  %441 = vmatpush1.msra.mxu0 0.0
  %442 = vmatprep.subr.mxu0 0.0
  %443 = vmatpush1.msra.mxu0 0.0
  %444 = vmatprep.subr.mxu0 0.0
  %445 = vmatpush1.msra.mxu0 0.0
  %446 = vmatprep.subr.mxu0 0.0
  %447 = vmatpush1.msra.mxu0 0.0
  %448 = vmatprep.subr.mxu0 0.0
  %449 = vmatpush1.msra.mxu0 0.0
  %450 = vmatprep.subr.mxu0 0.0
  %451 = vmatpush1.msra.mxu0 0.0
  %452 = vmatprep.subr.mxu0 0.0
  %453 = vmatpush1.msra.mxu0 0.0
  %454 = vmatprep.subr.mxu0 0.0
  %455 = vmatpush1.msra.mxu0 0.0
  %456 = vmatprep.subr.mxu0 0.0
  %457 = vmatpush1.msra.mxu0 0.0
  %458 = vmatprep.subr.mxu0 0.0
  %459 = vmatpush1.msra.mxu0 0.0
  %460 = vmatprep.subr.mxu0 0.0
  %461 = vmatpush1.msra.mxu0 0.0
  %462 = vmatprep.subr.mxu0 0.0
  %463 = vmatpush1.msra.mxu0 0.0
  %464 = vmatprep.subr.mxu0 0.0
  %465 = vmatpush1.msra.mxu0 0.0
  %466 = vmatprep.subr.mxu0 0.0
  %467 = vmatpush1.msra.mxu0 0.0
  %468 = vmatprep.subr.mxu0 0.0
  %469 = vmatpush1.msra.mxu0 0.0
  %470 = vmatprep.subr.mxu0 0.0
  %471 = vmatpush1.msra.mxu0 0.0
  %472 = vmatprep.subr.mxu0 0.0
  %473 = vmatpush1.msra.mxu0 0.0
  %474 = vmatprep.subr.mxu0 0.0
  %475 = vmatpush1.msra.mxu0 0.0
  %476 = vmatprep.subr.mxu0 0.0
  %477 = vmatpush1.msra.mxu0 0.0
  %478 = vmatprep.mubr.f32.mxu0 0.0
  %479 = vmatmul.mubr.f32.gmra.mrb[0].mxu0 %v64
  %v480 = vpop.f32.mrb[0].mxu0
  %v481 = vadd.f32 0.0, %v480
  %v482 = vpop.f32.mrb[0].mxu0
  %483 = vmatprep.mubr.f32.mxu0 0.0
  %484 = vmatmul.mubr.f32.gmra.mrb[0].mxu0 %v67
  %v485 = vpop.f32.mrb[0].mxu0
  %v486 = vadd.f32 0.0, %v485
  %v487 = vpop.f32.mrb[0].mxu0
  %488 = vmatprep.mubr.f32.mxu0 0.0
  %489 = vmatmul.mubr.f32.gmra.mrb[0].mxu0 %v70
  %v490 = vpop.f32.mrb[0].mxu0
  %v491 = vadd.f32 0.0, %v490
  %v492 = vpop.f32.mrb[0].mxu0
  %493 = vmatprep.mubr.f32.mxu0 0.0
  %494 = vmatmul.mubr.f32.gmra.mrb[0].mxu0 %v73
  %v495 = vpop.f32.mrb[0].mxu0
  %v496 = vadd.f32 0.0, %v495
  %v497 = vpop.f32.mrb[0].mxu0
  %498 = vmatprep.mubr.f32.mxu0 0.0
  %499 = vmatmul.mubr.f32.gmra.mrb[0].mxu0 %v76
  %v500 = vpop.f32.mrb[0].mxu0
  %v501 = vadd.f32 0.0, %v500
  %v502 = vpop.f32.mrb[0].mxu0
  %503 = vmatprep.mubr.f32.mxu0 0.0
  %504 = vmatmul.mubr.f32.gmra.mrb[0].mxu0 %v79
  %v505 = vpop.f32.mrb[0].mxu0
  %v506 = vadd.f32 0.0, %v505
  %v507 = vpop.f32.mrb[0].mxu0
  %508 = vmatprep.mubr.f32.mxu0 0.0
  %509 = vmatmul.mubr.f32.gmra.mrb[0].mxu0 %v82
  %v510 = vpop.f32.mrb[0].mxu0
  %v511 = vadd.f32 0.0, %v510
  %v512 = vpop.f32.mrb[0].mxu0
  %513 = vmatprep.mubr.f32.mxu0 0.0
  %514 = vmatmul.mubr.f32.gmra.mrb[0].mxu0 %v85
  %v515 = vpop.f32.mrb[0].mxu0
  %v516 = vadd.f32 0.0, %v515
  %v517 = vpop.f32.mrb[0].mxu0
  %518 = vmatprep.mubr.f32.mxu0 0.0
  %519 = vmatmul.mubr.f32.gmra.mrb[0].mxu0 %v88
  %v520 = vpop.f32.mrb[0].mxu0
  %v521 = vadd.f32 0.0, %v520
  %v522 = vpop.f32.mrb[0].mxu0
  %523 = vmatprep.mubr.f32.mxu0 0.0
  %524 = vmatmul.mubr.f32.gmra.mrb[0].mxu0 %v91
  %v525 = vpop.f32.mrb[0].mxu0
  %v526 = vadd.f32 0.0, %v525
  %v527 = vpop.f32.mrb[0].mxu0
  %528 = vmatprep.mubr.f32.mxu0 0.0
  %529 = vmatmul.mubr.f32.gmra.mrb[0].mxu0 %v94
  %v530 = vpop.f32.mrb[0].mxu0
  %v531 = vadd.f32 0.0, %v530
  %v532 = vpop.f32.mrb[0].mxu0
  %533 = vmatprep.mubr.f32.mxu0 0.0
  %534 = vmatmul.mubr.f32.gmra.mrb[0].mxu0 %v97
  %v535 = vpop.f32.mrb[0].mxu0
  %v536 = vadd.f32 0.0, %v535
  %v537 = vpop.f32.mrb[0].mxu0
  %538 = vmatprep.mubr.f32.mxu0 0.0
  %539 = vmatmul.mubr.f32.gmra.mrb[0].mxu0 %v100
  %v540 = vpop.f32.mrb[0].mxu0
  %v541 = vadd.f32 0.0, %v540
  %v542 = vpop.f32.mrb[0].mxu0
  %543 = vmatprep.mubr.f32.mxu0 0.0
  %544 = vmatmul.mubr.f32.gmra.mrb[0].mxu0 %v103
  %v545 = vpop.f32.mrb[0].mxu0
  %v546 = vadd.f32 0.0, %v545
  %v547 = vpop.f32.mrb[0].mxu0
  %548 = vmatprep.mubr.f32.mxu0 0.0
  %549 = vmatmul.mubr.f32.gmra.mrb[0].mxu0 %v106
  %v550 = vpop.f32.mrb[0].mxu0
  %v551 = vadd.f32 0.0, %v550
  %v552 = vpop.f32.mrb[0].mxu0
  %553 = vmatprep.mubr.f32.mxu0 0.0
  %554 = vmatmul.mubr.f32.gmra.mrb[0].mxu0 %v258
  %v555 = vpop.f32.mrb[0].mxu0
  %v556 = vadd.f32 0.0, %v555
  %v557 = vpop.f32.mrb[0].mxu0
  %558 = vdwg.mxu0
  %v559 = vadd.f32 %v330, %v481
  %v560 = vadd.f32 %v335, %v486
  %v561 = vadd.f32 %v340, %v491
  %v562 = vadd.f32 %v345, %v496
  %v563 = vadd.f32 %v350, %v501
  %v564 = vadd.f32 %v355, %v506
  %v565 = vadd.f32 %v360, %v511
  %v566 = vadd.f32 %v365, %v516
  %v567 = vadd.f32 %v370, %v521
  %v568 = vadd.f32 %v375, %v526
  %v569 = vadd.f32 %v380, %v531
  %v570 = vadd.f32 %v385, %v536
  %v571 = vadd.f32 %v390, %v541
  %v572 = vadd.f32 %v395, %v546
  %v573 = vadd.f32 %v400, %v551
  %v574 = vadd.f32 %v405, %v556
  %v575 = vld [vmem:[%s2] sm:$0x1]
  %v577 = vlaneseq
  %v578 = vshrl.u32 %v577, 7
  %v579 = vsub.s32 0, %v578
  %v580 = vrot.slane %v575, %v579
  %v582 = vadd.f32 %v559, %v580
  %v583 = vadd.f32 %v560, %v580
  %v584 = vadd.f32 %v561, %v580
  %v585 = vadd.f32 %v562, %v580
  %v586 = vadd.f32 %v563, %v580
  %v587 = vadd.f32 %v564, %v580
  %v588 = vadd.f32 %v565, %v580
  %v589 = vadd.f32 %v566, %v580
  %v590 = vadd.f32 %v567, %v580
  %v591 = vadd.f32 %v568, %v580
  %v592 = vadd.f32 %v569, %v580
  %v593 = vadd.f32 %v570, %v580
  %v594 = vadd.f32 %v571, %v580
  %v595 = vadd.f32 %v572, %v580
  %v596 = vadd.f32 %v573, %v580
  %v597 = vadd.f32 %v574, %v580
  %v598 = vmax.f32 %v582, 0.0
  %v599 = vmax.f32 %v583, 0.0
  %v600 = vmax.f32 %v584, 0.0
  %v601 = vmax.f32 %v585, 0.0
  %v602 = vmax.f32 %v586, 0.0
  %v603 = vmax.f32 %v587, 0.0
  %v604 = vmax.f32 %v588, 0.0
  %v605 = vmax.f32 %v589, 0.0
  %v606 = vmax.f32 %v590, 0.0
  %v607 = vmax.f32 %v591, 0.0
  %v608 = vmax.f32 %v592, 0.0
  %v609 = vmax.f32 %v593, 0.0
  %v610 = vmax.f32 %v594, 0.0
  %v611 = vmax.f32 %v595, 0.0
  %v612 = vmax.f32 %v596, 0.0
  %v613 = vmax.f32 %v597, 0.0
  %v614 = vld [vmem:[%s3] sm:$0xff]
  %v615 = vld [vmem:[%s3 + $0x8] sm:$0xff]
  %v616 = vld [vmem:[%s3 + $0x10] sm:$0xff]
  %v617 = vld [vmem:[%s3 + $0x18] sm:$0xff]
  %v618 = vld [vmem:[%s3 + $0x20] sm:$0xff]
  %v619 = vld [vmem:[%s3 + $0x28] sm:$0xff]
  %v620 = vld [vmem:[%s3 + $0x30] sm:$0xff]
  %v621 = vld [vmem:[%s3 + $0x38] sm:$0xff]
  %s622 = scalar_lea.vmem %s3, 64
  %v623 = vld [vmem:[%s622] sm:$0xff]
  %v624 = vld [vmem:[%s622 + $0x8] sm:$0xff]
  %v625 = vld [vmem:[%s622 + $0x10] sm:$0xff]
  %v626 = vld [vmem:[%s622 + $0x18] sm:$0xff]
  %v627 = vld [vmem:[%s622 + $0x20] sm:$0xff]
  %v628 = vld [vmem:[%s622 + $0x28] sm:$0xff]
  %v629 = vld [vmem:[%s622 + $0x30] sm:$0xff]
  %v630 = vld [vmem:[%s622 + $0x38] sm:$0xff]
  %vm631 = vcmask 523264
  %v633 = vsel %vm631, %v598, 0
  %v636 = vsel %vm631, %v599, 0
  %v639 = vsel %vm631, %v600, 0
  %v642 = vsel %vm631, %v601, 0
  %v645 = vsel %vm631, %v602, 0
  %v648 = vsel %vm631, %v603, 0
  %v651 = vsel %vm631, %v604, 0
  %v654 = vsel %vm631, %v605, 0
  %v657 = vsel %vm631, %v606, 0
  %v660 = vsel %vm631, %v607, 0
  %v663 = vsel %vm631, %v608, 0
  %v666 = vsel %vm631, %v609, 0
  %v669 = vsel %vm631, %v610, 0
  %v672 = vsel %vm631, %v611, 0
  %v675 = vsel %vm631, %v612, 0
  %v678 = vsel %vm631, %v613, 0
  %680 = vmatprep.subr.mxu0 0.0
  %681 = vmatpush1.msra.mxu0 %v623
  %682 = vmatprep.subr.mxu0 0.0
  %683 = vmatpush1.msra.mxu0 %v624
  %684 = vmatprep.subr.mxu0 0.0
  %685 = vmatpush1.msra.mxu0 %v625
  %686 = vmatprep.subr.mxu0 0.0
  %687 = vmatpush1.msra.mxu0 %v626
  %688 = vmatprep.subr.mxu0 0.0
  %689 = vmatpush1.msra.mxu0 %v627
  %690 = vmatprep.subr.mxu0 0.0
  %691 = vmatpush1.msra.mxu0 %v628
  %692 = vmatprep.subr.mxu0 0.0
  %693 = vmatpush1.msra.mxu0 %v629
  %694 = vmatprep.subr.mxu0 0.0
  %695 = vmatpush1.msra.mxu0 %v630
  %696 = vmatprep.subr.mxu0 0.0
  %697 = vmatpush1.msra.mxu0 0.0
  %698 = vmatprep.subr.mxu0 0.0
  %699 = vmatpush1.msra.mxu0 0.0
  %700 = vmatprep.subr.mxu0 0.0
  %701 = vmatpush1.msra.mxu0 0.0
  %702 = vmatprep.subr.mxu0 0.0
  %703 = vmatpush1.msra.mxu0 0.0
  %704 = vmatprep.subr.mxu0 0.0
  %705 = vmatpush1.msra.mxu0 0.0
  %706 = vmatprep.subr.mxu0 0.0
  %707 = vmatpush1.msra.mxu0 0.0
  %708 = vmatprep.subr.mxu0 0.0
  %709 = vmatpush1.msra.mxu0 0.0
  %710 = vmatprep.subr.mxu0 0.0
  %711 = vmatpush1.msra.mxu0 0.0
  %712 = vmatprep.subr.mxu0 0.0
  %713 = vmatpush1.msra.mxu0 0.0
  %714 = vmatprep.subr.mxu0 0.0
  %715 = vmatpush1.msra.mxu0 0.0
  %716 = vmatprep.subr.mxu0 0.0
  %717 = vmatpush1.msra.mxu0 0.0
  %718 = vmatprep.subr.mxu0 0.0
  %719 = vmatpush1.msra.mxu0 0.0
  %720 = vmatprep.subr.mxu0 0.0
  %721 = vmatpush1.msra.mxu0 0.0
  %722 = vmatprep.subr.mxu0 0.0
  %723 = vmatpush1.msra.mxu0 0.0
  %724 = vmatprep.subr.mxu0 0.0
  %725 = vmatpush1.msra.mxu0 0.0
  %726 = vmatprep.subr.mxu0 0.0
  %727 = vmatpush1.msra.mxu0 0.0
  %728 = vmatprep.subr.mxu0 0.0
  %729 = vmatpush1.msra.mxu0 0.0
  %730 = vmatprep.subr.mxu0 0.0
  %731 = vmatpush1.msra.mxu0 0.0
  %732 = vmatprep.subr.mxu0 0.0
  %733 = vmatpush1.msra.mxu0 0.0
  %734 = vmatprep.subr.mxu0 0.0
  %735 = vmatpush1.msra.mxu0 0.0
  %736 = vmatprep.subr.mxu0 0.0
  %737 = vmatpush1.msra.mxu0 0.0
  %738 = vmatprep.subr.mxu0 0.0
  %739 = vmatpush1.msra.mxu0 0.0
  %740 = vmatprep.subr.mxu0 0.0
  %741 = vmatpush1.msra.mxu0 0.0
  %742 = vmatprep.subr.mxu0 0.0
  %743 = vmatpush1.msra.mxu0 0.0
  %744 = vmatprep.mubr.f32.mxu0 0.0
  %745 = vmatmul.mubr.f32.gmra.mrb[0].mxu0 %v633
  %v746 = vpop.f32.mrb[0].mxu0
  %v747 = vadd.f32 0.0, %v746
  %v748 = vpop.f32.mrb[0].mxu0
  %749 = vmatprep.mubr.f32.mxu0 0.0
  %750 = vmatmul.mubr.f32.gmra.mrb[0].mxu0 %v636
  %v751 = vpop.f32.mrb[0].mxu0
  %v752 = vadd.f32 0.0, %v751
  %v753 = vpop.f32.mrb[0].mxu0
  %754 = vmatprep.mubr.f32.mxu0 0.0
  %755 = vmatmul.mubr.f32.gmra.mrb[0].mxu0 %v639
  %v756 = vpop.f32.mrb[0].mxu0
  %v757 = vadd.f32 0.0, %v756
  %v758 = vpop.f32.mrb[0].mxu0
  %759 = vmatprep.mubr.f32.mxu0 0.0
  %760 = vmatmul.mubr.f32.gmra.mrb[0].mxu0 %v642
  %v761 = vpop.f32.mrb[0].mxu0
  %v762 = vadd.f32 0.0, %v761
  %v763 = vpop.f32.mrb[0].mxu0
  %764 = vmatprep.mubr.f32.mxu0 0.0
  %765 = vmatmul.mubr.f32.gmra.mrb[0].mxu0 %v645
  %v766 = vpop.f32.mrb[0].mxu0
  %v767 = vadd.f32 0.0, %v766
  %v768 = vpop.f32.mrb[0].mxu0
  %769 = vmatprep.mubr.f32.mxu0 0.0
  %770 = vmatmul.mubr.f32.gmra.mrb[0].mxu0 %v648
  %v771 = vpop.f32.mrb[0].mxu0
  %v772 = vadd.f32 0.0, %v771
  %v773 = vpop.f32.mrb[0].mxu0
  %774 = vmatprep.mubr.f32.mxu0 0.0
  %775 = vmatmul.mubr.f32.gmra.mrb[0].mxu0 %v651
  %v776 = vpop.f32.mrb[0].mxu0
  %v777 = vadd.f32 0.0, %v776
  %v778 = vpop.f32.mrb[0].mxu0
  %779 = vmatprep.mubr.f32.mxu0 0.0
  %780 = vmatmul.mubr.f32.gmra.mrb[0].mxu0 %v654
  %v781 = vpop.f32.mrb[0].mxu0
  %v782 = vadd.f32 0.0, %v781
  %v783 = vpop.f32.mrb[0].mxu0
  %784 = vmatprep.mubr.f32.mxu0 0.0
  %785 = vmatmul.mubr.f32.gmra.mrb[0].mxu0 %v657
  %v786 = vpop.f32.mrb[0].mxu0
  %v787 = vadd.f32 0.0, %v786
  %v788 = vpop.f32.mrb[0].mxu0
  %789 = vmatprep.mubr.f32.mxu0 0.0
  %790 = vmatmul.mubr.f32.gmra.mrb[0].mxu0 %v660
  %v791 = vpop.f32.mrb[0].mxu0
  %v792 = vadd.f32 0.0, %v791
  %v793 = vpop.f32.mrb[0].mxu0
  %794 = vmatprep.mubr.f32.mxu0 0.0
  %795 = vmatmul.mubr.f32.gmra.mrb[0].mxu0 %v663
  %v796 = vpop.f32.mrb[0].mxu0
  %v797 = vadd.f32 0.0, %v796
  %v798 = vpop.f32.mrb[0].mxu0
  %799 = vmatprep.mubr.f32.mxu0 0.0
  %800 = vmatmul.mubr.f32.gmra.mrb[0].mxu0 %v666
  %v801 = vpop.f32.mrb[0].mxu0
  %v802 = vadd.f32 0.0, %v801
  %v803 = vpop.f32.mrb[0].mxu0
  %804 = vmatprep.mubr.f32.mxu0 0.0
  %805 = vmatmul.mubr.f32.gmra.mrb[0].mxu0 %v669
  %v806 = vpop.f32.mrb[0].mxu0
  %v807 = vadd.f32 0.0, %v806
  %v808 = vpop.f32.mrb[0].mxu0
  %809 = vmatprep.mubr.f32.mxu0 0.0
  %810 = vmatmul.mubr.f32.gmra.mrb[0].mxu0 %v672
  %v811 = vpop.f32.mrb[0].mxu0
  %v812 = vadd.f32 0.0, %v811
  %v813 = vpop.f32.mrb[0].mxu0
  %814 = vmatprep.mubr.f32.mxu0 0.0
  %815 = vmatmul.mubr.f32.gmra.mrb[0].mxu0 %v675
  %v816 = vpop.f32.mrb[0].mxu0
  %v817 = vadd.f32 0.0, %v816
  %v818 = vpop.f32.mrb[0].mxu0
  %819 = vmatprep.mubr.f32.mxu0 0.0
  %820 = vmatmul.mubr.f32.gmra.mrb[0].mxu0 %v678
  %v821 = vpop.f32.mrb[0].mxu0
  %v822 = vadd.f32 0.0, %v821
  %v823 = vpop.f32.mrb[0].mxu0
  %824 = vdwg.mxu0
  %v825 = vsel %vm631, 0.0, 0
  %827 = vmatprep.subr.mxu0 0.0
  %828 = vmatpush1.msra.mxu0 %v614
  %829 = vmatprep.subr.mxu0 0.0
  %830 = vmatpush1.msra.mxu0 %v615
  %831 = vmatprep.subr.mxu0 0.0
  %832 = vmatpush1.msra.mxu0 %v616
  %833 = vmatprep.subr.mxu0 0.0
  %834 = vmatpush1.msra.mxu0 %v617
  %835 = vmatprep.subr.mxu0 0.0
  %836 = vmatpush1.msra.mxu0 %v618
  %837 = vmatprep.subr.mxu0 0.0
  %838 = vmatpush1.msra.mxu0 %v619
  %839 = vmatprep.subr.mxu0 0.0
  %840 = vmatpush1.msra.mxu0 %v620
  %841 = vmatprep.subr.mxu0 0.0
  %842 = vmatpush1.msra.mxu0 %v621
  %843 = vmatprep.subr.mxu0 0.0
  %844 = vmatpush1.msra.mxu0 0.0
  %845 = vmatprep.subr.mxu0 0.0
  %846 = vmatpush1.msra.mxu0 0.0
  %847 = vmatprep.subr.mxu0 0.0
  %848 = vmatpush1.msra.mxu0 0.0
  %849 = vmatprep.subr.mxu0 0.0
  %850 = vmatpush1.msra.mxu0 0.0
  %851 = vmatprep.subr.mxu0 0.0
  %852 = vmatpush1.msra.mxu0 0.0
  %853 = vmatprep.subr.mxu0 0.0
  %854 = vmatpush1.msra.mxu0 0.0
  %855 = vmatprep.subr.mxu0 0.0
  %856 = vmatpush1.msra.mxu0 0.0
  %857 = vmatprep.subr.mxu0 0.0
  %858 = vmatpush1.msra.mxu0 0.0
  %859 = vmatprep.subr.mxu0 0.0
  %860 = vmatpush1.msra.mxu0 0.0
  %861 = vmatprep.subr.mxu0 0.0
  %862 = vmatpush1.msra.mxu0 0.0
  %863 = vmatprep.subr.mxu0 0.0
  %864 = vmatpush1.msra.mxu0 0.0
  %865 = vmatprep.subr.mxu0 0.0
  %866 = vmatpush1.msra.mxu0 0.0
  %867 = vmatprep.subr.mxu0 0.0
  %868 = vmatpush1.msra.mxu0 0.0
  %869 = vmatprep.subr.mxu0 0.0
  %870 = vmatpush1.msra.mxu0 0.0
  %871 = vmatprep.subr.mxu0 0.0
  %872 = vmatpush1.msra.mxu0 0.0
  %873 = vmatprep.subr.mxu0 0.0
  %874 = vmatpush1.msra.mxu0 0.0
  %875 = vmatprep.subr.mxu0 0.0
  %876 = vmatpush1.msra.mxu0 0.0
  %877 = vmatprep.subr.mxu0 0.0
  %878 = vmatpush1.msra.mxu0 0.0
  %879 = vmatprep.subr.mxu0 0.0
  %880 = vmatpush1.msra.mxu0 0.0
  %881 = vmatprep.subr.mxu0 0.0
  %882 = vmatpush1.msra.mxu0 0.0
  %883 = vmatprep.subr.mxu0 0.0
  %884 = vmatpush1.msra.mxu0 0.0
  %885 = vmatprep.subr.mxu0 0.0
  %886 = vmatpush1.msra.mxu0 0.0
  %887 = vmatprep.subr.mxu0 0.0
  %888 = vmatpush1.msra.mxu0 0.0
  %889 = vmatprep.subr.mxu0 0.0
  %890 = vmatpush1.msra.mxu0 0.0
  %891 = vmatprep.mubr.f32.mxu0 0.0
  %892 = vmatmul.mubr.f32.gmra.mrb[0].mxu0 %v825
  %v893 = vpop.f32.mrb[0].mxu0
  %v894 = vadd.f32 %v747, %v893
  %v895 = vpop.f32.mrb[0].mxu0
  %896 = vmatprep.mubr.f32.mxu0 0.0
  %897 = vmatmul.mubr.f32.gmra.mrb[0].mxu0 %v633
  %v898 = vpop.f32.mrb[0].mxu0
  %v899 = vadd.f32 %v752, %v898
  %v900 = vpop.f32.mrb[0].mxu0
  %901 = vmatprep.mubr.f32.mxu0 0.0
  %902 = vmatmul.mubr.f32.gmra.mrb[0].mxu0 %v636
  %v903 = vpop.f32.mrb[0].mxu0
  %v904 = vadd.f32 %v757, %v903
  %v905 = vpop.f32.mrb[0].mxu0
  %906 = vmatprep.mubr.f32.mxu0 0.0
  %907 = vmatmul.mubr.f32.gmra.mrb[0].mxu0 %v639
  %v908 = vpop.f32.mrb[0].mxu0
  %v909 = vadd.f32 %v762, %v908
  %v910 = vpop.f32.mrb[0].mxu0
  %911 = vmatprep.mubr.f32.mxu0 0.0
  %912 = vmatmul.mubr.f32.gmra.mrb[0].mxu0 %v642
  %v913 = vpop.f32.mrb[0].mxu0
  %v914 = vadd.f32 %v767, %v913
  %v915 = vpop.f32.mrb[0].mxu0
  %916 = vmatprep.mubr.f32.mxu0 0.0
  %917 = vmatmul.mubr.f32.gmra.mrb[0].mxu0 %v645
  %v918 = vpop.f32.mrb[0].mxu0
  %v919 = vadd.f32 %v772, %v918
  %v920 = vpop.f32.mrb[0].mxu0
  %921 = vmatprep.mubr.f32.mxu0 0.0
  %922 = vmatmul.mubr.f32.gmra.mrb[0].mxu0 %v648
  %v923 = vpop.f32.mrb[0].mxu0
  %v924 = vadd.f32 %v777, %v923
  %v925 = vpop.f32.mrb[0].mxu0
  %926 = vmatprep.mubr.f32.mxu0 0.0
  %927 = vmatmul.mubr.f32.gmra.mrb[0].mxu0 %v651
  %v928 = vpop.f32.mrb[0].mxu0
  %v929 = vadd.f32 %v782, %v928
  %v930 = vpop.f32.mrb[0].mxu0
  %931 = vmatprep.mubr.f32.mxu0 0.0
  %932 = vmatmul.mubr.f32.gmra.mrb[0].mxu0 %v654
  %v933 = vpop.f32.mrb[0].mxu0
  %v934 = vadd.f32 %v787, %v933
  %v935 = vpop.f32.mrb[0].mxu0
  %936 = vmatprep.mubr.f32.mxu0 0.0
  %937 = vmatmul.mubr.f32.gmra.mrb[0].mxu0 %v657
  %v938 = vpop.f32.mrb[0].mxu0
  %v939 = vadd.f32 %v792, %v938
  %v940 = vpop.f32.mrb[0].mxu0
  %941 = vmatprep.mubr.f32.mxu0 0.0
  %942 = vmatmul.mubr.f32.gmra.mrb[0].mxu0 %v660
  %v943 = vpop.f32.mrb[0].mxu0
  %v944 = vadd.f32 %v797, %v943
  %v945 = vpop.f32.mrb[0].mxu0
  %946 = vmatprep.mubr.f32.mxu0 0.0
  %947 = vmatmul.mubr.f32.gmra.mrb[0].mxu0 %v663
  %v948 = vpop.f32.mrb[0].mxu0
  %v949 = vadd.f32 %v802, %v948
  %v950 = vpop.f32.mrb[0].mxu0
  %951 = vmatprep.mubr.f32.mxu0 0.0
  %952 = vmatmul.mubr.f32.gmra.mrb[0].mxu0 %v666
  %v953 = vpop.f32.mrb[0].mxu0
  %v954 = vadd.f32 %v807, %v953
  %v955 = vpop.f32.mrb[0].mxu0
  %956 = vmatprep.mubr.f32.mxu0 0.0
  %957 = vmatmul.mubr.f32.gmra.mrb[0].mxu0 %v669
  %v958 = vpop.f32.mrb[0].mxu0
  %v959 = vadd.f32 %v812, %v958
  %v960 = vpop.f32.mrb[0].mxu0
  %961 = vmatprep.mubr.f32.mxu0 0.0
  %962 = vmatmul.mubr.f32.gmra.mrb[0].mxu0 %v672
  %v963 = vpop.f32.mrb[0].mxu0
  %v964 = vadd.f32 %v817, %v963
  %v965 = vpop.f32.mrb[0].mxu0
  %966 = vmatprep.mubr.f32.mxu0 0.0
  %967 = vmatmul.mubr.f32.gmra.mrb[0].mxu0 %v675
  %v968 = vpop.f32.mrb[0].mxu0
  %v969 = vadd.f32 %v822, %v968
  %v970 = vpop.f32.mrb[0].mxu0
  %971 = vdwg.mxu0
  %s972 = scalar_lea.vmem %s3, 128
  %v973 = vld [vmem:[%s972] sm:$0xff]
  %v974 = vld [vmem:[%s972 + $0x8] sm:$0xff]
  %v975 = vld [vmem:[%s972 + $0x10] sm:$0xff]
  %v976 = vld [vmem:[%s972 + $0x18] sm:$0xff]
  %v977 = vld [vmem:[%s972 + $0x20] sm:$0xff]
  %v978 = vld [vmem:[%s972 + $0x28] sm:$0xff]
  %v979 = vld [vmem:[%s972 + $0x30] sm:$0xff]
  %v980 = vld [vmem:[%s972 + $0x38] sm:$0xff]
  %981 = vmatprep.subr.mxu0 0.0
  %982 = vmatpush1.msra.mxu0 %v973
  %983 = vmatprep.subr.mxu0 0.0
  %984 = vmatpush1.msra.mxu0 %v974
  %985 = vmatprep.subr.mxu0 0.0
  %986 = vmatpush1.msra.mxu0 %v975
  %987 = vmatprep.subr.mxu0 0.0
  %988 = vmatpush1.msra.mxu0 %v976
  %989 = vmatprep.subr.mxu0 0.0
  %990 = vmatpush1.msra.mxu0 %v977
  %991 = vmatprep.subr.mxu0 0.0
  %992 = vmatpush1.msra.mxu0 %v978
  %993 = vmatprep.subr.mxu0 0.0
  %994 = vmatpush1.msra.mxu0 %v979
  %995 = vmatprep.subr.mxu0 0.0
  %996 = vmatpush1.msra.mxu0 %v980
  %997 = vmatprep.subr.mxu0 0.0
  %998 = vmatpush1.msra.mxu0 0.0
  %999 = vmatprep.subr.mxu0 0.0
  %1000 = vmatpush1.msra.mxu0 0.0
  %1001 = vmatprep.subr.mxu0 0.0
  %1002 = vmatpush1.msra.mxu0 0.0
  %1003 = vmatprep.subr.mxu0 0.0
  %1004 = vmatpush1.msra.mxu0 0.0
  %1005 = vmatprep.subr.mxu0 0.0
  %1006 = vmatpush1.msra.mxu0 0.0
  %1007 = vmatprep.subr.mxu0 0.0
  %1008 = vmatpush1.msra.mxu0 0.0
  %1009 = vmatprep.subr.mxu0 0.0
  %1010 = vmatpush1.msra.mxu0 0.0
  %1011 = vmatprep.subr.mxu0 0.0
  %1012 = vmatpush1.msra.mxu0 0.0
  %1013 = vmatprep.subr.mxu0 0.0
  %1014 = vmatpush1.msra.mxu0 0.0
  %1015 = vmatprep.subr.mxu0 0.0
  %1016 = vmatpush1.msra.mxu0 0.0
  %1017 = vmatprep.subr.mxu0 0.0
  %1018 = vmatpush1.msra.mxu0 0.0
  %1019 = vmatprep.subr.mxu0 0.0
  %1020 = vmatpush1.msra.mxu0 0.0
  %1021 = vmatprep.subr.mxu0 0.0
  %1022 = vmatpush1.msra.mxu0 0.0
  %1023 = vmatprep.subr.mxu0 0.0
  %1024 = vmatpush1.msra.mxu0 0.0
  %1025 = vmatprep.subr.mxu0 0.0
  %1026 = vmatpush1.msra.mxu0 0.0
  %1027 = vmatprep.subr.mxu0 0.0
  %1028 = vmatpush1.msra.mxu0 0.0
  %1029 = vmatprep.subr.mxu0 0.0
  %1030 = vmatpush1.msra.mxu0 0.0
  %1031 = vmatprep.subr.mxu0 0.0
  %1032 = vmatpush1.msra.mxu0 0.0
  %1033 = vmatprep.subr.mxu0 0.0
  %1034 = vmatpush1.msra.mxu0 0.0
  %1035 = vmatprep.subr.mxu0 0.0
  %1036 = vmatpush1.msra.mxu0 0.0
  %1037 = vmatprep.subr.mxu0 0.0
  %1038 = vmatpush1.msra.mxu0 0.0
  %1039 = vmatprep.subr.mxu0 0.0
  %1040 = vmatpush1.msra.mxu0 0.0
  %1041 = vmatprep.subr.mxu0 0.0
  %1042 = vmatpush1.msra.mxu0 0.0
  %1043 = vmatprep.subr.mxu0 0.0
  %1044 = vmatpush1.msra.mxu0 0.0
  %1045 = vmatprep.mubr.f32.mxu0 0.0
  %1046 = vmatmul.mubr.f32.gmra.mrb[0].mxu0 %v636
  %v1047 = vpop.f32.mrb[0].mxu0
  %v1048 = vadd.f32 0.0, %v1047
  %v1049 = vpop.f32.mrb[0].mxu0
  %1050 = vmatprep.mubr.f32.mxu0 0.0
  %1051 = vmatmul.mubr.f32.gmra.mrb[0].mxu0 %v639
  %v1052 = vpop.f32.mrb[0].mxu0
  %v1053 = vadd.f32 0.0, %v1052
  %v1054 = vpop.f32.mrb[0].mxu0
  %1055 = vmatprep.mubr.f32.mxu0 0.0
  %1056 = vmatmul.mubr.f32.gmra.mrb[0].mxu0 %v642
  %v1057 = vpop.f32.mrb[0].mxu0
  %v1058 = vadd.f32 0.0, %v1057
  %v1059 = vpop.f32.mrb[0].mxu0
  %1060 = vmatprep.mubr.f32.mxu0 0.0
  %1061 = vmatmul.mubr.f32.gmra.mrb[0].mxu0 %v645
  %v1062 = vpop.f32.mrb[0].mxu0
  %v1063 = vadd.f32 0.0, %v1062
  %v1064 = vpop.f32.mrb[0].mxu0
  %1065 = vmatprep.mubr.f32.mxu0 0.0
  %1066 = vmatmul.mubr.f32.gmra.mrb[0].mxu0 %v648
  %v1067 = vpop.f32.mrb[0].mxu0
  %v1068 = vadd.f32 0.0, %v1067
  %v1069 = vpop.f32.mrb[0].mxu0
  %1070 = vmatprep.mubr.f32.mxu0 0.0
  %1071 = vmatmul.mubr.f32.gmra.mrb[0].mxu0 %v651
  %v1072 = vpop.f32.mrb[0].mxu0
  %v1073 = vadd.f32 0.0, %v1072
  %v1074 = vpop.f32.mrb[0].mxu0
  %1075 = vmatprep.mubr.f32.mxu0 0.0
  %1076 = vmatmul.mubr.f32.gmra.mrb[0].mxu0 %v654
  %v1077 = vpop.f32.mrb[0].mxu0
  %v1078 = vadd.f32 0.0, %v1077
  %v1079 = vpop.f32.mrb[0].mxu0
  %1080 = vmatprep.mubr.f32.mxu0 0.0
  %1081 = vmatmul.mubr.f32.gmra.mrb[0].mxu0 %v657
  %v1082 = vpop.f32.mrb[0].mxu0
  %v1083 = vadd.f32 0.0, %v1082
  %v1084 = vpop.f32.mrb[0].mxu0
  %1085 = vmatprep.mubr.f32.mxu0 0.0
  %1086 = vmatmul.mubr.f32.gmra.mrb[0].mxu0 %v660
  %v1087 = vpop.f32.mrb[0].mxu0
  %v1088 = vadd.f32 0.0, %v1087
  %v1089 = vpop.f32.mrb[0].mxu0
  %1090 = vmatprep.mubr.f32.mxu0 0.0
  %1091 = vmatmul.mubr.f32.gmra.mrb[0].mxu0 %v663
  %v1092 = vpop.f32.mrb[0].mxu0
  %v1093 = vadd.f32 0.0, %v1092
  %v1094 = vpop.f32.mrb[0].mxu0
  %1095 = vmatprep.mubr.f32.mxu0 0.0
  %1096 = vmatmul.mubr.f32.gmra.mrb[0].mxu0 %v666
  %v1097 = vpop.f32.mrb[0].mxu0
  %v1098 = vadd.f32 0.0, %v1097
  %v1099 = vpop.f32.mrb[0].mxu0
  %1100 = vmatprep.mubr.f32.mxu0 0.0
  %1101 = vmatmul.mubr.f32.gmra.mrb[0].mxu0 %v669
  %v1102 = vpop.f32.mrb[0].mxu0
  %v1103 = vadd.f32 0.0, %v1102
  %v1104 = vpop.f32.mrb[0].mxu0
  %1105 = vmatprep.mubr.f32.mxu0 0.0
  %1106 = vmatmul.mubr.f32.gmra.mrb[0].mxu0 %v672
  %v1107 = vpop.f32.mrb[0].mxu0
  %v1108 = vadd.f32 0.0, %v1107
  %v1109 = vpop.f32.mrb[0].mxu0
  %1110 = vmatprep.mubr.f32.mxu0 0.0
  %1111 = vmatmul.mubr.f32.gmra.mrb[0].mxu0 %v675
  %v1112 = vpop.f32.mrb[0].mxu0
  %v1113 = vadd.f32 0.0, %v1112
  %v1114 = vpop.f32.mrb[0].mxu0
  %1115 = vmatprep.mubr.f32.mxu0 0.0
  %1116 = vmatmul.mubr.f32.gmra.mrb[0].mxu0 %v678
  %v1117 = vpop.f32.mrb[0].mxu0
  %v1118 = vadd.f32 0.0, %v1117
  %v1119 = vpop.f32.mrb[0].mxu0
  %1120 = vmatprep.mubr.f32.mxu0 0.0
  %1121 = vmatmul.mubr.f32.gmra.mrb[0].mxu0 %v825
  %v1122 = vpop.f32.mrb[0].mxu0
  %v1123 = vadd.f32 0.0, %v1122
  %v1124 = vpop.f32.mrb[0].mxu0
  %1125 = vdwg.mxu0
  %v1126 = vadd.f32 %v894, %v1048
  %v1127 = vadd.f32 %v899, %v1053
  %v1128 = vadd.f32 %v904, %v1058
  %v1129 = vadd.f32 %v909, %v1063
  %v1130 = vadd.f32 %v914, %v1068
  %v1131 = vadd.f32 %v919, %v1073
  %v1132 = vadd.f32 %v924, %v1078
  %v1133 = vadd.f32 %v929, %v1083
  %v1134 = vadd.f32 %v934, %v1088
  %v1135 = vadd.f32 %v939, %v1093
  %v1136 = vadd.f32 %v944, %v1098
  %v1137 = vadd.f32 %v949, %v1103
  %v1138 = vadd.f32 %v954, %v1108
  %v1139 = vadd.f32 %v959, %v1113
  %v1140 = vadd.f32 %v964, %v1118
  %v1141 = vadd.f32 %v969, %v1123
  %v1142 = vld [vmem:[%s4] sm:$0x1]
  %v1144 = vlaneseq
  %v1145 = vshrl.u32 %v1144, 7
  %v1146 = vsub.s32 0, %v1145
  %v1147 = vrot.slane %v1142, %v1146
  %v1149 = vadd.f32 %v1126, %v1147
  %v1150 = vadd.f32 %v1127, %v1147
  %v1151 = vadd.f32 %v1128, %v1147
  %v1152 = vadd.f32 %v1129, %v1147
  %v1153 = vadd.f32 %v1130, %v1147
  %v1154 = vadd.f32 %v1131, %v1147
  %v1155 = vadd.f32 %v1132, %v1147
  %v1156 = vadd.f32 %v1133, %v1147
  %v1157 = vadd.f32 %v1134, %v1147
  %v1158 = vadd.f32 %v1135, %v1147
  %v1159 = vadd.f32 %v1136, %v1147
  %v1160 = vadd.f32 %v1137, %v1147
  %v1161 = vadd.f32 %v1138, %v1147
  %v1162 = vadd.f32 %v1139, %v1147
  %v1163 = vadd.f32 %v1140, %v1147
  %v1164 = vadd.f32 %v1141, %v1147
  %v1165 = vmax.f32 %v1149, 0.0
  %v1166 = vmax.f32 %v1150, 0.0
  %v1167 = vmax.f32 %v1151, 0.0
  %v1168 = vmax.f32 %v1152, 0.0
  %v1169 = vmax.f32 %v1153, 0.0
  %v1170 = vmax.f32 %v1154, 0.0
  %v1171 = vmax.f32 %v1155, 0.0
  %v1172 = vmax.f32 %v1156, 0.0
  %v1173 = vmax.f32 %v1157, 0.0
  %v1174 = vmax.f32 %v1158, 0.0
  %v1175 = vmax.f32 %v1159, 0.0
  %v1176 = vmax.f32 %v1160, 0.0
  %v1177 = vmax.f32 %v1161, 0.0
  %v1178 = vmax.f32 %v1162, 0.0
  %v1179 = vmax.f32 %v1163, 0.0
  %v1180 = vmax.f32 %v1164, 0.0
  %v1181 = vld [vmem:[%s5] sm:$0xff]
  %v1182 = vld [vmem:[%s5 + $0x8] sm:$0xff]
  %v1183 = vld [vmem:[%s5 + $0x10] sm:$0xff]
  %v1184 = vld [vmem:[%s5 + $0x18] sm:$0xff]
  %v1185 = vld [vmem:[%s5 + $0x20] sm:$0xff]
  %v1186 = vld [vmem:[%s5 + $0x28] sm:$0xff]
  %v1187 = vld [vmem:[%s5 + $0x30] sm:$0xff]
  %v1188 = vld [vmem:[%s5 + $0x38] sm:$0xff]
  %v1189 = vld [vmem:[%s5 + $0x40] sm:$0xff]
  %v1190 = vld [vmem:[%s5 + $0x48] sm:$0xff]
  %v1191 = vld [vmem:[%s5 + $0x50] sm:$0xff]
  %v1192 = vld [vmem:[%s5 + $0x58] sm:$0xff]
  %v1193 = vld [vmem:[%s5 + $0x60] sm:$0xff]
  %v1194 = vld [vmem:[%s5 + $0x68] sm:$0xff]
  %v1195 = vld [vmem:[%s5 + $0x70] sm:$0xff]
  %v1196 = vld [vmem:[%s5 + $0x78] sm:$0xff]
  %v1197 = vld [vmem:[%s5 + $0x80] sm:$0xff]
  %v1198 = vld [vmem:[%s5 + $0x88] sm:$0xff]
  %v1199 = vld [vmem:[%s5 + $0x90] sm:$0xff]
  %v1200 = vld [vmem:[%s5 + $0x98] sm:$0xff]
  %v1201 = vld [vmem:[%s5 + $0xa0] sm:$0xff]
  %v1202 = vld [vmem:[%s5 + $0xa8] sm:$0xff]
  %v1203 = vld [vmem:[%s5 + $0xb0] sm:$0xff]
  %v1204 = vld [vmem:[%s5 + $0xb8] sm:$0xff]
  %v1205 = vld [vmem:[%s5 + $0xc0] sm:$0xff]
  %v1206 = vld [vmem:[%s5 + $0xc8] sm:$0xff]
  %v1207 = vld [vmem:[%s5 + $0xd0] sm:$0xff]
  %v1208 = vld [vmem:[%s5 + $0xd8] sm:$0xff]
  %v1209 = vld [vmem:[%s5 + $0xe0] sm:$0xff]
  %v1210 = vld [vmem:[%s5 + $0xe8] sm:$0xff]
  %v1211 = vld [vmem:[%s5 + $0xf0] sm:$0xff]
  %v1212 = vld [vmem:[%s5 + $0xf8] sm:$0xff]
  %v1213 = vld [vmem:[%s5 + $0x100] sm:$0xff]
  %v1214 = vld [vmem:[%s5 + $0x108] sm:$0xff]
  %v1215 = vld [vmem:[%s5 + $0x110] sm:$0xff]
  %v1216 = vld [vmem:[%s5 + $0x118] sm:$0xff]
  %v1217 = vld [vmem:[%s5 + $0x120] sm:$0xff]
  %v1218 = vld [vmem:[%s5 + $0x128] sm:$0xff]
  %v1219 = vld [vmem:[%s5 + $0x130] sm:$0xff]
  %v1220 = vld [vmem:[%s5 + $0x138] sm:$0xff]
  %v1221 = vld [vmem:[%s5 + $0x140] sm:$0xff]
  %v1222 = vld [vmem:[%s5 + $0x148] sm:$0xff]
  %v1223 = vld [vmem:[%s5 + $0x150] sm:$0xff]
  %v1224 = vld [vmem:[%s5 + $0x158] sm:$0xff]
  %v1225 = vld [vmem:[%s5 + $0x160] sm:$0xff]
  %v1226 = vld [vmem:[%s5 + $0x168] sm:$0xff]
  %v1227 = vld [vmem:[%s5 + $0x170] sm:$0xff]
  %v1228 = vld [vmem:[%s5 + $0x178] sm:$0xff]
  %v1229 = vld [vmem:[%s6] sm:$0x7]
  %v1231 = vlaneseq
  %v1232 = vshrl.u32 %v1231, 7
  %v1233 = vsub.s32 0, %v1232
  %v1234 = vrot.slane %v1229, %v1233
  %v1235 = vlaneseq
  %v1236 = vshrl.u32 %v1235, 7
  %v1237 = vsub.s32 1, %v1236
  %v1238 = vrot.slane %v1229, %v1237
  %v1239 = vlaneseq
  %v1240 = vshrl.u32 %v1239, 7
  %v1241 = vsub.s32 2, %v1240
  %v1242 = vrot.slane %v1229, %v1241
  %1246 = vmatprep.subr.mxu0 %v1182
  %1247 = vmatpush1.msra.mxu0 %v1181
  %1248 = vmatprep.subr.mxu0 %v1185
  %1249 = vmatpush1.msra.mxu0 %v1184
  %1250 = vmatprep.subr.mxu0 %v1188
  %1251 = vmatpush1.msra.mxu0 %v1187
  %1252 = vmatprep.subr.mxu0 %v1191
  %1253 = vmatpush1.msra.mxu0 %v1190
  %1254 = vmatprep.subr.mxu0 %v1194
  %1255 = vmatpush1.msra.mxu0 %v1193
  %1256 = vmatprep.subr.mxu0 %v1197
  %1257 = vmatpush1.msra.mxu0 %v1196
  %1258 = vmatprep.subr.mxu0 %v1200
  %1259 = vmatpush1.msra.mxu0 %v1199
  %1260 = vmatprep.subr.mxu0 %v1203
  %1261 = vmatpush1.msra.mxu0 %v1202
  %1262 = vmatprep.subr.mxu0 %v1206
  %1263 = vmatpush1.msra.mxu0 %v1205
  %1264 = vmatprep.subr.mxu0 %v1209
  %1265 = vmatpush1.msra.mxu0 %v1208
  %1266 = vmatprep.subr.mxu0 %v1212
  %1267 = vmatpush1.msra.mxu0 %v1211
  %1268 = vmatprep.subr.mxu0 %v1215
  %1269 = vmatpush1.msra.mxu0 %v1214
  %1270 = vmatprep.subr.mxu0 %v1218
  %1271 = vmatpush1.msra.mxu0 %v1217
  %1272 = vmatprep.subr.mxu0 %v1221
  %1273 = vmatpush1.msra.mxu0 %v1220
  %1274 = vmatprep.subr.mxu0 %v1224
  %1275 = vmatpush1.msra.mxu0 %v1223
  %1276 = vmatprep.subr.mxu0 %v1227
  %1277 = vmatpush1.msra.mxu0 %v1226
  %1278 = vmatprep.subr.mxu0 0.0
  %1279 = vmatpush1.msra.mxu0 0.0
  %1280 = vmatprep.subr.mxu0 0.0
  %1281 = vmatpush1.msra.mxu0 0.0
  %1282 = vmatprep.subr.mxu0 0.0
  %1283 = vmatpush1.msra.mxu0 0.0
  %1284 = vmatprep.subr.mxu0 0.0
  %1285 = vmatpush1.msra.mxu0 0.0
  %1286 = vmatprep.subr.mxu0 0.0
  %1287 = vmatpush1.msra.mxu0 0.0
  %1288 = vmatprep.subr.mxu0 0.0
  %1289 = vmatpush1.msra.mxu0 0.0
  %1290 = vmatprep.subr.mxu0 0.0
  %1291 = vmatpush1.msra.mxu0 0.0
  %1292 = vmatprep.subr.mxu0 0.0
  %1293 = vmatpush1.msra.mxu0 0.0
  %1294 = vmatprep.subr.mxu0 0.0
  %1295 = vmatpush1.msra.mxu0 0.0
  %1296 = vmatprep.subr.mxu0 0.0
  %1297 = vmatpush1.msra.mxu0 0.0
  %1298 = vmatprep.subr.mxu0 0.0
  %1299 = vmatpush1.msra.mxu0 0.0
  %1300 = vmatprep.subr.mxu0 0.0
  %1301 = vmatpush1.msra.mxu0 0.0
  %1302 = vmatprep.subr.mxu0 0.0
  %1303 = vmatpush1.msra.mxu0 0.0
  %1304 = vmatprep.subr.mxu0 0.0
  %1305 = vmatpush1.msra.mxu0 0.0
  %1306 = vmatprep.subr.mxu0 0.0
  %1307 = vmatpush1.msra.mxu0 0.0
  %1308 = vmatprep.subr.mxu0 0.0
  %1309 = vmatpush1.msra.mxu0 0.0
  %1310 = vmatprep.mubr.f32.mxu0 0.0
  %1311 = vmatmul.mubr.f32.gmra.mrb[0].mxu0 %v1165
  %v1312 = vpop.f32.mrb[0].mxu0
  %v1313 = vadd.f32 %v1234, %v1312
  %v1314 = vpop.f32.mrb[0].mxu0
  %v1315 = vadd.f32 %v1238, %v1314
  %1316 = vmatprep.mubr.f32.mxu0 0.0
  %1317 = vmatmul.mubr.f32.gmra.mrb[0].mxu0 %v1166
  %v1318 = vpop.f32.mrb[0].mxu0
  %v1319 = vadd.f32 %v1234, %v1318
  %v1320 = vpop.f32.mrb[0].mxu0
  %v1321 = vadd.f32 %v1238, %v1320
  %1322 = vmatprep.mubr.f32.mxu0 0.0
  %1323 = vmatmul.mubr.f32.gmra.mrb[0].mxu0 %v1167
  %v1324 = vpop.f32.mrb[0].mxu0
  %v1325 = vadd.f32 %v1234, %v1324
  %v1326 = vpop.f32.mrb[0].mxu0
  %v1327 = vadd.f32 %v1238, %v1326
  %1328 = vmatprep.mubr.f32.mxu0 0.0
  %1329 = vmatmul.mubr.f32.gmra.mrb[0].mxu0 %v1168
  %v1330 = vpop.f32.mrb[0].mxu0
  %v1331 = vadd.f32 %v1234, %v1330
  %v1332 = vpop.f32.mrb[0].mxu0
  %v1333 = vadd.f32 %v1238, %v1332
  %1334 = vmatprep.mubr.f32.mxu0 0.0
  %1335 = vmatmul.mubr.f32.gmra.mrb[0].mxu0 %v1169
  %v1336 = vpop.f32.mrb[0].mxu0
  %v1337 = vadd.f32 %v1234, %v1336
  %v1338 = vpop.f32.mrb[0].mxu0
  %v1339 = vadd.f32 %v1238, %v1338
  %1340 = vmatprep.mubr.f32.mxu0 0.0
  %1341 = vmatmul.mubr.f32.gmra.mrb[0].mxu0 %v1170
  %v1342 = vpop.f32.mrb[0].mxu0
  %v1343 = vadd.f32 %v1234, %v1342
  %v1344 = vpop.f32.mrb[0].mxu0
  %v1345 = vadd.f32 %v1238, %v1344
  %1346 = vmatprep.mubr.f32.mxu0 0.0
  %1347 = vmatmul.mubr.f32.gmra.mrb[0].mxu0 %v1171
  %v1348 = vpop.f32.mrb[0].mxu0
  %v1349 = vadd.f32 %v1234, %v1348
  %v1350 = vpop.f32.mrb[0].mxu0
  %v1351 = vadd.f32 %v1238, %v1350
  %1352 = vmatprep.mubr.f32.mxu0 0.0
  %1353 = vmatmul.mubr.f32.gmra.mrb[0].mxu0 %v1172
  %v1354 = vpop.f32.mrb[0].mxu0
  %v1355 = vadd.f32 %v1234, %v1354
  %v1356 = vpop.f32.mrb[0].mxu0
  %v1357 = vadd.f32 %v1238, %v1356
  %1358 = vmatprep.mubr.f32.mxu0 0.0
  %1359 = vmatmul.mubr.f32.gmra.mrb[0].mxu0 %v1173
  %v1360 = vpop.f32.mrb[0].mxu0
  %v1361 = vadd.f32 %v1234, %v1360
  %v1362 = vpop.f32.mrb[0].mxu0
  %v1363 = vadd.f32 %v1238, %v1362
  %1364 = vmatprep.mubr.f32.mxu0 0.0
  %1365 = vmatmul.mubr.f32.gmra.mrb[0].mxu0 %v1174
  %v1366 = vpop.f32.mrb[0].mxu0
  %v1367 = vadd.f32 %v1234, %v1366
  %v1368 = vpop.f32.mrb[0].mxu0
  %v1369 = vadd.f32 %v1238, %v1368
  %1370 = vmatprep.mubr.f32.mxu0 0.0
  %1371 = vmatmul.mubr.f32.gmra.mrb[0].mxu0 %v1175
  %v1372 = vpop.f32.mrb[0].mxu0
  %v1373 = vadd.f32 %v1234, %v1372
  %v1374 = vpop.f32.mrb[0].mxu0
  %v1375 = vadd.f32 %v1238, %v1374
  %1376 = vmatprep.mubr.f32.mxu0 0.0
  %1377 = vmatmul.mubr.f32.gmra.mrb[0].mxu0 %v1176
  %v1378 = vpop.f32.mrb[0].mxu0
  %v1379 = vadd.f32 %v1234, %v1378
  %v1380 = vpop.f32.mrb[0].mxu0
  %v1381 = vadd.f32 %v1238, %v1380
  %1382 = vmatprep.mubr.f32.mxu0 0.0
  %1383 = vmatmul.mubr.f32.gmra.mrb[0].mxu0 %v1177
  %v1384 = vpop.f32.mrb[0].mxu0
  %v1385 = vadd.f32 %v1234, %v1384
  %v1386 = vpop.f32.mrb[0].mxu0
  %v1387 = vadd.f32 %v1238, %v1386
  %1388 = vmatprep.mubr.f32.mxu0 0.0
  %1389 = vmatmul.mubr.f32.gmra.mrb[0].mxu0 %v1178
  %v1390 = vpop.f32.mrb[0].mxu0
  %v1391 = vadd.f32 %v1234, %v1390
  %v1392 = vpop.f32.mrb[0].mxu0
  %v1393 = vadd.f32 %v1238, %v1392
  %1394 = vmatprep.mubr.f32.mxu0 0.0
  %1395 = vmatmul.mubr.f32.gmra.mrb[0].mxu0 %v1179
  %v1396 = vpop.f32.mrb[0].mxu0
  %v1397 = vadd.f32 %v1234, %v1396
  %v1398 = vpop.f32.mrb[0].mxu0
  %v1399 = vadd.f32 %v1238, %v1398
  %1400 = vmatprep.mubr.f32.mxu0 0.0
  %1401 = vmatmul.mubr.f32.gmra.mrb[0].mxu0 %v1180
  %v1402 = vpop.f32.mrb[0].mxu0
  %v1403 = vadd.f32 %v1234, %v1402
  %v1404 = vpop.f32.mrb[0].mxu0
  %v1405 = vadd.f32 %v1238, %v1404
  %1406 = vdwg.mxu0
  %1407 = vmatprep.subr.mxu0 0.0
  %1408 = vmatpush1.msra.mxu0 %v1183
  %1409 = vmatprep.subr.mxu0 0.0
  %1410 = vmatpush1.msra.mxu0 %v1186
  %1411 = vmatprep.subr.mxu0 0.0
  %1412 = vmatpush1.msra.mxu0 %v1189
  %1413 = vmatprep.subr.mxu0 0.0
  %1414 = vmatpush1.msra.mxu0 %v1192
  %1415 = vmatprep.subr.mxu0 0.0
  %1416 = vmatpush1.msra.mxu0 %v1195
  %1417 = vmatprep.subr.mxu0 0.0
  %1418 = vmatpush1.msra.mxu0 %v1198
  %1419 = vmatprep.subr.mxu0 0.0
  %1420 = vmatpush1.msra.mxu0 %v1201
  %1421 = vmatprep.subr.mxu0 0.0
  %1422 = vmatpush1.msra.mxu0 %v1204
  %1423 = vmatprep.subr.mxu0 0.0
  %1424 = vmatpush1.msra.mxu0 %v1207
  %1425 = vmatprep.subr.mxu0 0.0
  %1426 = vmatpush1.msra.mxu0 %v1210
  %1427 = vmatprep.subr.mxu0 0.0
  %1428 = vmatpush1.msra.mxu0 %v1213
  %1429 = vmatprep.subr.mxu0 0.0
  %1430 = vmatpush1.msra.mxu0 %v1216
  %1431 = vmatprep.subr.mxu0 0.0
  %1432 = vmatpush1.msra.mxu0 %v1219
  %1433 = vmatprep.subr.mxu0 0.0
  %1434 = vmatpush1.msra.mxu0 %v1222
  %1435 = vmatprep.subr.mxu0 0.0
  %1436 = vmatpush1.msra.mxu0 %v1225
  %1437 = vmatprep.subr.mxu0 0.0
  %1438 = vmatpush1.msra.mxu0 %v1228
  %1439 = vmatprep.subr.mxu0 0.0
  %1440 = vmatpush1.msra.mxu0 0.0
  %1441 = vmatprep.subr.mxu0 0.0
  %1442 = vmatpush1.msra.mxu0 0.0
  %1443 = vmatprep.subr.mxu0 0.0
  %1444 = vmatpush1.msra.mxu0 0.0
  %1445 = vmatprep.subr.mxu0 0.0
  %1446 = vmatpush1.msra.mxu0 0.0
  %1447 = vmatprep.subr.mxu0 0.0
  %1448 = vmatpush1.msra.mxu0 0.0
  %1449 = vmatprep.subr.mxu0 0.0
  %1450 = vmatpush1.msra.mxu0 0.0
  %1451 = vmatprep.subr.mxu0 0.0
  %1452 = vmatpush1.msra.mxu0 0.0
  %1453 = vmatprep.subr.mxu0 0.0
  %1454 = vmatpush1.msra.mxu0 0.0
  %1455 = vmatprep.subr.mxu0 0.0
  %1456 = vmatpush1.msra.mxu0 0.0
  %1457 = vmatprep.subr.mxu0 0.0
  %1458 = vmatpush1.msra.mxu0 0.0
  %1459 = vmatprep.subr.mxu0 0.0
  %1460 = vmatpush1.msra.mxu0 0.0
  %1461 = vmatprep.subr.mxu0 0.0
  %1462 = vmatpush1.msra.mxu0 0.0
  %1463 = vmatprep.subr.mxu0 0.0
  %1464 = vmatpush1.msra.mxu0 0.0
  %1465 = vmatprep.subr.mxu0 0.0
  %1466 = vmatpush1.msra.mxu0 0.0
  %1467 = vmatprep.subr.mxu0 0.0
  %1468 = vmatpush1.msra.mxu0 0.0
  %1469 = vmatprep.subr.mxu0 0.0
  %1470 = vmatpush1.msra.mxu0 0.0
  %1471 = vmatprep.mubr.f32.mxu0 0.0
  %1472 = vmatmul.mubr.f32.gmra.mrb[0].mxu0 %v1165
  %v1473 = vpop.f32.mrb[0].mxu0
  %v1474 = vadd.f32 %v1242, %v1473
  %v1475 = vpop.f32.mrb[0].mxu0
  %1476 = vmatprep.mubr.f32.mxu0 0.0
  %1477 = vmatmul.mubr.f32.gmra.mrb[0].mxu0 %v1166
  %v1478 = vpop.f32.mrb[0].mxu0
  %v1479 = vadd.f32 %v1242, %v1478
  %v1480 = vpop.f32.mrb[0].mxu0
  %1481 = vmatprep.mubr.f32.mxu0 0.0
  %1482 = vmatmul.mubr.f32.gmra.mrb[0].mxu0 %v1167
  %v1483 = vpop.f32.mrb[0].mxu0
  %v1484 = vadd.f32 %v1242, %v1483
  %v1485 = vpop.f32.mrb[0].mxu0
  %1486 = vmatprep.mubr.f32.mxu0 0.0
  %1487 = vmatmul.mubr.f32.gmra.mrb[0].mxu0 %v1168
  %v1488 = vpop.f32.mrb[0].mxu0
  %v1489 = vadd.f32 %v1242, %v1488
  %v1490 = vpop.f32.mrb[0].mxu0
  %1491 = vmatprep.mubr.f32.mxu0 0.0
  %1492 = vmatmul.mubr.f32.gmra.mrb[0].mxu0 %v1169
  %v1493 = vpop.f32.mrb[0].mxu0
  %v1494 = vadd.f32 %v1242, %v1493
  %v1495 = vpop.f32.mrb[0].mxu0
  %1496 = vmatprep.mubr.f32.mxu0 0.0
  %1497 = vmatmul.mubr.f32.gmra.mrb[0].mxu0 %v1170
  %v1498 = vpop.f32.mrb[0].mxu0
  %v1499 = vadd.f32 %v1242, %v1498
  %v1500 = vpop.f32.mrb[0].mxu0
  %1501 = vmatprep.mubr.f32.mxu0 0.0
  %1502 = vmatmul.mubr.f32.gmra.mrb[0].mxu0 %v1171
  %v1503 = vpop.f32.mrb[0].mxu0
  %v1504 = vadd.f32 %v1242, %v1503
  %v1505 = vpop.f32.mrb[0].mxu0
  %1506 = vmatprep.mubr.f32.mxu0 0.0
  %1507 = vmatmul.mubr.f32.gmra.mrb[0].mxu0 %v1172
  %v1508 = vpop.f32.mrb[0].mxu0
  %v1509 = vadd.f32 %v1242, %v1508
  %v1510 = vpop.f32.mrb[0].mxu0
  %1511 = vmatprep.mubr.f32.mxu0 0.0
  %1512 = vmatmul.mubr.f32.gmra.mrb[0].mxu0 %v1173
  %v1513 = vpop.f32.mrb[0].mxu0
  %v1514 = vadd.f32 %v1242, %v1513
  %v1515 = vpop.f32.mrb[0].mxu0
  %1516 = vmatprep.mubr.f32.mxu0 0.0
  %1517 = vmatmul.mubr.f32.gmra.mrb[0].mxu0 %v1174
  %v1518 = vpop.f32.mrb[0].mxu0
  %v1519 = vadd.f32 %v1242, %v1518
  %v1520 = vpop.f32.mrb[0].mxu0
  %1521 = vmatprep.mubr.f32.mxu0 0.0
  %1522 = vmatmul.mubr.f32.gmra.mrb[0].mxu0 %v1175
  %v1523 = vpop.f32.mrb[0].mxu0
  %v1524 = vadd.f32 %v1242, %v1523
  %v1525 = vpop.f32.mrb[0].mxu0
  %1526 = vmatprep.mubr.f32.mxu0 0.0
  %1527 = vmatmul.mubr.f32.gmra.mrb[0].mxu0 %v1176
  %v1528 = vpop.f32.mrb[0].mxu0
  %v1529 = vadd.f32 %v1242, %v1528
  %v1530 = vpop.f32.mrb[0].mxu0
  %1531 = vmatprep.mubr.f32.mxu0 0.0
  %1532 = vmatmul.mubr.f32.gmra.mrb[0].mxu0 %v1177
  %v1533 = vpop.f32.mrb[0].mxu0
  %v1534 = vadd.f32 %v1242, %v1533
  %v1535 = vpop.f32.mrb[0].mxu0
  %1536 = vmatprep.mubr.f32.mxu0 0.0
  %1537 = vmatmul.mubr.f32.gmra.mrb[0].mxu0 %v1178
  %v1538 = vpop.f32.mrb[0].mxu0
  %v1539 = vadd.f32 %v1242, %v1538
  %v1540 = vpop.f32.mrb[0].mxu0
  %1541 = vmatprep.mubr.f32.mxu0 0.0
  %1542 = vmatmul.mubr.f32.gmra.mrb[0].mxu0 %v1179
  %v1543 = vpop.f32.mrb[0].mxu0
  %v1544 = vadd.f32 %v1242, %v1543
  %v1545 = vpop.f32.mrb[0].mxu0
  %1546 = vmatprep.mubr.f32.mxu0 0.0
  %1547 = vmatmul.mubr.f32.gmra.mrb[0].mxu0 %v1180
  %v1548 = vpop.f32.mrb[0].mxu0
  %v1549 = vadd.f32 %v1242, %v1548
  %v1550 = vpop.f32.mrb[0].mxu0
  %1551 = vdwg.mxu0
  %1552 = vst [vmem:[#allocation2] sm:$0xff] %v1313
  %1553 = vst [vmem:[#allocation2 + $0x8] sm:$0xff] %v1315
  %1554 = vst [vmem:[#allocation2 + $0x10] sm:$0xff] %v1474
  %1555 = vst [vmem:[#allocation2 + $0x18] sm:$0xff] %v1319
  %1556 = vst [vmem:[#allocation2 + $0x20] sm:$0xff] %v1321
  %1557 = vst [vmem:[#allocation2 + $0x28] sm:$0xff] %v1479
  %1558 = vst [vmem:[#allocation2 + $0x30] sm:$0xff] %v1325
  %1559 = vst [vmem:[#allocation2 + $0x38] sm:$0xff] %v1327
  %1560 = vst [vmem:[#allocation2 + $0x40] sm:$0xff] %v1484
  %1561 = vst [vmem:[#allocation2 + $0x48] sm:$0xff] %v1331
  %1562 = vst [vmem:[#allocation2 + $0x50] sm:$0xff] %v1333
  %1563 = vst [vmem:[#allocation2 + $0x58] sm:$0xff] %v1489
  %1564 = vst [vmem:[#allocation2 + $0x60] sm:$0xff] %v1337
  %1565 = vst [vmem:[#allocation2 + $0x68] sm:$0xff] %v1339
  %1566 = vst [vmem:[#allocation2 + $0x70] sm:$0xff] %v1494
  %1567 = vst [vmem:[#allocation2 + $0x78] sm:$0xff] %v1343
  %1568 = vst [vmem:[#allocation2 + $0x80] sm:$0xff] %v1345
  %1569 = vst [vmem:[#allocation2 + $0x88] sm:$0xff] %v1499
  %1570 = vst [vmem:[#allocation2 + $0x90] sm:$0xff] %v1349
  %1571 = vst [vmem:[#allocation2 + $0x98] sm:$0xff] %v1351
  %1572 = vst [vmem:[#allocation2 + $0xa0] sm:$0xff] %v1504
  %1573 = vst [vmem:[#allocation2 + $0xa8] sm:$0xff] %v1355
  %1574 = vst [vmem:[#allocation2 + $0xb0] sm:$0xff] %v1357
  %1575 = vst [vmem:[#allocation2 + $0xb8] sm:$0xff] %v1509
  %1576 = vst [vmem:[#allocation2 + $0xc0] sm:$0xff] %v1361
  %1577 = vst [vmem:[#allocation2 + $0xc8] sm:$0xff] %v1363
  %1578 = vst [vmem:[#allocation2 + $0xd0] sm:$0xff] %v1514
  %1579 = vst [vmem:[#allocation2 + $0xd8] sm:$0xff] %v1367
  %1580 = vst [vmem:[#allocation2 + $0xe0] sm:$0xff] %v1369
  %1581 = vst [vmem:[#allocation2 + $0xe8] sm:$0xff] %v1519
  %1582 = vst [vmem:[#allocation2 + $0xf0] sm:$0xff] %v1373
  %1583 = vst [vmem:[#allocation2 + $0xf8] sm:$0xff] %v1375
  %1584 = vst [vmem:[#allocation2 + $0x100] sm:$0xff] %v1524
  %1585 = vst [vmem:[#allocation2 + $0x108] sm:$0xff] %v1379
  %1586 = vst [vmem:[#allocation2 + $0x110] sm:$0xff] %v1381
  %1587 = vst [vmem:[#allocation2 + $0x118] sm:$0xff] %v1529
  %1588 = vst [vmem:[#allocation2 + $0x120] sm:$0xff] %v1385
  %1589 = vst [vmem:[#allocation2 + $0x128] sm:$0xff] %v1387
  %1590 = vst [vmem:[#allocation2 + $0x130] sm:$0xff] %v1534
  %1591 = vst [vmem:[#allocation2 + $0x138] sm:$0xff] %v1391
  %1592 = vst [vmem:[#allocation2 + $0x140] sm:$0xff] %v1393
  %1593 = vst [vmem:[#allocation2 + $0x148] sm:$0xff] %v1539
  %1594 = vst [vmem:[#allocation2 + $0x150] sm:$0xff] %v1397
  %1595 = vst [vmem:[#allocation2 + $0x158] sm:$0xff] %v1399
  %1596 = vst [vmem:[#allocation2 + $0x160] sm:$0xff] %v1544
  %1597 = vst [vmem:[#allocation2 + $0x168] sm:$0xff] %v1403
  %1598 = vst [vmem:[#allocation2 + $0x170] sm:$0xff] %v1405
  %1599 = vst [vmem:[#allocation2 + $0x178] sm:$0xff] %v1549
  %v1600 = vld [vmem:[%s8] sm:$0x7]
  %v1602 = vlaneseq
  %v1603 = vshrl.u32 %v1602, 7
  %v1604 = vsub.s32 0, %v1603
  %v1605 = vrot.slane %v1600, %v1604
  %v1606 = vlaneseq
  %v1607 = vshrl.u32 %v1606, 7
  %v1608 = vsub.s32 1, %v1607
  %v1609 = vrot.slane %v1600, %v1608
  %v1610 = vlaneseq
  %v1611 = vshrl.u32 %v1610, 7
  %v1612 = vsub.s32 2, %v1611
  %v1613 = vrot.slane %v1600, %v1612
  %s1617 = smul.u32 0, 3
  %s1618 = smul.addr %s1617, 8
  %s1619 = scalar_lea.vmem [#allocation2], %s1618
  %v1620 = vld [vmem:[%s1619] sm:$0xff]
  %v1621 = vld [vmem:[%s1619 + $0x8] sm:$0xff]
  %v1622 = vld [vmem:[%s1619 + $0x10] sm:$0xff]
  %v1623 = vld [vmem:[%s7] sm:$0xff]
  %v1624 = vld [vmem:[%s7 + $0x8] sm:$0xff]
  %v1625 = vld [vmem:[%s7 + $0x10] sm:$0xff]
  %v1626 = vld [vmem:[%s7 + $0x18] sm:$0xff]
  %v1627 = vld [vmem:[%s7 + $0x20] sm:$0xff]
  %v1628 = vld [vmem:[%s7 + $0x28] sm:$0xff]
  %v1629 = vld [vmem:[%s7 + $0x30] sm:$0xff]
  %v1630 = vld [vmem:[%s7 + $0x38] sm:$0xff]
  %v1631 = vld [vmem:[%s7 + $0x40] sm:$0xff]
  %v1632 = vld [vmem:[%s7 + $0x48] sm:$0xff]
  %v1633 = vld [vmem:[%s7 + $0x50] sm:$0xff]
  %v1634 = vld [vmem:[%s7 + $0x58] sm:$0xff]
  %v1635 = vld [vmem:[%s7 + $0x60] sm:$0xff]
  %v1636 = vld [vmem:[%s7 + $0x68] sm:$0xff]
  %v1637 = vld [vmem:[%s7 + $0x70] sm:$0xff]
  %v1638 = vld [vmem:[%s7 + $0x78] sm:$0xff]
  %v1639 = vld [vmem:[%s7 + $0x80] sm:$0xff]
  %v1640 = vld [vmem:[%s7 + $0x88] sm:$0xff]
  %v1641 = vld [vmem:[%s7 + $0x90] sm:$0xff]
  %v1642 = vld [vmem:[%s7 + $0x98] sm:$0xff]
  %v1643 = vld [vmem:[%s7 + $0xa0] sm:$0xff]
  %v1644 = vld [vmem:[%s7 + $0xa8] sm:$0xff]
  %v1645 = vld [vmem:[%s7 + $0xb0] sm:$0xff]
  %v1646 = vld [vmem:[%s7 + $0xb8] sm:$0xff]
  %v1647 = vld [vmem:[%s7 + $0xc0] sm:$0xff]
  %v1648 = vld [vmem:[%s7 + $0xc8] sm:$0xff]
  %v1649 = vld [vmem:[%s7 + $0xd0] sm:$0xff]
  %v1650 = vld [vmem:[%s7 + $0xd8] sm:$0xff]
  %v1651 = vld [vmem:[%s7 + $0xe0] sm:$0xff]
  %v1652 = vld [vmem:[%s7 + $0xe8] sm:$0xff]
  %v1653 = vld [vmem:[%s7 + $0xf0] sm:$0xff]
  %v1654 = vld [vmem:[%s7 + $0xf8] sm:$0xff]
  %v1655 = vld [vmem:[%s7 + $0x100] sm:$0xff]
  %v1656 = vld [vmem:[%s7 + $0x108] sm:$0xff]
  %v1657 = vld [vmem:[%s7 + $0x110] sm:$0xff]
  %v1658 = vld [vmem:[%s7 + $0x118] sm:$0xff]
  %v1659 = vld [vmem:[%s7 + $0x120] sm:$0xff]
  %v1660 = vld [vmem:[%s7 + $0x128] sm:$0xff]
  %v1661 = vld [vmem:[%s7 + $0x130] sm:$0xff]
  %v1662 = vld [vmem:[%s7 + $0x138] sm:$0xff]
  %v1663 = vld [vmem:[%s7 + $0x140] sm:$0xff]
  %v1664 = vld [vmem:[%s7 + $0x148] sm:$0xff]
  %v1665 = vld [vmem:[%s7 + $0x150] sm:$0xff]
  %v1666 = vld [vmem:[%s7 + $0x158] sm:$0xff]
  %v1667 = vld [vmem:[%s7 + $0x160] sm:$0xff]
  %v1668 = vld [vmem:[%s7 + $0x168] sm:$0xff]
  %v1669 = vld [vmem:[%s7 + $0x170] sm:$0xff]
  %v1670 = vld [vmem:[%s7 + $0x178] sm:$0xff]
  %1671 = vmatprep.subr.mxu0 %v1624
  %1672 = vmatpush1.msra.mxu0 %v1623
  %1673 = vmatprep.subr.mxu0 %v1627
  %1674 = vmatpush1.msra.mxu0 %v1626
  %1675 = vmatprep.subr.mxu0 %v1630
  %1676 = vmatpush1.msra.mxu0 %v1629
  %1677 = vmatprep.subr.mxu0 %v1633
  %1678 = vmatpush1.msra.mxu0 %v1632
  %1679 = vmatprep.subr.mxu0 %v1636
  %1680 = vmatpush1.msra.mxu0 %v1635
  %1681 = vmatprep.subr.mxu0 %v1639
  %1682 = vmatpush1.msra.mxu0 %v1638
  %1683 = vmatprep.subr.mxu0 %v1642
  %1684 = vmatpush1.msra.mxu0 %v1641
  %1685 = vmatprep.subr.mxu0 %v1645
  %1686 = vmatpush1.msra.mxu0 %v1644
  %1687 = vmatprep.subr.mxu0 %v1648
  %1688 = vmatpush1.msra.mxu0 %v1647
  %1689 = vmatprep.subr.mxu0 %v1651
  %1690 = vmatpush1.msra.mxu0 %v1650
  %1691 = vmatprep.subr.mxu0 %v1654
  %1692 = vmatpush1.msra.mxu0 %v1653
  %1693 = vmatprep.subr.mxu0 %v1657
  %1694 = vmatpush1.msra.mxu0 %v1656
  %1695 = vmatprep.subr.mxu0 %v1660
  %1696 = vmatpush1.msra.mxu0 %v1659
  %1697 = vmatprep.subr.mxu0 %v1663
  %1698 = vmatpush1.msra.mxu0 %v1662
  %1699 = vmatprep.subr.mxu0 %v1666
  %1700 = vmatpush1.msra.mxu0 %v1665
  %1701 = vmatprep.subr.mxu0 %v1669
  %1702 = vmatpush1.msra.mxu0 %v1668
  %1703 = vmatprep.subr.mxu0 0.0
  %1704 = vmatpush1.msra.mxu0 0.0
  %1705 = vmatprep.subr.mxu0 0.0
  %1706 = vmatpush1.msra.mxu0 0.0
  %1707 = vmatprep.subr.mxu0 0.0
  %1708 = vmatpush1.msra.mxu0 0.0
  %1709 = vmatprep.subr.mxu0 0.0
  %1710 = vmatpush1.msra.mxu0 0.0
  %1711 = vmatprep.subr.mxu0 0.0
  %1712 = vmatpush1.msra.mxu0 0.0
  %1713 = vmatprep.subr.mxu0 0.0
  %1714 = vmatpush1.msra.mxu0 0.0
  %1715 = vmatprep.subr.mxu0 0.0
  %1716 = vmatpush1.msra.mxu0 0.0
  %1717 = vmatprep.subr.mxu0 0.0
  %1718 = vmatpush1.msra.mxu0 0.0
  %1719 = vmatprep.subr.mxu0 0.0
  %1720 = vmatpush1.msra.mxu0 0.0
  %1721 = vmatprep.subr.mxu0 0.0
  %1722 = vmatpush1.msra.mxu0 0.0
  %1723 = vmatprep.subr.mxu0 0.0
  %1724 = vmatpush1.msra.mxu0 0.0
  %1725 = vmatprep.subr.mxu0 0.0
  %1726 = vmatpush1.msra.mxu0 0.0
  %1727 = vmatprep.subr.mxu0 0.0
  %1728 = vmatpush1.msra.mxu0 0.0
  %1729 = vmatprep.subr.mxu0 0.0
  %1730 = vmatpush1.msra.mxu0 0.0
  %1731 = vmatprep.subr.mxu0 0.0
  %1732 = vmatpush1.msra.mxu0 0.0
  %1733 = vmatprep.subr.mxu0 0.0
  %1734 = vmatpush1.msra.mxu0 0.0
  %1735 = vmatprep.mubr.f32.mxu0 0.0
  %1736 = vmatmul.mubr.f32.gmra.mrb[0].mxu0 0.0
  %v1737 = vpop.f32.mrb[0].mxu0
  %v1738 = vadd.f32 %v1605, %v1737
  %v1739 = vpop.f32.mrb[0].mxu0
  %v1740 = vadd.f32 %v1609, %v1739
  %1741 = vdwg.mxu0
  %1742 = vmatprep.subr.mxu0 0.0
  %1743 = vmatpush1.msra.mxu0 %v1625
  %1744 = vmatprep.subr.mxu0 0.0
  %1745 = vmatpush1.msra.mxu0 %v1628
  %1746 = vmatprep.subr.mxu0 0.0
  %1747 = vmatpush1.msra.mxu0 %v1631
  %1748 = vmatprep.subr.mxu0 0.0
  %1749 = vmatpush1.msra.mxu0 %v1634
  %1750 = vmatprep.subr.mxu0 0.0
  %1751 = vmatpush1.msra.mxu0 %v1637
  %1752 = vmatprep.subr.mxu0 0.0
  %1753 = vmatpush1.msra.mxu0 %v1640
  %1754 = vmatprep.subr.mxu0 0.0
  %1755 = vmatpush1.msra.mxu0 %v1643
  %1756 = vmatprep.subr.mxu0 0.0
  %1757 = vmatpush1.msra.mxu0 %v1646
  %1758 = vmatprep.subr.mxu0 0.0
  %1759 = vmatpush1.msra.mxu0 %v1649
  %1760 = vmatprep.subr.mxu0 0.0
  %1761 = vmatpush1.msra.mxu0 %v1652
  %1762 = vmatprep.subr.mxu0 0.0
  %1763 = vmatpush1.msra.mxu0 %v1655
  %1764 = vmatprep.subr.mxu0 0.0
  %1765 = vmatpush1.msra.mxu0 %v1658
  %1766 = vmatprep.subr.mxu0 0.0
  %1767 = vmatpush1.msra.mxu0 %v1661
  %1768 = vmatprep.subr.mxu0 0.0
  %1769 = vmatpush1.msra.mxu0 %v1664
  %1770 = vmatprep.subr.mxu0 0.0
  %1771 = vmatpush1.msra.mxu0 %v1667
  %1772 = vmatprep.subr.mxu0 0.0
  %1773 = vmatpush1.msra.mxu0 %v1670
  %1774 = vmatprep.subr.mxu0 0.0
  %1775 = vmatpush1.msra.mxu0 0.0
  %1776 = vmatprep.subr.mxu0 0.0
  %1777 = vmatpush1.msra.mxu0 0.0
  %1778 = vmatprep.subr.mxu0 0.0
  %1779 = vmatpush1.msra.mxu0 0.0
  %1780 = vmatprep.subr.mxu0 0.0
  %1781 = vmatpush1.msra.mxu0 0.0
  %1782 = vmatprep.subr.mxu0 0.0
  %1783 = vmatpush1.msra.mxu0 0.0
  %1784 = vmatprep.subr.mxu0 0.0
  %1785 = vmatpush1.msra.mxu0 0.0
  %1786 = vmatprep.subr.mxu0 0.0
  %1787 = vmatpush1.msra.mxu0 0.0
  %1788 = vmatprep.subr.mxu0 0.0
  %1789 = vmatpush1.msra.mxu0 0.0
  %1790 = vmatprep.subr.mxu0 0.0
  %1791 = vmatpush1.msra.mxu0 0.0
  %1792 = vmatprep.subr.mxu0 0.0
  %1793 = vmatpush1.msra.mxu0 0.0
  %1794 = vmatprep.subr.mxu0 0.0
  %1795 = vmatpush1.msra.mxu0 0.0
  %1796 = vmatprep.subr.mxu0 0.0
  %1797 = vmatpush1.msra.mxu0 0.0
  %1798 = vmatprep.subr.mxu0 0.0
  %1799 = vmatpush1.msra.mxu0 0.0
  %1800 = vmatprep.subr.mxu0 0.0
  %1801 = vmatpush1.msra.mxu0 0.0
  %1802 = vmatprep.subr.mxu0 0.0
  %1803 = vmatpush1.msra.mxu0 0.0
  %1804 = vmatprep.subr.mxu0 0.0
  %1805 = vmatpush1.msra.mxu0 0.0
  %1806 = vmatprep.mubr.f32.mxu0 0.0
  %1807 = vmatmul.mubr.f32.gmra.mrb[0].mxu0 0.0
  %v1808 = vpop.f32.mrb[0].mxu0
  %v1809 = vadd.f32 %v1613, %v1808
  %v1810 = vpop.f32.mrb[0].mxu0
  %1811 = vdwg.mxu0
  %v1812 = vadd.f32 %v1620, %v1738
  %v1813 = vxor.u32 %v1812, 2147483648
  %v1814 = vmul.f32 %v1813, 1.442695
  %v1815 = vpow.pop %v1814
  %v1816 = vadd.f32 %v1815, 1.0
  %v1817 = vrcp.pop %v1816
  %v1818 = vmul.f32 1.0, %v1817
  %v1819 = vadd.f32 %v1621, %v1740
  %v1820 = vxor.u32 %v1819, 2147483648
  %v1821 = vmul.f32 %v1820, 1.442695
  %v1822 = vpow.pop %v1821
  %v1823 = vadd.f32 %v1822, 1.0
  %v1824 = vrcp.pop %v1823
  %v1825 = vmul.f32 1.0, %v1824
  %v1826 = vmul.f32 %v1818, %v1809
  %v1827 = vadd.f32 %v1622, %v1826
  %v1828 = vtanh.pop %v1827
  %v1829 = vsub.f32 1.0, %v1825
  %v1830 = vmul.f32 %v1829, %v1828
  %v1831 = vmul.f32 %v1825, 0.0
  %v1832 = vadd.f32 %v1830, %v1831
  %s1833 = smul.u32 1, 3
  %s1834 = smul.addr %s1833, 8
  %s1835 = scalar_lea.vmem [#allocation2], %s1834
  %v1836 = vld [vmem:[%s1835] sm:$0xff]
  %v1837 = vld [vmem:[%s1835 + $0x8] sm:$0xff]
  %v1838 = vld [vmem:[%s1835 + $0x10] sm:$0xff]
  %1839 = vmatprep.subr.mxu0 %v1624
  %1840 = vmatpush1.msra.mxu0 %v1623
  %1841 = vmatprep.subr.mxu0 %v1627
  %1842 = vmatpush1.msra.mxu0 %v1626
  %1843 = vmatprep.subr.mxu0 %v1630
  %1844 = vmatpush1.msra.mxu0 %v1629
  %1845 = vmatprep.subr.mxu0 %v1633
  %1846 = vmatpush1.msra.mxu0 %v1632
  %1847 = vmatprep.subr.mxu0 %v1636
  %1848 = vmatpush1.msra.mxu0 %v1635
  %1849 = vmatprep.subr.mxu0 %v1639
  %1850 = vmatpush1.msra.mxu0 %v1638
  %1851 = vmatprep.subr.mxu0 %v1642
  %1852 = vmatpush1.msra.mxu0 %v1641
  %1853 = vmatprep.subr.mxu0 %v1645
  %1854 = vmatpush1.msra.mxu0 %v1644
  %1855 = vmatprep.subr.mxu0 %v1648
  %1856 = vmatpush1.msra.mxu0 %v1647
  %1857 = vmatprep.subr.mxu0 %v1651
  %1858 = vmatpush1.msra.mxu0 %v1650
  %1859 = vmatprep.subr.mxu0 %v1654
  %1860 = vmatpush1.msra.mxu0 %v1653
  %1861 = vmatprep.subr.mxu0 %v1657
  %1862 = vmatpush1.msra.mxu0 %v1656
  %1863 = vmatprep.subr.mxu0 %v1660
  %1864 = vmatpush1.msra.mxu0 %v1659
  %1865 = vmatprep.subr.mxu0 %v1663
  %1866 = vmatpush1.msra.mxu0 %v1662
  %1867 = vmatprep.subr.mxu0 %v1666
  %1868 = vmatpush1.msra.mxu0 %v1665
  %1869 = vmatprep.subr.mxu0 %v1669
  %1870 = vmatpush1.msra.mxu0 %v1668
  %1871 = vmatprep.subr.mxu0 0.0
  %1872 = vmatpush1.msra.mxu0 0.0
  %1873 = vmatprep.subr.mxu0 0.0
  %1874 = vmatpush1.msra.mxu0 0.0
  %1875 = vmatprep.subr.mxu0 0.0
  %1876 = vmatpush1.msra.mxu0 0.0
  %1877 = vmatprep.subr.mxu0 0.0
  %1878 = vmatpush1.msra.mxu0 0.0
  %1879 = vmatprep.subr.mxu0 0.0
  %1880 = vmatpush1.msra.mxu0 0.0
  %1881 = vmatprep.subr.mxu0 0.0
  %1882 = vmatpush1.msra.mxu0 0.0
  %1883 = vmatprep.subr.mxu0 0.0
  %1884 = vmatpush1.msra.mxu0 0.0
  %1885 = vmatprep.subr.mxu0 0.0
  %1886 = vmatpush1.msra.mxu0 0.0
  %1887 = vmatprep.subr.mxu0 0.0
  %1888 = vmatpush1.msra.mxu0 0.0
  %1889 = vmatprep.subr.mxu0 0.0
  %1890 = vmatpush1.msra.mxu0 0.0
  %1891 = vmatprep.subr.mxu0 0.0
  %1892 = vmatpush1.msra.mxu0 0.0
  %1893 = vmatprep.subr.mxu0 0.0
  %1894 = vmatpush1.msra.mxu0 0.0
  %1895 = vmatprep.subr.mxu0 0.0
  %1896 = vmatpush1.msra.mxu0 0.0
  %1897 = vmatprep.subr.mxu0 0.0
  %1898 = vmatpush1.msra.mxu0 0.0
  %1899 = vmatprep.subr.mxu0 0.0
  %1900 = vmatpush1.msra.mxu0 0.0
  %1901 = vmatprep.subr.mxu0 0.0
  %1902 = vmatpush1.msra.mxu0 0.0
  %1903 = vmatprep.mubr.f32.mxu0 0.0
  %1904 = vmatmul.mubr.f32.gmra.mrb[0].mxu0 %v1832
  %v1905 = vpop.f32.mrb[0].mxu0
  %v1906 = vadd.f32 %v1605, %v1905
  %v1907 = vpop.f32.mrb[0].mxu0
  %v1908 = vadd.f32 %v1609, %v1907
  %1909 = vdwg.mxu0
  %1910 = vmatprep.subr.mxu0 0.0
  %1911 = vmatpush1.msra.mxu0 %v1625
  %1912 = vmatprep.subr.mxu0 0.0
  %1913 = vmatpush1.msra.mxu0 %v1628
  %1914 = vmatprep.subr.mxu0 0.0
  %1915 = vmatpush1.msra.mxu0 %v1631
  %1916 = vmatprep.subr.mxu0 0.0
  %1917 = vmatpush1.msra.mxu0 %v1634
  %1918 = vmatprep.subr.mxu0 0.0
  %1919 = vmatpush1.msra.mxu0 %v1637
  %1920 = vmatprep.subr.mxu0 0.0
  %1921 = vmatpush1.msra.mxu0 %v1640
  %1922 = vmatprep.subr.mxu0 0.0
  %1923 = vmatpush1.msra.mxu0 %v1643
  %1924 = vmatprep.subr.mxu0 0.0
  %1925 = vmatpush1.msra.mxu0 %v1646
  %1926 = vmatprep.subr.mxu0 0.0
  %1927 = vmatpush1.msra.mxu0 %v1649
  %1928 = vmatprep.subr.mxu0 0.0
  %1929 = vmatpush1.msra.mxu0 %v1652
  %1930 = vmatprep.subr.mxu0 0.0
  %1931 = vmatpush1.msra.mxu0 %v1655
  %1932 = vmatprep.subr.mxu0 0.0
  %1933 = vmatpush1.msra.mxu0 %v1658
  %1934 = vmatprep.subr.mxu0 0.0
  %1935 = vmatpush1.msra.mxu0 %v1661
  %1936 = vmatprep.subr.mxu0 0.0
  %1937 = vmatpush1.msra.mxu0 %v1664
  %1938 = vmatprep.subr.mxu0 0.0
  %1939 = vmatpush1.msra.mxu0 %v1667
  %1940 = vmatprep.subr.mxu0 0.0
  %1941 = vmatpush1.msra.mxu0 %v1670
  %1942 = vmatprep.subr.mxu0 0.0
  %1943 = vmatpush1.msra.mxu0 0.0
  %1944 = vmatprep.subr.mxu0 0.0
  %1945 = vmatpush1.msra.mxu0 0.0
  %1946 = vmatprep.subr.mxu0 0.0
  %1947 = vmatpush1.msra.mxu0 0.0
  %1948 = vmatprep.subr.mxu0 0.0
  %1949 = vmatpush1.msra.mxu0 0.0
  %1950 = vmatprep.subr.mxu0 0.0
  %1951 = vmatpush1.msra.mxu0 0.0
  %1952 = vmatprep.subr.mxu0 0.0
  %1953 = vmatpush1.msra.mxu0 0.0
  %1954 = vmatprep.subr.mxu0 0.0
  %1955 = vmatpush1.msra.mxu0 0.0
  %1956 = vmatprep.subr.mxu0 0.0
  %1957 = vmatpush1.msra.mxu0 0.0
  %1958 = vmatprep.subr.mxu0 0.0
  %1959 = vmatpush1.msra.mxu0 0.0
  %1960 = vmatprep.subr.mxu0 0.0
  %1961 = vmatpush1.msra.mxu0 0.0
  %1962 = vmatprep.subr.mxu0 0.0
  %1963 = vmatpush1.msra.mxu0 0.0
  %1964 = vmatprep.subr.mxu0 0.0
  %1965 = vmatpush1.msra.mxu0 0.0
  %1966 = vmatprep.subr.mxu0 0.0
  %1967 = vmatpush1.msra.mxu0 0.0
  %1968 = vmatprep.subr.mxu0 0.0
  %1969 = vmatpush1.msra.mxu0 0.0
  %1970 = vmatprep.subr.mxu0 0.0
  %1971 = vmatpush1.msra.mxu0 0.0
  %1972 = vmatprep.subr.mxu0 0.0
  %1973 = vmatpush1.msra.mxu0 0.0
  %1974 = vmatprep.mubr.f32.mxu0 0.0
  %1975 = vmatmul.mubr.f32.gmra.mrb[0].mxu0 %v1832
  %v1976 = vpop.f32.mrb[0].mxu0
  %v1977 = vadd.f32 %v1613, %v1976
  %v1978 = vpop.f32.mrb[0].mxu0
  %1979 = vdwg.mxu0
  %v1980 = vadd.f32 %v1836, %v1906
  %v1981 = vxor.u32 %v1980, 2147483648
  %v1982 = vmul.f32 %v1981, 1.442695
  %v1983 = vpow.pop %v1982
  %v1984 = vadd.f32 %v1983, 1.0
  %v1985 = vrcp.pop %v1984
  %v1986 = vmul.f32 1.0, %v1985
  %v1987 = vadd.f32 %v1837, %v1908
  %v1988 = vxor.u32 %v1987, 2147483648
  %v1989 = vmul.f32 %v1988, 1.442695
  %v1990 = vpow.pop %v1989
  %v1991 = vadd.f32 %v1990, 1.0
  %v1992 = vrcp.pop %v1991
  %v1993 = vmul.f32 1.0, %v1992
  %v1994 = vmul.f32 %v1986, %v1977
  %v1995 = vadd.f32 %v1838, %v1994
  %v1996 = vtanh.pop %v1995
  %v1997 = vsub.f32 1.0, %v1993
  %v1998 = vmul.f32 %v1997, %v1996
  %v1999 = vmul.f32 %v1993, %v1832
  %v2000 = vadd.f32 %v1998, %v1999
  %s2001 = smul.u32 2, 3
  %s2002 = smul.addr %s2001, 8
  %s2003 = scalar_lea.vmem [#allocation2], %s2002
  %v2004 = vld [vmem:[%s2003] sm:$0xff]
  %v2005 = vld [vmem:[%s2003 + $0x8] sm:$0xff]
  %v2006 = vld [vmem:[%s2003 + $0x10] sm:$0xff]
  %2007 = vmatprep.subr.mxu0 %v1624
  %2008 = vmatpush1.msra.mxu0 %v1623
  %2009 = vmatprep.subr.mxu0 %v1627
  %2010 = vmatpush1.msra.mxu0 %v1626
  %2011 = vmatprep.subr.mxu0 %v1630
  %2012 = vmatpush1.msra.mxu0 %v1629
  %2013 = vmatprep.subr.mxu0 %v1633
  %2014 = vmatpush1.msra.mxu0 %v1632
  %2015 = vmatprep.subr.mxu0 %v1636
  %2016 = vmatpush1.msra.mxu0 %v1635
  %2017 = vmatprep.subr.mxu0 %v1639
  %2018 = vmatpush1.msra.mxu0 %v1638
  %2019 = vmatprep.subr.mxu0 %v1642
  %2020 = vmatpush1.msra.mxu0 %v1641
  %2021 = vmatprep.subr.mxu0 %v1645
  %2022 = vmatpush1.msra.mxu0 %v1644
  %2023 = vmatprep.subr.mxu0 %v1648
  %2024 = vmatpush1.msra.mxu0 %v1647
  %2025 = vmatprep.subr.mxu0 %v1651
  %2026 = vmatpush1.msra.mxu0 %v1650
  %2027 = vmatprep.subr.mxu0 %v1654
  %2028 = vmatpush1.msra.mxu0 %v1653
  %2029 = vmatprep.subr.mxu0 %v1657
  %2030 = vmatpush1.msra.mxu0 %v1656
  %2031 = vmatprep.subr.mxu0 %v1660
  %2032 = vmatpush1.msra.mxu0 %v1659
  %2033 = vmatprep.subr.mxu0 %v1663
  %2034 = vmatpush1.msra.mxu0 %v1662
  %2035 = vmatprep.subr.mxu0 %v1666
  %2036 = vmatpush1.msra.mxu0 %v1665
  %2037 = vmatprep.subr.mxu0 %v1669
  %2038 = vmatpush1.msra.mxu0 %v1668
  %2039 = vmatprep.subr.mxu0 0.0
  %2040 = vmatpush1.msra.mxu0 0.0
  %2041 = vmatprep.subr.mxu0 0.0
  %2042 = vmatpush1.msra.mxu0 0.0
  %2043 = vmatprep.subr.mxu0 0.0
  %2044 = vmatpush1.msra.mxu0 0.0
  %2045 = vmatprep.subr.mxu0 0.0
  %2046 = vmatpush1.msra.mxu0 0.0
  %2047 = vmatprep.subr.mxu0 0.0
  %2048 = vmatpush1.msra.mxu0 0.0
  %2049 = vmatprep.subr.mxu0 0.0
  %2050 = vmatpush1.msra.mxu0 0.0
  %2051 = vmatprep.subr.mxu0 0.0
  %2052 = vmatpush1.msra.mxu0 0.0
  %2053 = vmatprep.subr.mxu0 0.0
  %2054 = vmatpush1.msra.mxu0 0.0
  %2055 = vmatprep.subr.mxu0 0.0
  %2056 = vmatpush1.msra.mxu0 0.0
  %2057 = vmatprep.subr.mxu0 0.0
  %2058 = vmatpush1.msra.mxu0 0.0
  %2059 = vmatprep.subr.mxu0 0.0
  %2060 = vmatpush1.msra.mxu0 0.0
  %2061 = vmatprep.subr.mxu0 0.0
  %2062 = vmatpush1.msra.mxu0 0.0
  %2063 = vmatprep.subr.mxu0 0.0
  %2064 = vmatpush1.msra.mxu0 0.0
  %2065 = vmatprep.subr.mxu0 0.0
  %2066 = vmatpush1.msra.mxu0 0.0
  %2067 = vmatprep.subr.mxu0 0.0
  %2068 = vmatpush1.msra.mxu0 0.0
  %2069 = vmatprep.subr.mxu0 0.0
  %2070 = vmatpush1.msra.mxu0 0.0
  %2071 = vmatprep.mubr.f32.mxu0 0.0
  %2072 = vmatmul.mubr.f32.gmra.mrb[0].mxu0 %v2000
  %v2073 = vpop.f32.mrb[0].mxu0
  %v2074 = vadd.f32 %v1605, %v2073
  %v2075 = vpop.f32.mrb[0].mxu0
  %v2076 = vadd.f32 %v1609, %v2075
  %2077 = vdwg.mxu0
  %2078 = vmatprep.subr.mxu0 0.0
  %2079 = vmatpush1.msra.mxu0 %v1625
  %2080 = vmatprep.subr.mxu0 0.0
  %2081 = vmatpush1.msra.mxu0 %v1628
  %2082 = vmatprep.subr.mxu0 0.0
  %2083 = vmatpush1.msra.mxu0 %v1631
  %2084 = vmatprep.subr.mxu0 0.0
  %2085 = vmatpush1.msra.mxu0 %v1634
  %2086 = vmatprep.subr.mxu0 0.0
  %2087 = vmatpush1.msra.mxu0 %v1637
  %2088 = vmatprep.subr.mxu0 0.0
  %2089 = vmatpush1.msra.mxu0 %v1640
  %2090 = vmatprep.subr.mxu0 0.0
  %2091 = vmatpush1.msra.mxu0 %v1643
  %2092 = vmatprep.subr.mxu0 0.0
  %2093 = vmatpush1.msra.mxu0 %v1646
  %2094 = vmatprep.subr.mxu0 0.0
  %2095 = vmatpush1.msra.mxu0 %v1649
  %2096 = vmatprep.subr.mxu0 0.0
  %2097 = vmatpush1.msra.mxu0 %v1652
  %2098 = vmatprep.subr.mxu0 0.0
  %2099 = vmatpush1.msra.mxu0 %v1655
  %2100 = vmatprep.subr.mxu0 0.0
  %2101 = vmatpush1.msra.mxu0 %v1658
  %2102 = vmatprep.subr.mxu0 0.0
  %2103 = vmatpush1.msra.mxu0 %v1661
  %2104 = vmatprep.subr.mxu0 0.0
  %2105 = vmatpush1.msra.mxu0 %v1664
  %2106 = vmatprep.subr.mxu0 0.0
  %2107 = vmatpush1.msra.mxu0 %v1667
  %2108 = vmatprep.subr.mxu0 0.0
  %2109 = vmatpush1.msra.mxu0 %v1670
  %2110 = vmatprep.subr.mxu0 0.0
  %2111 = vmatpush1.msra.mxu0 0.0
  %2112 = vmatprep.subr.mxu0 0.0
  %2113 = vmatpush1.msra.mxu0 0.0
  %2114 = vmatprep.subr.mxu0 0.0
  %2115 = vmatpush1.msra.mxu0 0.0
  %2116 = vmatprep.subr.mxu0 0.0
  %2117 = vmatpush1.msra.mxu0 0.0
  %2118 = vmatprep.subr.mxu0 0.0
  %2119 = vmatpush1.msra.mxu0 0.0
  %2120 = vmatprep.subr.mxu0 0.0
  %2121 = vmatpush1.msra.mxu0 0.0
  %2122 = vmatprep.subr.mxu0 0.0
  %2123 = vmatpush1.msra.mxu0 0.0
  %2124 = vmatprep.subr.mxu0 0.0
  %2125 = vmatpush1.msra.mxu0 0.0
  %2126 = vmatprep.subr.mxu0 0.0
  %2127 = vmatpush1.msra.mxu0 0.0
  %2128 = vmatprep.subr.mxu0 0.0
  %2129 = vmatpush1.msra.mxu0 0.0
  %2130 = vmatprep.subr.mxu0 0.0
  %2131 = vmatpush1.msra.mxu0 0.0
  %2132 = vmatprep.subr.mxu0 0.0
  %2133 = vmatpush1.msra.mxu0 0.0
  %2134 = vmatprep.subr.mxu0 0.0
  %2135 = vmatpush1.msra.mxu0 0.0
  %2136 = vmatprep.subr.mxu0 0.0
  %2137 = vmatpush1.msra.mxu0 0.0
  %2138 = vmatprep.subr.mxu0 0.0
  %2139 = vmatpush1.msra.mxu0 0.0
  %2140 = vmatprep.subr.mxu0 0.0
  %2141 = vmatpush1.msra.mxu0 0.0
  %2142 = vmatprep.mubr.f32.mxu0 0.0
  %2143 = vmatmul.mubr.f32.gmra.mrb[0].mxu0 %v2000
  %v2144 = vpop.f32.mrb[0].mxu0
  %v2145 = vadd.f32 %v1613, %v2144
  %v2146 = vpop.f32.mrb[0].mxu0
  %2147 = vdwg.mxu0
  %v2148 = vadd.f32 %v2004, %v2074
  %v2149 = vxor.u32 %v2148, 2147483648
  %v2150 = vmul.f32 %v2149, 1.442695
  %v2151 = vpow.pop %v2150
  %v2152 = vadd.f32 %v2151, 1.0
  %v2153 = vrcp.pop %v2152
  %v2154 = vmul.f32 1.0, %v2153
  %v2155 = vadd.f32 %v2005, %v2076
  %v2156 = vxor.u32 %v2155, 2147483648
  %v2157 = vmul.f32 %v2156, 1.442695
  %v2158 = vpow.pop %v2157
  %v2159 = vadd.f32 %v2158, 1.0
  %v2160 = vrcp.pop %v2159
  %v2161 = vmul.f32 1.0, %v2160
  %v2162 = vmul.f32 %v2154, %v2145
  %v2163 = vadd.f32 %v2006, %v2162
  %v2164 = vtanh.pop %v2163
  %v2165 = vsub.f32 1.0, %v2161
  %v2166 = vmul.f32 %v2165, %v2164
  %v2167 = vmul.f32 %v2161, %v2000
  %v2168 = vadd.f32 %v2166, %v2167
  %s2169 = smul.u32 3, 3
  %s2170 = smul.addr %s2169, 8
  %s2171 = scalar_lea.vmem [#allocation2], %s2170
  %v2172 = vld [vmem:[%s2171] sm:$0xff]
  %v2173 = vld [vmem:[%s2171 + $0x8] sm:$0xff]
  %v2174 = vld [vmem:[%s2171 + $0x10] sm:$0xff]
  %2175 = vmatprep.subr.mxu0 %v1624
  %2176 = vmatpush1.msra.mxu0 %v1623
  %2177 = vmatprep.subr.mxu0 %v1627
  %2178 = vmatpush1.msra.mxu0 %v1626
  %2179 = vmatprep.subr.mxu0 %v1630
  %2180 = vmatpush1.msra.mxu0 %v1629
  %2181 = vmatprep.subr.mxu0 %v1633
  %2182 = vmatpush1.msra.mxu0 %v1632
  %2183 = vmatprep.subr.mxu0 %v1636
  %2184 = vmatpush1.msra.mxu0 %v1635
  %2185 = vmatprep.subr.mxu0 %v1639
  %2186 = vmatpush1.msra.mxu0 %v1638
  %2187 = vmatprep.subr.mxu0 %v1642
  %2188 = vmatpush1.msra.mxu0 %v1641
  %2189 = vmatprep.subr.mxu0 %v1645
  %2190 = vmatpush1.msra.mxu0 %v1644
  %2191 = vmatprep.subr.mxu0 %v1648
  %2192 = vmatpush1.msra.mxu0 %v1647
  %2193 = vmatprep.subr.mxu0 %v1651
  %2194 = vmatpush1.msra.mxu0 %v1650
  %2195 = vmatprep.subr.mxu0 %v1654
  %2196 = vmatpush1.msra.mxu0 %v1653
  %2197 = vmatprep.subr.mxu0 %v1657
  %2198 = vmatpush1.msra.mxu0 %v1656
  %2199 = vmatprep.subr.mxu0 %v1660
  %2200 = vmatpush1.msra.mxu0 %v1659
  %2201 = vmatprep.subr.mxu0 %v1663
  %2202 = vmatpush1.msra.mxu0 %v1662
  %2203 = vmatprep.subr.mxu0 %v1666
  %2204 = vmatpush1.msra.mxu0 %v1665
  %2205 = vmatprep.subr.mxu0 %v1669
  %2206 = vmatpush1.msra.mxu0 %v1668
  %2207 = vmatprep.subr.mxu0 0.0
  %2208 = vmatpush1.msra.mxu0 0.0
  %2209 = vmatprep.subr.mxu0 0.0
  %2210 = vmatpush1.msra.mxu0 0.0
  %2211 = vmatprep.subr.mxu0 0.0
  %2212 = vmatpush1.msra.mxu0 0.0
  %2213 = vmatprep.subr.mxu0 0.0
  %2214 = vmatpush1.msra.mxu0 0.0
  %2215 = vmatprep.subr.mxu0 0.0
  %2216 = vmatpush1.msra.mxu0 0.0
  %2217 = vmatprep.subr.mxu0 0.0
  %2218 = vmatpush1.msra.mxu0 0.0
  %2219 = vmatprep.subr.mxu0 0.0
  %2220 = vmatpush1.msra.mxu0 0.0
  %2221 = vmatprep.subr.mxu0 0.0
  %2222 = vmatpush1.msra.mxu0 0.0
  %2223 = vmatprep.subr.mxu0 0.0
  %2224 = vmatpush1.msra.mxu0 0.0
  %2225 = vmatprep.subr.mxu0 0.0
  %2226 = vmatpush1.msra.mxu0 0.0
  %2227 = vmatprep.subr.mxu0 0.0
  %2228 = vmatpush1.msra.mxu0 0.0
  %2229 = vmatprep.subr.mxu0 0.0
  %2230 = vmatpush1.msra.mxu0 0.0
  %2231 = vmatprep.subr.mxu0 0.0
  %2232 = vmatpush1.msra.mxu0 0.0
  %2233 = vmatprep.subr.mxu0 0.0
  %2234 = vmatpush1.msra.mxu0 0.0
  %2235 = vmatprep.subr.mxu0 0.0
  %2236 = vmatpush1.msra.mxu0 0.0
  %2237 = vmatprep.subr.mxu0 0.0
  %2238 = vmatpush1.msra.mxu0 0.0
  %2239 = vmatprep.mubr.f32.mxu0 0.0
  %2240 = vmatmul.mubr.f32.gmra.mrb[0].mxu0 %v2168
  %v2241 = vpop.f32.mrb[0].mxu0
  %v2242 = vadd.f32 %v1605, %v2241
  %v2243 = vpop.f32.mrb[0].mxu0
  %v2244 = vadd.f32 %v1609, %v2243
  %2245 = vdwg.mxu0
  %2246 = vmatprep.subr.mxu0 0.0
  %2247 = vmatpush1.msra.mxu0 %v1625
  %2248 = vmatprep.subr.mxu0 0.0
  %2249 = vmatpush1.msra.mxu0 %v1628
  %2250 = vmatprep.subr.mxu0 0.0
  %2251 = vmatpush1.msra.mxu0 %v1631
  %2252 = vmatprep.subr.mxu0 0.0
  %2253 = vmatpush1.msra.mxu0 %v1634
  %2254 = vmatprep.subr.mxu0 0.0
  %2255 = vmatpush1.msra.mxu0 %v1637
  %2256 = vmatprep.subr.mxu0 0.0
  %2257 = vmatpush1.msra.mxu0 %v1640
  %2258 = vmatprep.subr.mxu0 0.0
  %2259 = vmatpush1.msra.mxu0 %v1643
  %2260 = vmatprep.subr.mxu0 0.0
  %2261 = vmatpush1.msra.mxu0 %v1646
  %2262 = vmatprep.subr.mxu0 0.0
  %2263 = vmatpush1.msra.mxu0 %v1649
  %2264 = vmatprep.subr.mxu0 0.0
  %2265 = vmatpush1.msra.mxu0 %v1652
  %2266 = vmatprep.subr.mxu0 0.0
  %2267 = vmatpush1.msra.mxu0 %v1655
  %2268 = vmatprep.subr.mxu0 0.0
  %2269 = vmatpush1.msra.mxu0 %v1658
  %2270 = vmatprep.subr.mxu0 0.0
  %2271 = vmatpush1.msra.mxu0 %v1661
  %2272 = vmatprep.subr.mxu0 0.0
  %2273 = vmatpush1.msra.mxu0 %v1664
  %2274 = vmatprep.subr.mxu0 0.0
  %2275 = vmatpush1.msra.mxu0 %v1667
  %2276 = vmatprep.subr.mxu0 0.0
  %2277 = vmatpush1.msra.mxu0 %v1670
  %2278 = vmatprep.subr.mxu0 0.0
  %2279 = vmatpush1.msra.mxu0 0.0
  %2280 = vmatprep.subr.mxu0 0.0
  %2281 = vmatpush1.msra.mxu0 0.0
  %2282 = vmatprep.subr.mxu0 0.0
  %2283 = vmatpush1.msra.mxu0 0.0
  %2284 = vmatprep.subr.mxu0 0.0
  %2285 = vmatpush1.msra.mxu0 0.0
  %2286 = vmatprep.subr.mxu0 0.0
  %2287 = vmatpush1.msra.mxu0 0.0
  %2288 = vmatprep.subr.mxu0 0.0
  %2289 = vmatpush1.msra.mxu0 0.0
  %2290 = vmatprep.subr.mxu0 0.0
  %2291 = vmatpush1.msra.mxu0 0.0
  %2292 = vmatprep.subr.mxu0 0.0
  %2293 = vmatpush1.msra.mxu0 0.0
  %2294 = vmatprep.subr.mxu0 0.0
  %2295 = vmatpush1.msra.mxu0 0.0
  %2296 = vmatprep.subr.mxu0 0.0
  %2297 = vmatpush1.msra.mxu0 0.0
  %2298 = vmatprep.subr.mxu0 0.0
  %2299 = vmatpush1.msra.mxu0 0.0
  %2300 = vmatprep.subr.mxu0 0.0
  %2301 = vmatpush1.msra.mxu0 0.0
  %2302 = vmatprep.subr.mxu0 0.0
  %2303 = vmatpush1.msra.mxu0 0.0
  %2304 = vmatprep.subr.mxu0 0.0
  %2305 = vmatpush1.msra.mxu0 0.0
  %2306 = vmatprep.subr.mxu0 0.0
  %2307 = vmatpush1.msra.mxu0 0.0
  %2308 = vmatprep.subr.mxu0 0.0
  %2309 = vmatpush1.msra.mxu0 0.0
  %2310 = vmatprep.mubr.f32.mxu0 0.0
  %2311 = vmatmul.mubr.f32.gmra.mrb[0].mxu0 %v2168
  %v2312 = vpop.f32.mrb[0].mxu0
  %v2313 = vadd.f32 %v1613, %v2312
  %v2314 = vpop.f32.mrb[0].mxu0
  %2315 = vdwg.mxu0
  %v2316 = vadd.f32 %v2172, %v2242
  %v2317 = vxor.u32 %v2316, 2147483648
  %v2318 = vmul.f32 %v2317, 1.442695
  %v2319 = vpow.pop %v2318
  %v2320 = vadd.f32 %v2319, 1.0
  %v2321 = vrcp.pop %v2320
  %v2322 = vmul.f32 1.0, %v2321
  %v2323 = vadd.f32 %v2173, %v2244
  %v2324 = vxor.u32 %v2323, 2147483648
  %v2325 = vmul.f32 %v2324, 1.442695
  %v2326 = vpow.pop %v2325
  %v2327 = vadd.f32 %v2326, 1.0
  %v2328 = vrcp.pop %v2327
  %v2329 = vmul.f32 1.0, %v2328
  %v2330 = vmul.f32 %v2322, %v2313
  %v2331 = vadd.f32 %v2174, %v2330
  %v2332 = vtanh.pop %v2331
  %v2333 = vsub.f32 1.0, %v2329
  %v2334 = vmul.f32 %v2333, %v2332
  %v2335 = vmul.f32 %v2329, %v2168
  %v2336 = vadd.f32 %v2334, %v2335
  %s2337 = smul.u32 4, 3
  %s2338 = smul.addr %s2337, 8
  %s2339 = scalar_lea.vmem [#allocation2], %s2338
  %v2340 = vld [vmem:[%s2339] sm:$0xff]
  %v2341 = vld [vmem:[%s2339 + $0x8] sm:$0xff]
  %v2342 = vld [vmem:[%s2339 + $0x10] sm:$0xff]
  %2343 = vmatprep.subr.mxu0 %v1624
  %2344 = vmatpush1.msra.mxu0 %v1623
  %2345 = vmatprep.subr.mxu0 %v1627
  %2346 = vmatpush1.msra.mxu0 %v1626
  %2347 = vmatprep.subr.mxu0 %v1630
  %2348 = vmatpush1.msra.mxu0 %v1629
  %2349 = vmatprep.subr.mxu0 %v1633
  %2350 = vmatpush1.msra.mxu0 %v1632
  %2351 = vmatprep.subr.mxu0 %v1636
  %2352 = vmatpush1.msra.mxu0 %v1635
  %2353 = vmatprep.subr.mxu0 %v1639
  %2354 = vmatpush1.msra.mxu0 %v1638
  %2355 = vmatprep.subr.mxu0 %v1642
  %2356 = vmatpush1.msra.mxu0 %v1641
  %2357 = vmatprep.subr.mxu0 %v1645
  %2358 = vmatpush1.msra.mxu0 %v1644
  %2359 = vmatprep.subr.mxu0 %v1648
  %2360 = vmatpush1.msra.mxu0 %v1647
  %2361 = vmatprep.subr.mxu0 %v1651
  %2362 = vmatpush1.msra.mxu0 %v1650
  %2363 = vmatprep.subr.mxu0 %v1654
  %2364 = vmatpush1.msra.mxu0 %v1653
  %2365 = vmatprep.subr.mxu0 %v1657
  %2366 = vmatpush1.msra.mxu0 %v1656
  %2367 = vmatprep.subr.mxu0 %v1660
  %2368 = vmatpush1.msra.mxu0 %v1659
  %2369 = vmatprep.subr.mxu0 %v1663
  %2370 = vmatpush1.msra.mxu0 %v1662
  %2371 = vmatprep.subr.mxu0 %v1666
  %2372 = vmatpush1.msra.mxu0 %v1665
  %2373 = vmatprep.subr.mxu0 %v1669
  %2374 = vmatpush1.msra.mxu0 %v1668
  %2375 = vmatprep.subr.mxu0 0.0
  %2376 = vmatpush1.msra.mxu0 0.0
  %2377 = vmatprep.subr.mxu0 0.0
  %2378 = vmatpush1.msra.mxu0 0.0
  %2379 = vmatprep.subr.mxu0 0.0
  %2380 = vmatpush1.msra.mxu0 0.0
  %2381 = vmatprep.subr.mxu0 0.0
  %2382 = vmatpush1.msra.mxu0 0.0
  %2383 = vmatprep.subr.mxu0 0.0
  %2384 = vmatpush1.msra.mxu0 0.0
  %2385 = vmatprep.subr.mxu0 0.0
  %2386 = vmatpush1.msra.mxu0 0.0
  %2387 = vmatprep.subr.mxu0 0.0
  %2388 = vmatpush1.msra.mxu0 0.0
  %2389 = vmatprep.subr.mxu0 0.0
  %2390 = vmatpush1.msra.mxu0 0.0
  %2391 = vmatprep.subr.mxu0 0.0
  %2392 = vmatpush1.msra.mxu0 0.0
  %2393 = vmatprep.subr.mxu0 0.0
  %2394 = vmatpush1.msra.mxu0 0.0
  %2395 = vmatprep.subr.mxu0 0.0
  %2396 = vmatpush1.msra.mxu0 0.0
  %2397 = vmatprep.subr.mxu0 0.0
  %2398 = vmatpush1.msra.mxu0 0.0
  %2399 = vmatprep.subr.mxu0 0.0
  %2400 = vmatpush1.msra.mxu0 0.0
  %2401 = vmatprep.subr.mxu0 0.0
  %2402 = vmatpush1.msra.mxu0 0.0
  %2403 = vmatprep.subr.mxu0 0.0
  %2404 = vmatpush1.msra.mxu0 0.0
  %2405 = vmatprep.subr.mxu0 0.0
  %2406 = vmatpush1.msra.mxu0 0.0
  %2407 = vmatprep.mubr.f32.mxu0 0.0
  %2408 = vmatmul.mubr.f32.gmra.mrb[0].mxu0 %v2336
  %v2409 = vpop.f32.mrb[0].mxu0
  %v2410 = vadd.f32 %v1605, %v2409
  %v2411 = vpop.f32.mrb[0].mxu0
  %v2412 = vadd.f32 %v1609, %v2411
  %2413 = vdwg.mxu0
  %2414 = vmatprep.subr.mxu0 0.0
  %2415 = vmatpush1.msra.mxu0 %v1625
  %2416 = vmatprep.subr.mxu0 0.0
  %2417 = vmatpush1.msra.mxu0 %v1628
  %2418 = vmatprep.subr.mxu0 0.0
  %2419 = vmatpush1.msra.mxu0 %v1631
  %2420 = vmatprep.subr.mxu0 0.0
  %2421 = vmatpush1.msra.mxu0 %v1634
  %2422 = vmatprep.subr.mxu0 0.0
  %2423 = vmatpush1.msra.mxu0 %v1637
  %2424 = vmatprep.subr.mxu0 0.0
  %2425 = vmatpush1.msra.mxu0 %v1640
  %2426 = vmatprep.subr.mxu0 0.0
  %2427 = vmatpush1.msra.mxu0 %v1643
  %2428 = vmatprep.subr.mxu0 0.0
  %2429 = vmatpush1.msra.mxu0 %v1646
  %2430 = vmatprep.subr.mxu0 0.0
  %2431 = vmatpush1.msra.mxu0 %v1649
  %2432 = vmatprep.subr.mxu0 0.0
  %2433 = vmatpush1.msra.mxu0 %v1652
  %2434 = vmatprep.subr.mxu0 0.0
  %2435 = vmatpush1.msra.mxu0 %v1655
  %2436 = vmatprep.subr.mxu0 0.0
  %2437 = vmatpush1.msra.mxu0 %v1658
  %2438 = vmatprep.subr.mxu0 0.0
  %2439 = vmatpush1.msra.mxu0 %v1661
  %2440 = vmatprep.subr.mxu0 0.0
  %2441 = vmatpush1.msra.mxu0 %v1664
  %2442 = vmatprep.subr.mxu0 0.0
  %2443 = vmatpush1.msra.mxu0 %v1667
  %2444 = vmatprep.subr.mxu0 0.0
  %2445 = vmatpush1.msra.mxu0 %v1670
  %2446 = vmatprep.subr.mxu0 0.0
  %2447 = vmatpush1.msra.mxu0 0.0
  %2448 = vmatprep.subr.mxu0 0.0
  %2449 = vmatpush1.msra.mxu0 0.0
  %2450 = vmatprep.subr.mxu0 0.0
  %2451 = vmatpush1.msra.mxu0 0.0
  %2452 = vmatprep.subr.mxu0 0.0
  %2453 = vmatpush1.msra.mxu0 0.0
  %2454 = vmatprep.subr.mxu0 0.0
  %2455 = vmatpush1.msra.mxu0 0.0
  %2456 = vmatprep.subr.mxu0 0.0
  %2457 = vmatpush1.msra.mxu0 0.0
  %2458 = vmatprep.subr.mxu0 0.0
  %2459 = vmatpush1.msra.mxu0 0.0
  %2460 = vmatprep.subr.mxu0 0.0
  %2461 = vmatpush1.msra.mxu0 0.0
  %2462 = vmatprep.subr.mxu0 0.0
  %2463 = vmatpush1.msra.mxu0 0.0
  %2464 = vmatprep.subr.mxu0 0.0
  %2465 = vmatpush1.msra.mxu0 0.0
  %2466 = vmatprep.subr.mxu0 0.0
  %2467 = vmatpush1.msra.mxu0 0.0
  %2468 = vmatprep.subr.mxu0 0.0
  %2469 = vmatpush1.msra.mxu0 0.0
  %2470 = vmatprep.subr.mxu0 0.0
  %2471 = vmatpush1.msra.mxu0 0.0
  %2472 = vmatprep.subr.mxu0 0.0
  %2473 = vmatpush1.msra.mxu0 0.0
  %2474 = vmatprep.subr.mxu0 0.0
  %2475 = vmatpush1.msra.mxu0 0.0
  %2476 = vmatprep.subr.mxu0 0.0
  %2477 = vmatpush1.msra.mxu0 0.0
  %2478 = vmatprep.mubr.f32.mxu0 0.0
  %2479 = vmatmul.mubr.f32.gmra.mrb[0].mxu0 %v2336
  %v2480 = vpop.f32.mrb[0].mxu0
  %v2481 = vadd.f32 %v1613, %v2480
  %v2482 = vpop.f32.mrb[0].mxu0
  %2483 = vdwg.mxu0
  %v2484 = vadd.f32 %v2340, %v2410
  %v2485 = vxor.u32 %v2484, 2147483648
  %v2486 = vmul.f32 %v2485, 1.442695
  %v2487 = vpow.pop %v2486
  %v2488 = vadd.f32 %v2487, 1.0
  %v2489 = vrcp.pop %v2488
  %v2490 = vmul.f32 1.0, %v2489
  %v2491 = vadd.f32 %v2341, %v2412
  %v2492 = vxor.u32 %v2491, 2147483648
  %v2493 = vmul.f32 %v2492, 1.442695
  %v2494 = vpow.pop %v2493
  %v2495 = vadd.f32 %v2494, 1.0
  %v2496 = vrcp.pop %v2495
  %v2497 = vmul.f32 1.0, %v2496
  %v2498 = vmul.f32 %v2490, %v2481
  %v2499 = vadd.f32 %v2342, %v2498
  %v2500 = vtanh.pop %v2499
  %v2501 = vsub.f32 1.0, %v2497
  %v2502 = vmul.f32 %v2501, %v2500
  %v2503 = vmul.f32 %v2497, %v2336
  %v2504 = vadd.f32 %v2502, %v2503
  %s2505 = smul.u32 5, 3
  %s2506 = smul.addr %s2505, 8
  %s2507 = scalar_lea.vmem [#allocation2], %s2506
  %v2508 = vld [vmem:[%s2507] sm:$0xff]
  %v2509 = vld [vmem:[%s2507 + $0x8] sm:$0xff]
  %v2510 = vld [vmem:[%s2507 + $0x10] sm:$0xff]
  %2511 = vmatprep.subr.mxu0 %v1624
  %2512 = vmatpush1.msra.mxu0 %v1623
  %2513 = vmatprep.subr.mxu0 %v1627
  %2514 = vmatpush1.msra.mxu0 %v1626
  %2515 = vmatprep.subr.mxu0 %v1630
  %2516 = vmatpush1.msra.mxu0 %v1629
  %2517 = vmatprep.subr.mxu0 %v1633
  %2518 = vmatpush1.msra.mxu0 %v1632
  %2519 = vmatprep.subr.mxu0 %v1636
  %2520 = vmatpush1.msra.mxu0 %v1635
  %2521 = vmatprep.subr.mxu0 %v1639
  %2522 = vmatpush1.msra.mxu0 %v1638
  %2523 = vmatprep.subr.mxu0 %v1642
  %2524 = vmatpush1.msra.mxu0 %v1641
  %2525 = vmatprep.subr.mxu0 %v1645
  %2526 = vmatpush1.msra.mxu0 %v1644
  %2527 = vmatprep.subr.mxu0 %v1648
  %2528 = vmatpush1.msra.mxu0 %v1647
  %2529 = vmatprep.subr.mxu0 %v1651
  %2530 = vmatpush1.msra.mxu0 %v1650
  %2531 = vmatprep.subr.mxu0 %v1654
  %2532 = vmatpush1.msra.mxu0 %v1653
  %2533 = vmatprep.subr.mxu0 %v1657
  %2534 = vmatpush1.msra.mxu0 %v1656
  %2535 = vmatprep.subr.mxu0 %v1660
  %2536 = vmatpush1.msra.mxu0 %v1659
  %2537 = vmatprep.subr.mxu0 %v1663
  %2538 = vmatpush1.msra.mxu0 %v1662
  %2539 = vmatprep.subr.mxu0 %v1666
  %2540 = vmatpush1.msra.mxu0 %v1665
  %2541 = vmatprep.subr.mxu0 %v1669
  %2542 = vmatpush1.msra.mxu0 %v1668
  %2543 = vmatprep.subr.mxu0 0.0
  %2544 = vmatpush1.msra.mxu0 0.0
  %2545 = vmatprep.subr.mxu0 0.0
  %2546 = vmatpush1.msra.mxu0 0.0
  %2547 = vmatprep.subr.mxu0 0.0
  %2548 = vmatpush1.msra.mxu0 0.0
  %2549 = vmatprep.subr.mxu0 0.0
  %2550 = vmatpush1.msra.mxu0 0.0
  %2551 = vmatprep.subr.mxu0 0.0
  %2552 = vmatpush1.msra.mxu0 0.0
  %2553 = vmatprep.subr.mxu0 0.0
  %2554 = vmatpush1.msra.mxu0 0.0
  %2555 = vmatprep.subr.mxu0 0.0
  %2556 = vmatpush1.msra.mxu0 0.0
  %2557 = vmatprep.subr.mxu0 0.0
  %2558 = vmatpush1.msra.mxu0 0.0
  %2559 = vmatprep.subr.mxu0 0.0
  %2560 = vmatpush1.msra.mxu0 0.0
  %2561 = vmatprep.subr.mxu0 0.0
  %2562 = vmatpush1.msra.mxu0 0.0
  %2563 = vmatprep.subr.mxu0 0.0
  %2564 = vmatpush1.msra.mxu0 0.0
  %2565 = vmatprep.subr.mxu0 0.0
  %2566 = vmatpush1.msra.mxu0 0.0
  %2567 = vmatprep.subr.mxu0 0.0
  %2568 = vmatpush1.msra.mxu0 0.0
  %2569 = vmatprep.subr.mxu0 0.0
  %2570 = vmatpush1.msra.mxu0 0.0
  %2571 = vmatprep.subr.mxu0 0.0
  %2572 = vmatpush1.msra.mxu0 0.0
  %2573 = vmatprep.subr.mxu0 0.0
  %2574 = vmatpush1.msra.mxu0 0.0
  %2575 = vmatprep.mubr.f32.mxu0 0.0
  %2576 = vmatmul.mubr.f32.gmra.mrb[0].mxu0 %v2504
  %v2577 = vpop.f32.mrb[0].mxu0
  %v2578 = vadd.f32 %v1605, %v2577
  %v2579 = vpop.f32.mrb[0].mxu0
  %v2580 = vadd.f32 %v1609, %v2579
  %2581 = vdwg.mxu0
  %2582 = vmatprep.subr.mxu0 0.0
  %2583 = vmatpush1.msra.mxu0 %v1625
  %2584 = vmatprep.subr.mxu0 0.0
  %2585 = vmatpush1.msra.mxu0 %v1628
  %2586 = vmatprep.subr.mxu0 0.0
  %2587 = vmatpush1.msra.mxu0 %v1631
  %2588 = vmatprep.subr.mxu0 0.0
  %2589 = vmatpush1.msra.mxu0 %v1634
  %2590 = vmatprep.subr.mxu0 0.0
  %2591 = vmatpush1.msra.mxu0 %v1637
  %2592 = vmatprep.subr.mxu0 0.0
  %2593 = vmatpush1.msra.mxu0 %v1640
  %2594 = vmatprep.subr.mxu0 0.0
  %2595 = vmatpush1.msra.mxu0 %v1643
  %2596 = vmatprep.subr.mxu0 0.0
  %2597 = vmatpush1.msra.mxu0 %v1646
  %2598 = vmatprep.subr.mxu0 0.0
  %2599 = vmatpush1.msra.mxu0 %v1649
  %2600 = vmatprep.subr.mxu0 0.0
  %2601 = vmatpush1.msra.mxu0 %v1652
  %2602 = vmatprep.subr.mxu0 0.0
  %2603 = vmatpush1.msra.mxu0 %v1655
  %2604 = vmatprep.subr.mxu0 0.0
  %2605 = vmatpush1.msra.mxu0 %v1658
  %2606 = vmatprep.subr.mxu0 0.0
  %2607 = vmatpush1.msra.mxu0 %v1661
  %2608 = vmatprep.subr.mxu0 0.0
  %2609 = vmatpush1.msra.mxu0 %v1664
  %2610 = vmatprep.subr.mxu0 0.0
  %2611 = vmatpush1.msra.mxu0 %v1667
  %2612 = vmatprep.subr.mxu0 0.0
  %2613 = vmatpush1.msra.mxu0 %v1670
  %2614 = vmatprep.subr.mxu0 0.0
  %2615 = vmatpush1.msra.mxu0 0.0
  %2616 = vmatprep.subr.mxu0 0.0
  %2617 = vmatpush1.msra.mxu0 0.0
  %2618 = vmatprep.subr.mxu0 0.0
  %2619 = vmatpush1.msra.mxu0 0.0
  %2620 = vmatprep.subr.mxu0 0.0
  %2621 = vmatpush1.msra.mxu0 0.0
  %2622 = vmatprep.subr.mxu0 0.0
  %2623 = vmatpush1.msra.mxu0 0.0
  %2624 = vmatprep.subr.mxu0 0.0
  %2625 = vmatpush1.msra.mxu0 0.0
  %2626 = vmatprep.subr.mxu0 0.0
  %2627 = vmatpush1.msra.mxu0 0.0
  %2628 = vmatprep.subr.mxu0 0.0
  %2629 = vmatpush1.msra.mxu0 0.0
  %2630 = vmatprep.subr.mxu0 0.0
  %2631 = vmatpush1.msra.mxu0 0.0
  %2632 = vmatprep.subr.mxu0 0.0
  %2633 = vmatpush1.msra.mxu0 0.0
  %2634 = vmatprep.subr.mxu0 0.0
  %2635 = vmatpush1.msra.mxu0 0.0
  %2636 = vmatprep.subr.mxu0 0.0
  %2637 = vmatpush1.msra.mxu0 0.0
  %2638 = vmatprep.subr.mxu0 0.0
  %2639 = vmatpush1.msra.mxu0 0.0
  %2640 = vmatprep.subr.mxu0 0.0
  %2641 = vmatpush1.msra.mxu0 0.0
  %2642 = vmatprep.subr.mxu0 0.0
  %2643 = vmatpush1.msra.mxu0 0.0
  %2644 = vmatprep.subr.mxu0 0.0
  %2645 = vmatpush1.msra.mxu0 0.0
  %2646 = vmatprep.mubr.f32.mxu0 0.0
  %2647 = vmatmul.mubr.f32.gmra.mrb[0].mxu0 %v2504
  %v2648 = vpop.f32.mrb[0].mxu0
  %v2649 = vadd.f32 %v1613, %v2648
  %v2650 = vpop.f32.mrb[0].mxu0
  %2651 = vdwg.mxu0
  %v2652 = vadd.f32 %v2508, %v2578
  %v2653 = vxor.u32 %v2652, 2147483648
  %v2654 = vmul.f32 %v2653, 1.442695
  %v2655 = vpow.pop %v2654
  %v2656 = vadd.f32 %v2655, 1.0
  %v2657 = vrcp.pop %v2656
  %v2658 = vmul.f32 1.0, %v2657
  %v2659 = vadd.f32 %v2509, %v2580
  %v2660 = vxor.u32 %v2659, 2147483648
  %v2661 = vmul.f32 %v2660, 1.442695
  %v2662 = vpow.pop %v2661
  %v2663 = vadd.f32 %v2662, 1.0
  %v2664 = vrcp.pop %v2663
  %v2665 = vmul.f32 1.0, %v2664
  %v2666 = vmul.f32 %v2658, %v2649
  %v2667 = vadd.f32 %v2510, %v2666
  %v2668 = vtanh.pop %v2667
  %v2669 = vsub.f32 1.0, %v2665
  %v2670 = vmul.f32 %v2669, %v2668
  %v2671 = vmul.f32 %v2665, %v2504
  %v2672 = vadd.f32 %v2670, %v2671
  %s2673 = smul.u32 6, 3
  %s2674 = smul.addr %s2673, 8
  %s2675 = scalar_lea.vmem [#allocation2], %s2674
  %v2676 = vld [vmem:[%s2675] sm:$0xff]
  %v2677 = vld [vmem:[%s2675 + $0x8] sm:$0xff]
  %v2678 = vld [vmem:[%s2675 + $0x10] sm:$0xff]
  %2679 = vmatprep.subr.mxu0 %v1624
  %2680 = vmatpush1.msra.mxu0 %v1623
  %2681 = vmatprep.subr.mxu0 %v1627
  %2682 = vmatpush1.msra.mxu0 %v1626
  %2683 = vmatprep.subr.mxu0 %v1630
  %2684 = vmatpush1.msra.mxu0 %v1629
  %2685 = vmatprep.subr.mxu0 %v1633
  %2686 = vmatpush1.msra.mxu0 %v1632
  %2687 = vmatprep.subr.mxu0 %v1636
  %2688 = vmatpush1.msra.mxu0 %v1635
  %2689 = vmatprep.subr.mxu0 %v1639
  %2690 = vmatpush1.msra.mxu0 %v1638
  %2691 = vmatprep.subr.mxu0 %v1642
  %2692 = vmatpush1.msra.mxu0 %v1641
  %2693 = vmatprep.subr.mxu0 %v1645
  %2694 = vmatpush1.msra.mxu0 %v1644
  %2695 = vmatprep.subr.mxu0 %v1648
  %2696 = vmatpush1.msra.mxu0 %v1647
  %2697 = vmatprep.subr.mxu0 %v1651
  %2698 = vmatpush1.msra.mxu0 %v1650
  %2699 = vmatprep.subr.mxu0 %v1654
  %2700 = vmatpush1.msra.mxu0 %v1653
  %2701 = vmatprep.subr.mxu0 %v1657
  %2702 = vmatpush1.msra.mxu0 %v1656
  %2703 = vmatprep.subr.mxu0 %v1660
  %2704 = vmatpush1.msra.mxu0 %v1659
  %2705 = vmatprep.subr.mxu0 %v1663
  %2706 = vmatpush1.msra.mxu0 %v1662
  %2707 = vmatprep.subr.mxu0 %v1666
  %2708 = vmatpush1.msra.mxu0 %v1665
  %2709 = vmatprep.subr.mxu0 %v1669
  %2710 = vmatpush1.msra.mxu0 %v1668
  %2711 = vmatprep.subr.mxu0 0.0
  %2712 = vmatpush1.msra.mxu0 0.0
  %2713 = vmatprep.subr.mxu0 0.0
  %2714 = vmatpush1.msra.mxu0 0.0
  %2715 = vmatprep.subr.mxu0 0.0
  %2716 = vmatpush1.msra.mxu0 0.0
  %2717 = vmatprep.subr.mxu0 0.0
  %2718 = vmatpush1.msra.mxu0 0.0
  %2719 = vmatprep.subr.mxu0 0.0
  %2720 = vmatpush1.msra.mxu0 0.0
  %2721 = vmatprep.subr.mxu0 0.0
  %2722 = vmatpush1.msra.mxu0 0.0
  %2723 = vmatprep.subr.mxu0 0.0
  %2724 = vmatpush1.msra.mxu0 0.0
  %2725 = vmatprep.subr.mxu0 0.0
  %2726 = vmatpush1.msra.mxu0 0.0
  %2727 = vmatprep.subr.mxu0 0.0
  %2728 = vmatpush1.msra.mxu0 0.0
  %2729 = vmatprep.subr.mxu0 0.0
  %2730 = vmatpush1.msra.mxu0 0.0
  %2731 = vmatprep.subr.mxu0 0.0
  %2732 = vmatpush1.msra.mxu0 0.0
  %2733 = vmatprep.subr.mxu0 0.0
  %2734 = vmatpush1.msra.mxu0 0.0
  %2735 = vmatprep.subr.mxu0 0.0
  %2736 = vmatpush1.msra.mxu0 0.0
  %2737 = vmatprep.subr.mxu0 0.0
  %2738 = vmatpush1.msra.mxu0 0.0
  %2739 = vmatprep.subr.mxu0 0.0
  %2740 = vmatpush1.msra.mxu0 0.0
  %2741 = vmatprep.subr.mxu0 0.0
  %2742 = vmatpush1.msra.mxu0 0.0
  %2743 = vmatprep.mubr.f32.mxu0 0.0
  %2744 = vmatmul.mubr.f32.gmra.mrb[0].mxu0 %v2672
  %v2745 = vpop.f32.mrb[0].mxu0
  %v2746 = vadd.f32 %v1605, %v2745
  %v2747 = vpop.f32.mrb[0].mxu0
  %v2748 = vadd.f32 %v1609, %v2747
  %2749 = vdwg.mxu0
  %2750 = vmatprep.subr.mxu0 0.0
  %2751 = vmatpush1.msra.mxu0 %v1625
  %2752 = vmatprep.subr.mxu0 0.0
  %2753 = vmatpush1.msra.mxu0 %v1628
  %2754 = vmatprep.subr.mxu0 0.0
  %2755 = vmatpush1.msra.mxu0 %v1631
  %2756 = vmatprep.subr.mxu0 0.0
  %2757 = vmatpush1.msra.mxu0 %v1634
  %2758 = vmatprep.subr.mxu0 0.0
  %2759 = vmatpush1.msra.mxu0 %v1637
  %2760 = vmatprep.subr.mxu0 0.0
  %2761 = vmatpush1.msra.mxu0 %v1640
  %2762 = vmatprep.subr.mxu0 0.0
  %2763 = vmatpush1.msra.mxu0 %v1643
  %2764 = vmatprep.subr.mxu0 0.0
  %2765 = vmatpush1.msra.mxu0 %v1646
  %2766 = vmatprep.subr.mxu0 0.0
  %2767 = vmatpush1.msra.mxu0 %v1649
  %2768 = vmatprep.subr.mxu0 0.0
  %2769 = vmatpush1.msra.mxu0 %v1652
  %2770 = vmatprep.subr.mxu0 0.0
  %2771 = vmatpush1.msra.mxu0 %v1655
  %2772 = vmatprep.subr.mxu0 0.0
  %2773 = vmatpush1.msra.mxu0 %v1658
  %2774 = vmatprep.subr.mxu0 0.0
  %2775 = vmatpush1.msra.mxu0 %v1661
  %2776 = vmatprep.subr.mxu0 0.0
  %2777 = vmatpush1.msra.mxu0 %v1664
  %2778 = vmatprep.subr.mxu0 0.0
  %2779 = vmatpush1.msra.mxu0 %v1667
  %2780 = vmatprep.subr.mxu0 0.0
  %2781 = vmatpush1.msra.mxu0 %v1670
  %2782 = vmatprep.subr.mxu0 0.0
  %2783 = vmatpush1.msra.mxu0 0.0
  %2784 = vmatprep.subr.mxu0 0.0
  %2785 = vmatpush1.msra.mxu0 0.0
  %2786 = vmatprep.subr.mxu0 0.0
  %2787 = vmatpush1.msra.mxu0 0.0
  %2788 = vmatprep.subr.mxu0 0.0
  %2789 = vmatpush1.msra.mxu0 0.0
  %2790 = vmatprep.subr.mxu0 0.0
  %2791 = vmatpush1.msra.mxu0 0.0
  %2792 = vmatprep.subr.mxu0 0.0
  %2793 = vmatpush1.msra.mxu0 0.0
  %2794 = vmatprep.subr.mxu0 0.0
  %2795 = vmatpush1.msra.mxu0 0.0
  %2796 = vmatprep.subr.mxu0 0.0
  %2797 = vmatpush1.msra.mxu0 0.0
  %2798 = vmatprep.subr.mxu0 0.0
  %2799 = vmatpush1.msra.mxu0 0.0
  %2800 = vmatprep.subr.mxu0 0.0
  %2801 = vmatpush1.msra.mxu0 0.0
  %2802 = vmatprep.subr.mxu0 0.0
  %2803 = vmatpush1.msra.mxu0 0.0
  %2804 = vmatprep.subr.mxu0 0.0
  %2805 = vmatpush1.msra.mxu0 0.0
  %2806 = vmatprep.subr.mxu0 0.0
  %2807 = vmatpush1.msra.mxu0 0.0
  %2808 = vmatprep.subr.mxu0 0.0
  %2809 = vmatpush1.msra.mxu0 0.0
  %2810 = vmatprep.subr.mxu0 0.0
  %2811 = vmatpush1.msra.mxu0 0.0
  %2812 = vmatprep.subr.mxu0 0.0
  %2813 = vmatpush1.msra.mxu0 0.0
  %2814 = vmatprep.mubr.f32.mxu0 0.0
  %2815 = vmatmul.mubr.f32.gmra.mrb[0].mxu0 %v2672
  %v2816 = vpop.f32.mrb[0].mxu0
  %v2817 = vadd.f32 %v1613, %v2816
  %v2818 = vpop.f32.mrb[0].mxu0
  %2819 = vdwg.mxu0
  %v2820 = vadd.f32 %v2676, %v2746
  %v2821 = vxor.u32 %v2820, 2147483648
  %v2822 = vmul.f32 %v2821, 1.442695
  %v2823 = vpow.pop %v2822
  %v2824 = vadd.f32 %v2823, 1.0
  %v2825 = vrcp.pop %v2824
  %v2826 = vmul.f32 1.0, %v2825
  %v2827 = vadd.f32 %v2677, %v2748
  %v2828 = vxor.u32 %v2827, 2147483648
  %v2829 = vmul.f32 %v2828, 1.442695
  %v2830 = vpow.pop %v2829
  %v2831 = vadd.f32 %v2830, 1.0
  %v2832 = vrcp.pop %v2831
  %v2833 = vmul.f32 1.0, %v2832
  %v2834 = vmul.f32 %v2826, %v2817
  %v2835 = vadd.f32 %v2678, %v2834
  %v2836 = vtanh.pop %v2835
  %v2837 = vsub.f32 1.0, %v2833
  %v2838 = vmul.f32 %v2837, %v2836
  %v2839 = vmul.f32 %v2833, %v2672
  %v2840 = vadd.f32 %v2838, %v2839
  %s2841 = smul.u32 7, 3
  %s2842 = smul.addr %s2841, 8
  %s2843 = scalar_lea.vmem [#allocation2], %s2842
  %v2844 = vld [vmem:[%s2843] sm:$0xff]
  %v2845 = vld [vmem:[%s2843 + $0x8] sm:$0xff]
  %v2846 = vld [vmem:[%s2843 + $0x10] sm:$0xff]
  %2847 = vmatprep.subr.mxu0 %v1624
  %2848 = vmatpush1.msra.mxu0 %v1623
  %2849 = vmatprep.subr.mxu0 %v1627
  %2850 = vmatpush1.msra.mxu0 %v1626
  %2851 = vmatprep.subr.mxu0 %v1630
  %2852 = vmatpush1.msra.mxu0 %v1629
  %2853 = vmatprep.subr.mxu0 %v1633
  %2854 = vmatpush1.msra.mxu0 %v1632
  %2855 = vmatprep.subr.mxu0 %v1636
  %2856 = vmatpush1.msra.mxu0 %v1635
  %2857 = vmatprep.subr.mxu0 %v1639
  %2858 = vmatpush1.msra.mxu0 %v1638
  %2859 = vmatprep.subr.mxu0 %v1642
  %2860 = vmatpush1.msra.mxu0 %v1641
  %2861 = vmatprep.subr.mxu0 %v1645
  %2862 = vmatpush1.msra.mxu0 %v1644
  %2863 = vmatprep.subr.mxu0 %v1648
  %2864 = vmatpush1.msra.mxu0 %v1647
  %2865 = vmatprep.subr.mxu0 %v1651
  %2866 = vmatpush1.msra.mxu0 %v1650
  %2867 = vmatprep.subr.mxu0 %v1654
  %2868 = vmatpush1.msra.mxu0 %v1653
  %2869 = vmatprep.subr.mxu0 %v1657
  %2870 = vmatpush1.msra.mxu0 %v1656
  %2871 = vmatprep.subr.mxu0 %v1660
  %2872 = vmatpush1.msra.mxu0 %v1659
  %2873 = vmatprep.subr.mxu0 %v1663
  %2874 = vmatpush1.msra.mxu0 %v1662
  %2875 = vmatprep.subr.mxu0 %v1666
  %2876 = vmatpush1.msra.mxu0 %v1665
  %2877 = vmatprep.subr.mxu0 %v1669
  %2878 = vmatpush1.msra.mxu0 %v1668
  %2879 = vmatprep.subr.mxu0 0.0
  %2880 = vmatpush1.msra.mxu0 0.0
  %2881 = vmatprep.subr.mxu0 0.0
  %2882 = vmatpush1.msra.mxu0 0.0
  %2883 = vmatprep.subr.mxu0 0.0
  %2884 = vmatpush1.msra.mxu0 0.0
  %2885 = vmatprep.subr.mxu0 0.0
  %2886 = vmatpush1.msra.mxu0 0.0
  %2887 = vmatprep.subr.mxu0 0.0
  %2888 = vmatpush1.msra.mxu0 0.0
  %2889 = vmatprep.subr.mxu0 0.0
  %2890 = vmatpush1.msra.mxu0 0.0
  %2891 = vmatprep.subr.mxu0 0.0
  %2892 = vmatpush1.msra.mxu0 0.0
  %2893 = vmatprep.subr.mxu0 0.0
  %2894 = vmatpush1.msra.mxu0 0.0
  %2895 = vmatprep.subr.mxu0 0.0
  %2896 = vmatpush1.msra.mxu0 0.0
  %2897 = vmatprep.subr.mxu0 0.0
  %2898 = vmatpush1.msra.mxu0 0.0
  %2899 = vmatprep.subr.mxu0 0.0
  %2900 = vmatpush1.msra.mxu0 0.0
  %2901 = vmatprep.subr.mxu0 0.0
  %2902 = vmatpush1.msra.mxu0 0.0
  %2903 = vmatprep.subr.mxu0 0.0
  %2904 = vmatpush1.msra.mxu0 0.0
  %2905 = vmatprep.subr.mxu0 0.0
  %2906 = vmatpush1.msra.mxu0 0.0
  %2907 = vmatprep.subr.mxu0 0.0
  %2908 = vmatpush1.msra.mxu0 0.0
  %2909 = vmatprep.subr.mxu0 0.0
  %2910 = vmatpush1.msra.mxu0 0.0
  %2911 = vmatprep.mubr.f32.mxu0 0.0
  %2912 = vmatmul.mubr.f32.gmra.mrb[0].mxu0 %v2840
  %v2913 = vpop.f32.mrb[0].mxu0
  %v2914 = vadd.f32 %v1605, %v2913
  %v2915 = vpop.f32.mrb[0].mxu0
  %v2916 = vadd.f32 %v1609, %v2915
  %2917 = vdwg.mxu0
  %2918 = vmatprep.subr.mxu0 0.0
  %2919 = vmatpush1.msra.mxu0 %v1625
  %2920 = vmatprep.subr.mxu0 0.0
  %2921 = vmatpush1.msra.mxu0 %v1628
  %2922 = vmatprep.subr.mxu0 0.0
  %2923 = vmatpush1.msra.mxu0 %v1631
  %2924 = vmatprep.subr.mxu0 0.0
  %2925 = vmatpush1.msra.mxu0 %v1634
  %2926 = vmatprep.subr.mxu0 0.0
  %2927 = vmatpush1.msra.mxu0 %v1637
  %2928 = vmatprep.subr.mxu0 0.0
  %2929 = vmatpush1.msra.mxu0 %v1640
  %2930 = vmatprep.subr.mxu0 0.0
  %2931 = vmatpush1.msra.mxu0 %v1643
  %2932 = vmatprep.subr.mxu0 0.0
  %2933 = vmatpush1.msra.mxu0 %v1646
  %2934 = vmatprep.subr.mxu0 0.0
  %2935 = vmatpush1.msra.mxu0 %v1649
  %2936 = vmatprep.subr.mxu0 0.0
  %2937 = vmatpush1.msra.mxu0 %v1652
  %2938 = vmatprep.subr.mxu0 0.0
  %2939 = vmatpush1.msra.mxu0 %v1655
  %2940 = vmatprep.subr.mxu0 0.0
  %2941 = vmatpush1.msra.mxu0 %v1658
  %2942 = vmatprep.subr.mxu0 0.0
  %2943 = vmatpush1.msra.mxu0 %v1661
  %2944 = vmatprep.subr.mxu0 0.0
  %2945 = vmatpush1.msra.mxu0 %v1664
  %2946 = vmatprep.subr.mxu0 0.0
  %2947 = vmatpush1.msra.mxu0 %v1667
  %2948 = vmatprep.subr.mxu0 0.0
  %2949 = vmatpush1.msra.mxu0 %v1670
  %2950 = vmatprep.subr.mxu0 0.0
  %2951 = vmatpush1.msra.mxu0 0.0
  %2952 = vmatprep.subr.mxu0 0.0
  %2953 = vmatpush1.msra.mxu0 0.0
  %2954 = vmatprep.subr.mxu0 0.0
  %2955 = vmatpush1.msra.mxu0 0.0
  %2956 = vmatprep.subr.mxu0 0.0
  %2957 = vmatpush1.msra.mxu0 0.0
  %2958 = vmatprep.subr.mxu0 0.0
  %2959 = vmatpush1.msra.mxu0 0.0
  %2960 = vmatprep.subr.mxu0 0.0
  %2961 = vmatpush1.msra.mxu0 0.0
  %2962 = vmatprep.subr.mxu0 0.0
  %2963 = vmatpush1.msra.mxu0 0.0
  %2964 = vmatprep.subr.mxu0 0.0
  %2965 = vmatpush1.msra.mxu0 0.0
  %2966 = vmatprep.subr.mxu0 0.0
  %2967 = vmatpush1.msra.mxu0 0.0
  %2968 = vmatprep.subr.mxu0 0.0
  %2969 = vmatpush1.msra.mxu0 0.0
  %2970 = vmatprep.subr.mxu0 0.0
  %2971 = vmatpush1.msra.mxu0 0.0
  %2972 = vmatprep.subr.mxu0 0.0
  %2973 = vmatpush1.msra.mxu0 0.0
  %2974 = vmatprep.subr.mxu0 0.0
  %2975 = vmatpush1.msra.mxu0 0.0
  %2976 = vmatprep.subr.mxu0 0.0
  %2977 = vmatpush1.msra.mxu0 0.0
  %2978 = vmatprep.subr.mxu0 0.0
  %2979 = vmatpush1.msra.mxu0 0.0
  %2980 = vmatprep.subr.mxu0 0.0
  %2981 = vmatpush1.msra.mxu0 0.0
  %2982 = vmatprep.mubr.f32.mxu0 0.0
  %2983 = vmatmul.mubr.f32.gmra.mrb[0].mxu0 %v2840
  %v2984 = vpop.f32.mrb[0].mxu0
  %v2985 = vadd.f32 %v1613, %v2984
  %v2986 = vpop.f32.mrb[0].mxu0
  %2987 = vdwg.mxu0
  %v2988 = vadd.f32 %v2844, %v2914
  %v2989 = vxor.u32 %v2988, 2147483648
  %v2990 = vmul.f32 %v2989, 1.442695
  %v2991 = vpow.pop %v2990
  %v2992 = vadd.f32 %v2991, 1.0
  %v2993 = vrcp.pop %v2992
  %v2994 = vmul.f32 1.0, %v2993
  %v2995 = vadd.f32 %v2845, %v2916
  %v2996 = vxor.u32 %v2995, 2147483648
  %v2997 = vmul.f32 %v2996, 1.442695
  %v2998 = vpow.pop %v2997
  %v2999 = vadd.f32 %v2998, 1.0
  %v3000 = vrcp.pop %v2999
  %v3001 = vmul.f32 1.0, %v3000
  %v3002 = vmul.f32 %v2994, %v2985
  %v3003 = vadd.f32 %v2846, %v3002
  %v3004 = vtanh.pop %v3003
  %v3005 = vsub.f32 1.0, %v3001
  %v3006 = vmul.f32 %v3005, %v3004
  %v3007 = vmul.f32 %v3001, %v2840
  %v3008 = vadd.f32 %v3006, %v3007
  %s3009 = smul.u32 8, 3
  %s3010 = smul.addr %s3009, 8
  %s3011 = scalar_lea.vmem [#allocation2], %s3010
  %v3012 = vld [vmem:[%s3011] sm:$0xff]
  %v3013 = vld [vmem:[%s3011 + $0x8] sm:$0xff]
  %v3014 = vld [vmem:[%s3011 + $0x10] sm:$0xff]
  %3015 = vmatprep.subr.mxu0 %v1624
  %3016 = vmatpush1.msra.mxu0 %v1623
  %3017 = vmatprep.subr.mxu0 %v1627
  %3018 = vmatpush1.msra.mxu0 %v1626
  %3019 = vmatprep.subr.mxu0 %v1630
  %3020 = vmatpush1.msra.mxu0 %v1629
  %3021 = vmatprep.subr.mxu0 %v1633
  %3022 = vmatpush1.msra.mxu0 %v1632
  %3023 = vmatprep.subr.mxu0 %v1636
  %3024 = vmatpush1.msra.mxu0 %v1635
  %3025 = vmatprep.subr.mxu0 %v1639
  %3026 = vmatpush1.msra.mxu0 %v1638
  %3027 = vmatprep.subr.mxu0 %v1642
  %3028 = vmatpush1.msra.mxu0 %v1641
  %3029 = vmatprep.subr.mxu0 %v1645
  %3030 = vmatpush1.msra.mxu0 %v1644
  %3031 = vmatprep.subr.mxu0 %v1648
  %3032 = vmatpush1.msra.mxu0 %v1647
  %3033 = vmatprep.subr.mxu0 %v1651
  %3034 = vmatpush1.msra.mxu0 %v1650
  %3035 = vmatprep.subr.mxu0 %v1654
  %3036 = vmatpush1.msra.mxu0 %v1653
  %3037 = vmatprep.subr.mxu0 %v1657
  %3038 = vmatpush1.msra.mxu0 %v1656
  %3039 = vmatprep.subr.mxu0 %v1660
  %3040 = vmatpush1.msra.mxu0 %v1659
  %3041 = vmatprep.subr.mxu0 %v1663
  %3042 = vmatpush1.msra.mxu0 %v1662
  %3043 = vmatprep.subr.mxu0 %v1666
  %3044 = vmatpush1.msra.mxu0 %v1665
  %3045 = vmatprep.subr.mxu0 %v1669
  %3046 = vmatpush1.msra.mxu0 %v1668
  %3047 = vmatprep.subr.mxu0 0.0
  %3048 = vmatpush1.msra.mxu0 0.0
  %3049 = vmatprep.subr.mxu0 0.0
  %3050 = vmatpush1.msra.mxu0 0.0
  %3051 = vmatprep.subr.mxu0 0.0
  %3052 = vmatpush1.msra.mxu0 0.0
  %3053 = vmatprep.subr.mxu0 0.0
  %3054 = vmatpush1.msra.mxu0 0.0
  %3055 = vmatprep.subr.mxu0 0.0
  %3056 = vmatpush1.msra.mxu0 0.0
  %3057 = vmatprep.subr.mxu0 0.0
  %3058 = vmatpush1.msra.mxu0 0.0
  %3059 = vmatprep.subr.mxu0 0.0
  %3060 = vmatpush1.msra.mxu0 0.0
  %3061 = vmatprep.subr.mxu0 0.0
  %3062 = vmatpush1.msra.mxu0 0.0
  %3063 = vmatprep.subr.mxu0 0.0
  %3064 = vmatpush1.msra.mxu0 0.0
  %3065 = vmatprep.subr.mxu0 0.0
  %3066 = vmatpush1.msra.mxu0 0.0
  %3067 = vmatprep.subr.mxu0 0.0
  %3068 = vmatpush1.msra.mxu0 0.0
  %3069 = vmatprep.subr.mxu0 0.0
  %3070 = vmatpush1.msra.mxu0 0.0
  %3071 = vmatprep.subr.mxu0 0.0
  %3072 = vmatpush1.msra.mxu0 0.0
  %3073 = vmatprep.subr.mxu0 0.0
  %3074 = vmatpush1.msra.mxu0 0.0
  %3075 = vmatprep.subr.mxu0 0.0
  %3076 = vmatpush1.msra.mxu0 0.0
  %3077 = vmatprep.subr.mxu0 0.0
  %3078 = vmatpush1.msra.mxu0 0.0
  %3079 = vmatprep.mubr.f32.mxu0 0.0
  %3080 = vmatmul.mubr.f32.gmra.mrb[0].mxu0 %v3008
  %v3081 = vpop.f32.mrb[0].mxu0
  %v3082 = vadd.f32 %v1605, %v3081
  %v3083 = vpop.f32.mrb[0].mxu0
  %v3084 = vadd.f32 %v1609, %v3083
  %3085 = vdwg.mxu0
  %3086 = vmatprep.subr.mxu0 0.0
  %3087 = vmatpush1.msra.mxu0 %v1625
  %3088 = vmatprep.subr.mxu0 0.0
  %3089 = vmatpush1.msra.mxu0 %v1628
  %3090 = vmatprep.subr.mxu0 0.0
  %3091 = vmatpush1.msra.mxu0 %v1631
  %3092 = vmatprep.subr.mxu0 0.0
  %3093 = vmatpush1.msra.mxu0 %v1634
  %3094 = vmatprep.subr.mxu0 0.0
  %3095 = vmatpush1.msra.mxu0 %v1637
  %3096 = vmatprep.subr.mxu0 0.0
  %3097 = vmatpush1.msra.mxu0 %v1640
  %3098 = vmatprep.subr.mxu0 0.0
  %3099 = vmatpush1.msra.mxu0 %v1643
  %3100 = vmatprep.subr.mxu0 0.0
  %3101 = vmatpush1.msra.mxu0 %v1646
  %3102 = vmatprep.subr.mxu0 0.0
  %3103 = vmatpush1.msra.mxu0 %v1649
  %3104 = vmatprep.subr.mxu0 0.0
  %3105 = vmatpush1.msra.mxu0 %v1652
  %3106 = vmatprep.subr.mxu0 0.0
  %3107 = vmatpush1.msra.mxu0 %v1655
  %3108 = vmatprep.subr.mxu0 0.0
  %3109 = vmatpush1.msra.mxu0 %v1658
  %3110 = vmatprep.subr.mxu0 0.0
  %3111 = vmatpush1.msra.mxu0 %v1661
  %3112 = vmatprep.subr.mxu0 0.0
  %3113 = vmatpush1.msra.mxu0 %v1664
  %3114 = vmatprep.subr.mxu0 0.0
  %3115 = vmatpush1.msra.mxu0 %v1667
  %3116 = vmatprep.subr.mxu0 0.0
  %3117 = vmatpush1.msra.mxu0 %v1670
  %3118 = vmatprep.subr.mxu0 0.0
  %3119 = vmatpush1.msra.mxu0 0.0
  %3120 = vmatprep.subr.mxu0 0.0
  %3121 = vmatpush1.msra.mxu0 0.0
  %3122 = vmatprep.subr.mxu0 0.0
  %3123 = vmatpush1.msra.mxu0 0.0
  %3124 = vmatprep.subr.mxu0 0.0
  %3125 = vmatpush1.msra.mxu0 0.0
  %3126 = vmatprep.subr.mxu0 0.0
  %3127 = vmatpush1.msra.mxu0 0.0
  %3128 = vmatprep.subr.mxu0 0.0
  %3129 = vmatpush1.msra.mxu0 0.0
  %3130 = vmatprep.subr.mxu0 0.0
  %3131 = vmatpush1.msra.mxu0 0.0
  %3132 = vmatprep.subr.mxu0 0.0
  %3133 = vmatpush1.msra.mxu0 0.0
  %3134 = vmatprep.subr.mxu0 0.0
  %3135 = vmatpush1.msra.mxu0 0.0
  %3136 = vmatprep.subr.mxu0 0.0
  %3137 = vmatpush1.msra.mxu0 0.0
  %3138 = vmatprep.subr.mxu0 0.0
  %3139 = vmatpush1.msra.mxu0 0.0
  %3140 = vmatprep.subr.mxu0 0.0
  %3141 = vmatpush1.msra.mxu0 0.0
  %3142 = vmatprep.subr.mxu0 0.0
  %3143 = vmatpush1.msra.mxu0 0.0
  %3144 = vmatprep.subr.mxu0 0.0
  %3145 = vmatpush1.msra.mxu0 0.0
  %3146 = vmatprep.subr.mxu0 0.0
  %3147 = vmatpush1.msra.mxu0 0.0
  %3148 = vmatprep.subr.mxu0 0.0
  %3149 = vmatpush1.msra.mxu0 0.0
  %3150 = vmatprep.mubr.f32.mxu0 0.0
  %3151 = vmatmul.mubr.f32.gmra.mrb[0].mxu0 %v3008
  %v3152 = vpop.f32.mrb[0].mxu0
  %v3153 = vadd.f32 %v1613, %v3152
  %v3154 = vpop.f32.mrb[0].mxu0
  %3155 = vdwg.mxu0
  %v3156 = vadd.f32 %v3012, %v3082
  %v3157 = vxor.u32 %v3156, 2147483648
  %v3158 = vmul.f32 %v3157, 1.442695
  %v3159 = vpow.pop %v3158
  %v3160 = vadd.f32 %v3159, 1.0
  %v3161 = vrcp.pop %v3160
  %v3162 = vmul.f32 1.0, %v3161
  %v3163 = vadd.f32 %v3013, %v3084
  %v3164 = vxor.u32 %v3163, 2147483648
  %v3165 = vmul.f32 %v3164, 1.442695
  %v3166 = vpow.pop %v3165
  %v3167 = vadd.f32 %v3166, 1.0
  %v3168 = vrcp.pop %v3167
  %v3169 = vmul.f32 1.0, %v3168
  %v3170 = vmul.f32 %v3162, %v3153
  %v3171 = vadd.f32 %v3014, %v3170
  %v3172 = vtanh.pop %v3171
  %v3173 = vsub.f32 1.0, %v3169
  %v3174 = vmul.f32 %v3173, %v3172
  %v3175 = vmul.f32 %v3169, %v3008
  %v3176 = vadd.f32 %v3174, %v3175
  %s3177 = smul.u32 9, 3
  %s3178 = smul.addr %s3177, 8
  %s3179 = scalar_lea.vmem [#allocation2], %s3178
  %v3180 = vld [vmem:[%s3179] sm:$0xff]
  %v3181 = vld [vmem:[%s3179 + $0x8] sm:$0xff]
  %v3182 = vld [vmem:[%s3179 + $0x10] sm:$0xff]
  %3183 = vmatprep.subr.mxu0 %v1624
  %3184 = vmatpush1.msra.mxu0 %v1623
  %3185 = vmatprep.subr.mxu0 %v1627
  %3186 = vmatpush1.msra.mxu0 %v1626
  %3187 = vmatprep.subr.mxu0 %v1630
  %3188 = vmatpush1.msra.mxu0 %v1629
  %3189 = vmatprep.subr.mxu0 %v1633
  %3190 = vmatpush1.msra.mxu0 %v1632
  %3191 = vmatprep.subr.mxu0 %v1636
  %3192 = vmatpush1.msra.mxu0 %v1635
  %3193 = vmatprep.subr.mxu0 %v1639
  %3194 = vmatpush1.msra.mxu0 %v1638
  %3195 = vmatprep.subr.mxu0 %v1642
  %3196 = vmatpush1.msra.mxu0 %v1641
  %3197 = vmatprep.subr.mxu0 %v1645
  %3198 = vmatpush1.msra.mxu0 %v1644
  %3199 = vmatprep.subr.mxu0 %v1648
  %3200 = vmatpush1.msra.mxu0 %v1647
  %3201 = vmatprep.subr.mxu0 %v1651
  %3202 = vmatpush1.msra.mxu0 %v1650
  %3203 = vmatprep.subr.mxu0 %v1654
  %3204 = vmatpush1.msra.mxu0 %v1653
  %3205 = vmatprep.subr.mxu0 %v1657
  %3206 = vmatpush1.msra.mxu0 %v1656
  %3207 = vmatprep.subr.mxu0 %v1660
  %3208 = vmatpush1.msra.mxu0 %v1659
  %3209 = vmatprep.subr.mxu0 %v1663
  %3210 = vmatpush1.msra.mxu0 %v1662
  %3211 = vmatprep.subr.mxu0 %v1666
  %3212 = vmatpush1.msra.mxu0 %v1665
  %3213 = vmatprep.subr.mxu0 %v1669
  %3214 = vmatpush1.msra.mxu0 %v1668
  %3215 = vmatprep.subr.mxu0 0.0
  %3216 = vmatpush1.msra.mxu0 0.0
  %3217 = vmatprep.subr.mxu0 0.0
  %3218 = vmatpush1.msra.mxu0 0.0
  %3219 = vmatprep.subr.mxu0 0.0
  %3220 = vmatpush1.msra.mxu0 0.0
  %3221 = vmatprep.subr.mxu0 0.0
  %3222 = vmatpush1.msra.mxu0 0.0
  %3223 = vmatprep.subr.mxu0 0.0
  %3224 = vmatpush1.msra.mxu0 0.0
  %3225 = vmatprep.subr.mxu0 0.0
  %3226 = vmatpush1.msra.mxu0 0.0
  %3227 = vmatprep.subr.mxu0 0.0
  %3228 = vmatpush1.msra.mxu0 0.0
  %3229 = vmatprep.subr.mxu0 0.0
  %3230 = vmatpush1.msra.mxu0 0.0
  %3231 = vmatprep.subr.mxu0 0.0
  %3232 = vmatpush1.msra.mxu0 0.0
  %3233 = vmatprep.subr.mxu0 0.0
  %3234 = vmatpush1.msra.mxu0 0.0
  %3235 = vmatprep.subr.mxu0 0.0
  %3236 = vmatpush1.msra.mxu0 0.0
  %3237 = vmatprep.subr.mxu0 0.0
  %3238 = vmatpush1.msra.mxu0 0.0
  %3239 = vmatprep.subr.mxu0 0.0
  %3240 = vmatpush1.msra.mxu0 0.0
  %3241 = vmatprep.subr.mxu0 0.0
  %3242 = vmatpush1.msra.mxu0 0.0
  %3243 = vmatprep.subr.mxu0 0.0
  %3244 = vmatpush1.msra.mxu0 0.0
  %3245 = vmatprep.subr.mxu0 0.0
  %3246 = vmatpush1.msra.mxu0 0.0
  %3247 = vmatprep.mubr.f32.mxu0 0.0
  %3248 = vmatmul.mubr.f32.gmra.mrb[0].mxu0 %v3176
  %v3249 = vpop.f32.mrb[0].mxu0
  %v3250 = vadd.f32 %v1605, %v3249
  %v3251 = vpop.f32.mrb[0].mxu0
  %v3252 = vadd.f32 %v1609, %v3251
  %3253 = vdwg.mxu0
  %3254 = vmatprep.subr.mxu0 0.0
  %3255 = vmatpush1.msra.mxu0 %v1625
  %3256 = vmatprep.subr.mxu0 0.0
  %3257 = vmatpush1.msra.mxu0 %v1628
  %3258 = vmatprep.subr.mxu0 0.0
  %3259 = vmatpush1.msra.mxu0 %v1631
  %3260 = vmatprep.subr.mxu0 0.0
  %3261 = vmatpush1.msra.mxu0 %v1634
  %3262 = vmatprep.subr.mxu0 0.0
  %3263 = vmatpush1.msra.mxu0 %v1637
  %3264 = vmatprep.subr.mxu0 0.0
  %3265 = vmatpush1.msra.mxu0 %v1640
  %3266 = vmatprep.subr.mxu0 0.0
  %3267 = vmatpush1.msra.mxu0 %v1643
  %3268 = vmatprep.subr.mxu0 0.0
  %3269 = vmatpush1.msra.mxu0 %v1646
  %3270 = vmatprep.subr.mxu0 0.0
  %3271 = vmatpush1.msra.mxu0 %v1649
  %3272 = vmatprep.subr.mxu0 0.0
  %3273 = vmatpush1.msra.mxu0 %v1652
  %3274 = vmatprep.subr.mxu0 0.0
  %3275 = vmatpush1.msra.mxu0 %v1655
  %3276 = vmatprep.subr.mxu0 0.0
  %3277 = vmatpush1.msra.mxu0 %v1658
  %3278 = vmatprep.subr.mxu0 0.0
  %3279 = vmatpush1.msra.mxu0 %v1661
  %3280 = vmatprep.subr.mxu0 0.0
  %3281 = vmatpush1.msra.mxu0 %v1664
  %3282 = vmatprep.subr.mxu0 0.0
  %3283 = vmatpush1.msra.mxu0 %v1667
  %3284 = vmatprep.subr.mxu0 0.0
  %3285 = vmatpush1.msra.mxu0 %v1670
  %3286 = vmatprep.subr.mxu0 0.0
  %3287 = vmatpush1.msra.mxu0 0.0
  %3288 = vmatprep.subr.mxu0 0.0
  %3289 = vmatpush1.msra.mxu0 0.0
  %3290 = vmatprep.subr.mxu0 0.0
  %3291 = vmatpush1.msra.mxu0 0.0
  %3292 = vmatprep.subr.mxu0 0.0
  %3293 = vmatpush1.msra.mxu0 0.0
  %3294 = vmatprep.subr.mxu0 0.0
  %3295 = vmatpush1.msra.mxu0 0.0
  %3296 = vmatprep.subr.mxu0 0.0
  %3297 = vmatpush1.msra.mxu0 0.0
  %3298 = vmatprep.subr.mxu0 0.0
  %3299 = vmatpush1.msra.mxu0 0.0
  %3300 = vmatprep.subr.mxu0 0.0
  %3301 = vmatpush1.msra.mxu0 0.0
  %3302 = vmatprep.subr.mxu0 0.0
  %3303 = vmatpush1.msra.mxu0 0.0
  %3304 = vmatprep.subr.mxu0 0.0
  %3305 = vmatpush1.msra.mxu0 0.0
  %3306 = vmatprep.subr.mxu0 0.0
  %3307 = vmatpush1.msra.mxu0 0.0
  %3308 = vmatprep.subr.mxu0 0.0
  %3309 = vmatpush1.msra.mxu0 0.0
  %3310 = vmatprep.subr.mxu0 0.0
  %3311 = vmatpush1.msra.mxu0 0.0
  %3312 = vmatprep.subr.mxu0 0.0
  %3313 = vmatpush1.msra.mxu0 0.0
  %3314 = vmatprep.subr.mxu0 0.0
  %3315 = vmatpush1.msra.mxu0 0.0
  %3316 = vmatprep.subr.mxu0 0.0
  %3317 = vmatpush1.msra.mxu0 0.0
  %3318 = vmatprep.mubr.f32.mxu0 0.0
  %3319 = vmatmul.mubr.f32.gmra.mrb[0].mxu0 %v3176
  %v3320 = vpop.f32.mrb[0].mxu0
  %v3321 = vadd.f32 %v1613, %v3320
  %v3322 = vpop.f32.mrb[0].mxu0
  %3323 = vdwg.mxu0
  %v3324 = vadd.f32 %v3180, %v3250
  %v3325 = vxor.u32 %v3324, 2147483648
  %v3326 = vmul.f32 %v3325, 1.442695
  %v3327 = vpow.pop %v3326
  %v3328 = vadd.f32 %v3327, 1.0
  %v3329 = vrcp.pop %v3328
  %v3330 = vmul.f32 1.0, %v3329
  %v3331 = vadd.f32 %v3181, %v3252
  %v3332 = vxor.u32 %v3331, 2147483648
  %v3333 = vmul.f32 %v3332, 1.442695
  %v3334 = vpow.pop %v3333
  %v3335 = vadd.f32 %v3334, 1.0
  %v3336 = vrcp.pop %v3335
  %v3337 = vmul.f32 1.0, %v3336
  %v3338 = vmul.f32 %v3330, %v3321
  %v3339 = vadd.f32 %v3182, %v3338
  %v3340 = vtanh.pop %v3339
  %v3341 = vsub.f32 1.0, %v3337
  %v3342 = vmul.f32 %v3341, %v3340
  %v3343 = vmul.f32 %v3337, %v3176
  %v3344 = vadd.f32 %v3342, %v3343
  %s3345 = smul.u32 10, 3
  %s3346 = smul.addr %s3345, 8
  %s3347 = scalar_lea.vmem [#allocation2], %s3346
  %v3348 = vld [vmem:[%s3347] sm:$0xff]
  %v3349 = vld [vmem:[%s3347 + $0x8] sm:$0xff]
  %v3350 = vld [vmem:[%s3347 + $0x10] sm:$0xff]
  %3351 = vmatprep.subr.mxu0 %v1624
  %3352 = vmatpush1.msra.mxu0 %v1623
  %3353 = vmatprep.subr.mxu0 %v1627
  %3354 = vmatpush1.msra.mxu0 %v1626
  %3355 = vmatprep.subr.mxu0 %v1630
  %3356 = vmatpush1.msra.mxu0 %v1629
  %3357 = vmatprep.subr.mxu0 %v1633
  %3358 = vmatpush1.msra.mxu0 %v1632
  %3359 = vmatprep.subr.mxu0 %v1636
  %3360 = vmatpush1.msra.mxu0 %v1635
  %3361 = vmatprep.subr.mxu0 %v1639
  %3362 = vmatpush1.msra.mxu0 %v1638
  %3363 = vmatprep.subr.mxu0 %v1642
  %3364 = vmatpush1.msra.mxu0 %v1641
  %3365 = vmatprep.subr.mxu0 %v1645
  %3366 = vmatpush1.msra.mxu0 %v1644
  %3367 = vmatprep.subr.mxu0 %v1648
  %3368 = vmatpush1.msra.mxu0 %v1647
  %3369 = vmatprep.subr.mxu0 %v1651
  %3370 = vmatpush1.msra.mxu0 %v1650
  %3371 = vmatprep.subr.mxu0 %v1654
  %3372 = vmatpush1.msra.mxu0 %v1653
  %3373 = vmatprep.subr.mxu0 %v1657
  %3374 = vmatpush1.msra.mxu0 %v1656
  %3375 = vmatprep.subr.mxu0 %v1660
  %3376 = vmatpush1.msra.mxu0 %v1659
  %3377 = vmatprep.subr.mxu0 %v1663
  %3378 = vmatpush1.msra.mxu0 %v1662
  %3379 = vmatprep.subr.mxu0 %v1666
  %3380 = vmatpush1.msra.mxu0 %v1665
  %3381 = vmatprep.subr.mxu0 %v1669
  %3382 = vmatpush1.msra.mxu0 %v1668
  %3383 = vmatprep.subr.mxu0 0.0
  %3384 = vmatpush1.msra.mxu0 0.0
  %3385 = vmatprep.subr.mxu0 0.0
  %3386 = vmatpush1.msra.mxu0 0.0
  %3387 = vmatprep.subr.mxu0 0.0
  %3388 = vmatpush1.msra.mxu0 0.0
  %3389 = vmatprep.subr.mxu0 0.0
  %3390 = vmatpush1.msra.mxu0 0.0
  %3391 = vmatprep.subr.mxu0 0.0
  %3392 = vmatpush1.msra.mxu0 0.0
  %3393 = vmatprep.subr.mxu0 0.0
  %3394 = vmatpush1.msra.mxu0 0.0
  %3395 = vmatprep.subr.mxu0 0.0
  %3396 = vmatpush1.msra.mxu0 0.0
  %3397 = vmatprep.subr.mxu0 0.0
  %3398 = vmatpush1.msra.mxu0 0.0
  %3399 = vmatprep.subr.mxu0 0.0
  %3400 = vmatpush1.msra.mxu0 0.0
  %3401 = vmatprep.subr.mxu0 0.0
  %3402 = vmatpush1.msra.mxu0 0.0
  %3403 = vmatprep.subr.mxu0 0.0
  %3404 = vmatpush1.msra.mxu0 0.0
  %3405 = vmatprep.subr.mxu0 0.0
  %3406 = vmatpush1.msra.mxu0 0.0
  %3407 = vmatprep.subr.mxu0 0.0
  %3408 = vmatpush1.msra.mxu0 0.0
  %3409 = vmatprep.subr.mxu0 0.0
  %3410 = vmatpush1.msra.mxu0 0.0
  %3411 = vmatprep.subr.mxu0 0.0
  %3412 = vmatpush1.msra.mxu0 0.0
  %3413 = vmatprep.subr.mxu0 0.0
  %3414 = vmatpush1.msra.mxu0 0.0
  %3415 = vmatprep.mubr.f32.mxu0 0.0
  %3416 = vmatmul.mubr.f32.gmra.mrb[0].mxu0 %v3344
  %v3417 = vpop.f32.mrb[0].mxu0
  %v3418 = vadd.f32 %v1605, %v3417
  %v3419 = vpop.f32.mrb[0].mxu0
  %v3420 = vadd.f32 %v1609, %v3419
  %3421 = vdwg.mxu0
  %3422 = vmatprep.subr.mxu0 0.0
  %3423 = vmatpush1.msra.mxu0 %v1625
  %3424 = vmatprep.subr.mxu0 0.0
  %3425 = vmatpush1.msra.mxu0 %v1628
  %3426 = vmatprep.subr.mxu0 0.0
  %3427 = vmatpush1.msra.mxu0 %v1631
  %3428 = vmatprep.subr.mxu0 0.0
  %3429 = vmatpush1.msra.mxu0 %v1634
  %3430 = vmatprep.subr.mxu0 0.0
  %3431 = vmatpush1.msra.mxu0 %v1637
  %3432 = vmatprep.subr.mxu0 0.0
  %3433 = vmatpush1.msra.mxu0 %v1640
  %3434 = vmatprep.subr.mxu0 0.0
  %3435 = vmatpush1.msra.mxu0 %v1643
  %3436 = vmatprep.subr.mxu0 0.0
  %3437 = vmatpush1.msra.mxu0 %v1646
  %3438 = vmatprep.subr.mxu0 0.0
  %3439 = vmatpush1.msra.mxu0 %v1649
  %3440 = vmatprep.subr.mxu0 0.0
  %3441 = vmatpush1.msra.mxu0 %v1652
  %3442 = vmatprep.subr.mxu0 0.0
  %3443 = vmatpush1.msra.mxu0 %v1655
  %3444 = vmatprep.subr.mxu0 0.0
  %3445 = vmatpush1.msra.mxu0 %v1658
  %3446 = vmatprep.subr.mxu0 0.0
  %3447 = vmatpush1.msra.mxu0 %v1661
  %3448 = vmatprep.subr.mxu0 0.0
  %3449 = vmatpush1.msra.mxu0 %v1664
  %3450 = vmatprep.subr.mxu0 0.0
  %3451 = vmatpush1.msra.mxu0 %v1667
  %3452 = vmatprep.subr.mxu0 0.0
  %3453 = vmatpush1.msra.mxu0 %v1670
  %3454 = vmatprep.subr.mxu0 0.0
  %3455 = vmatpush1.msra.mxu0 0.0
  %3456 = vmatprep.subr.mxu0 0.0
  %3457 = vmatpush1.msra.mxu0 0.0
  %3458 = vmatprep.subr.mxu0 0.0
  %3459 = vmatpush1.msra.mxu0 0.0
  %3460 = vmatprep.subr.mxu0 0.0
  %3461 = vmatpush1.msra.mxu0 0.0
  %3462 = vmatprep.subr.mxu0 0.0
  %3463 = vmatpush1.msra.mxu0 0.0
  %3464 = vmatprep.subr.mxu0 0.0
  %3465 = vmatpush1.msra.mxu0 0.0
  %3466 = vmatprep.subr.mxu0 0.0
  %3467 = vmatpush1.msra.mxu0 0.0
  %3468 = vmatprep.subr.mxu0 0.0
  %3469 = vmatpush1.msra.mxu0 0.0
  %3470 = vmatprep.subr.mxu0 0.0
  %3471 = vmatpush1.msra.mxu0 0.0
  %3472 = vmatprep.subr.mxu0 0.0
  %3473 = vmatpush1.msra.mxu0 0.0
  %3474 = vmatprep.subr.mxu0 0.0
  %3475 = vmatpush1.msra.mxu0 0.0
  %3476 = vmatprep.subr.mxu0 0.0
  %3477 = vmatpush1.msra.mxu0 0.0
  %3478 = vmatprep.subr.mxu0 0.0
  %3479 = vmatpush1.msra.mxu0 0.0
  %3480 = vmatprep.subr.mxu0 0.0
  %3481 = vmatpush1.msra.mxu0 0.0
  %3482 = vmatprep.subr.mxu0 0.0
  %3483 = vmatpush1.msra.mxu0 0.0
  %3484 = vmatprep.subr.mxu0 0.0
  %3485 = vmatpush1.msra.mxu0 0.0
  %3486 = vmatprep.mubr.f32.mxu0 0.0
  %3487 = vmatmul.mubr.f32.gmra.mrb[0].mxu0 %v3344
  %v3488 = vpop.f32.mrb[0].mxu0
  %v3489 = vadd.f32 %v1613, %v3488
  %v3490 = vpop.f32.mrb[0].mxu0
  %3491 = vdwg.mxu0
  %v3492 = vadd.f32 %v3348, %v3418
  %v3493 = vxor.u32 %v3492, 2147483648
  %v3494 = vmul.f32 %v3493, 1.442695
  %v3495 = vpow.pop %v3494
  %v3496 = vadd.f32 %v3495, 1.0
  %v3497 = vrcp.pop %v3496
  %v3498 = vmul.f32 1.0, %v3497
  %v3499 = vadd.f32 %v3349, %v3420
  %v3500 = vxor.u32 %v3499, 2147483648
  %v3501 = vmul.f32 %v3500, 1.442695
  %v3502 = vpow.pop %v3501
  %v3503 = vadd.f32 %v3502, 1.0
  %v3504 = vrcp.pop %v3503
  %v3505 = vmul.f32 1.0, %v3504
  %v3506 = vmul.f32 %v3498, %v3489
  %v3507 = vadd.f32 %v3350, %v3506
  %v3508 = vtanh.pop %v3507
  %v3509 = vsub.f32 1.0, %v3505
  %v3510 = vmul.f32 %v3509, %v3508
  %v3511 = vmul.f32 %v3505, %v3344
  %v3512 = vadd.f32 %v3510, %v3511
  %s3513 = smul.u32 11, 3
  %s3514 = smul.addr %s3513, 8
  %s3515 = scalar_lea.vmem [#allocation2], %s3514
  %v3516 = vld [vmem:[%s3515] sm:$0xff]
  %v3517 = vld [vmem:[%s3515 + $0x8] sm:$0xff]
  %v3518 = vld [vmem:[%s3515 + $0x10] sm:$0xff]
  %3519 = vmatprep.subr.mxu0 %v1624
  %3520 = vmatpush1.msra.mxu0 %v1623
  %3521 = vmatprep.subr.mxu0 %v1627
  %3522 = vmatpush1.msra.mxu0 %v1626
  %3523 = vmatprep.subr.mxu0 %v1630
  %3524 = vmatpush1.msra.mxu0 %v1629
  %3525 = vmatprep.subr.mxu0 %v1633
  %3526 = vmatpush1.msra.mxu0 %v1632
  %3527 = vmatprep.subr.mxu0 %v1636
  %3528 = vmatpush1.msra.mxu0 %v1635
  %3529 = vmatprep.subr.mxu0 %v1639
  %3530 = vmatpush1.msra.mxu0 %v1638
  %3531 = vmatprep.subr.mxu0 %v1642
  %3532 = vmatpush1.msra.mxu0 %v1641
  %3533 = vmatprep.subr.mxu0 %v1645
  %3534 = vmatpush1.msra.mxu0 %v1644
  %3535 = vmatprep.subr.mxu0 %v1648
  %3536 = vmatpush1.msra.mxu0 %v1647
  %3537 = vmatprep.subr.mxu0 %v1651
  %3538 = vmatpush1.msra.mxu0 %v1650
  %3539 = vmatprep.subr.mxu0 %v1654
  %3540 = vmatpush1.msra.mxu0 %v1653
  %3541 = vmatprep.subr.mxu0 %v1657
  %3542 = vmatpush1.msra.mxu0 %v1656
  %3543 = vmatprep.subr.mxu0 %v1660
  %3544 = vmatpush1.msra.mxu0 %v1659
  %3545 = vmatprep.subr.mxu0 %v1663
  %3546 = vmatpush1.msra.mxu0 %v1662
  %3547 = vmatprep.subr.mxu0 %v1666
  %3548 = vmatpush1.msra.mxu0 %v1665
  %3549 = vmatprep.subr.mxu0 %v1669
  %3550 = vmatpush1.msra.mxu0 %v1668
  %3551 = vmatprep.subr.mxu0 0.0
  %3552 = vmatpush1.msra.mxu0 0.0
  %3553 = vmatprep.subr.mxu0 0.0
  %3554 = vmatpush1.msra.mxu0 0.0
  %3555 = vmatprep.subr.mxu0 0.0
  %3556 = vmatpush1.msra.mxu0 0.0
  %3557 = vmatprep.subr.mxu0 0.0
  %3558 = vmatpush1.msra.mxu0 0.0
  %3559 = vmatprep.subr.mxu0 0.0
  %3560 = vmatpush1.msra.mxu0 0.0
  %3561 = vmatprep.subr.mxu0 0.0
  %3562 = vmatpush1.msra.mxu0 0.0
  %3563 = vmatprep.subr.mxu0 0.0
  %3564 = vmatpush1.msra.mxu0 0.0
  %3565 = vmatprep.subr.mxu0 0.0
  %3566 = vmatpush1.msra.mxu0 0.0
  %3567 = vmatprep.subr.mxu0 0.0
  %3568 = vmatpush1.msra.mxu0 0.0
  %3569 = vmatprep.subr.mxu0 0.0
  %3570 = vmatpush1.msra.mxu0 0.0
  %3571 = vmatprep.subr.mxu0 0.0
  %3572 = vmatpush1.msra.mxu0 0.0
  %3573 = vmatprep.subr.mxu0 0.0
  %3574 = vmatpush1.msra.mxu0 0.0
  %3575 = vmatprep.subr.mxu0 0.0
  %3576 = vmatpush1.msra.mxu0 0.0
  %3577 = vmatprep.subr.mxu0 0.0
  %3578 = vmatpush1.msra.mxu0 0.0
  %3579 = vmatprep.subr.mxu0 0.0
  %3580 = vmatpush1.msra.mxu0 0.0
  %3581 = vmatprep.subr.mxu0 0.0
  %3582 = vmatpush1.msra.mxu0 0.0
  %3583 = vmatprep.mubr.f32.mxu0 0.0
  %3584 = vmatmul.mubr.f32.gmra.mrb[0].mxu0 %v3512
  %v3585 = vpop.f32.mrb[0].mxu0
  %v3586 = vadd.f32 %v1605, %v3585
  %v3587 = vpop.f32.mrb[0].mxu0
  %v3588 = vadd.f32 %v1609, %v3587
  %3589 = vdwg.mxu0
  %3590 = vmatprep.subr.mxu0 0.0
  %3591 = vmatpush1.msra.mxu0 %v1625
  %3592 = vmatprep.subr.mxu0 0.0
  %3593 = vmatpush1.msra.mxu0 %v1628
  %3594 = vmatprep.subr.mxu0 0.0
  %3595 = vmatpush1.msra.mxu0 %v1631
  %3596 = vmatprep.subr.mxu0 0.0
  %3597 = vmatpush1.msra.mxu0 %v1634
  %3598 = vmatprep.subr.mxu0 0.0
  %3599 = vmatpush1.msra.mxu0 %v1637
  %3600 = vmatprep.subr.mxu0 0.0
  %3601 = vmatpush1.msra.mxu0 %v1640
  %3602 = vmatprep.subr.mxu0 0.0
  %3603 = vmatpush1.msra.mxu0 %v1643
  %3604 = vmatprep.subr.mxu0 0.0
  %3605 = vmatpush1.msra.mxu0 %v1646
  %3606 = vmatprep.subr.mxu0 0.0
  %3607 = vmatpush1.msra.mxu0 %v1649
  %3608 = vmatprep.subr.mxu0 0.0
  %3609 = vmatpush1.msra.mxu0 %v1652
  %3610 = vmatprep.subr.mxu0 0.0
  %3611 = vmatpush1.msra.mxu0 %v1655
  %3612 = vmatprep.subr.mxu0 0.0
  %3613 = vmatpush1.msra.mxu0 %v1658
  %3614 = vmatprep.subr.mxu0 0.0
  %3615 = vmatpush1.msra.mxu0 %v1661
  %3616 = vmatprep.subr.mxu0 0.0
  %3617 = vmatpush1.msra.mxu0 %v1664
  %3618 = vmatprep.subr.mxu0 0.0
  %3619 = vmatpush1.msra.mxu0 %v1667
  %3620 = vmatprep.subr.mxu0 0.0
  %3621 = vmatpush1.msra.mxu0 %v1670
  %3622 = vmatprep.subr.mxu0 0.0
  %3623 = vmatpush1.msra.mxu0 0.0
  %3624 = vmatprep.subr.mxu0 0.0
  %3625 = vmatpush1.msra.mxu0 0.0
  %3626 = vmatprep.subr.mxu0 0.0
  %3627 = vmatpush1.msra.mxu0 0.0
  %3628 = vmatprep.subr.mxu0 0.0
  %3629 = vmatpush1.msra.mxu0 0.0
  %3630 = vmatprep.subr.mxu0 0.0
  %3631 = vmatpush1.msra.mxu0 0.0
  %3632 = vmatprep.subr.mxu0 0.0
  %3633 = vmatpush1.msra.mxu0 0.0
  %3634 = vmatprep.subr.mxu0 0.0
  %3635 = vmatpush1.msra.mxu0 0.0
  %3636 = vmatprep.subr.mxu0 0.0
  %3637 = vmatpush1.msra.mxu0 0.0
  %3638 = vmatprep.subr.mxu0 0.0
  %3639 = vmatpush1.msra.mxu0 0.0
  %3640 = vmatprep.subr.mxu0 0.0
  %3641 = vmatpush1.msra.mxu0 0.0
  %3642 = vmatprep.subr.mxu0 0.0
  %3643 = vmatpush1.msra.mxu0 0.0
  %3644 = vmatprep.subr.mxu0 0.0
  %3645 = vmatpush1.msra.mxu0 0.0
  %3646 = vmatprep.subr.mxu0 0.0
  %3647 = vmatpush1.msra.mxu0 0.0
  %3648 = vmatprep.subr.mxu0 0.0
  %3649 = vmatpush1.msra.mxu0 0.0
  %3650 = vmatprep.subr.mxu0 0.0
  %3651 = vmatpush1.msra.mxu0 0.0
  %3652 = vmatprep.subr.mxu0 0.0
  %3653 = vmatpush1.msra.mxu0 0.0
  %3654 = vmatprep.mubr.f32.mxu0 0.0
  %3655 = vmatmul.mubr.f32.gmra.mrb[0].mxu0 %v3512
  %v3656 = vpop.f32.mrb[0].mxu0
  %v3657 = vadd.f32 %v1613, %v3656
  %v3658 = vpop.f32.mrb[0].mxu0
  %3659 = vdwg.mxu0
  %v3660 = vadd.f32 %v3516, %v3586
  %v3661 = vxor.u32 %v3660, 2147483648
  %v3662 = vmul.f32 %v3661, 1.442695
  %v3663 = vpow.pop %v3662
  %v3664 = vadd.f32 %v3663, 1.0
  %v3665 = vrcp.pop %v3664
  %v3666 = vmul.f32 1.0, %v3665
  %v3667 = vadd.f32 %v3517, %v3588
  %v3668 = vxor.u32 %v3667, 2147483648
  %v3669 = vmul.f32 %v3668, 1.442695
  %v3670 = vpow.pop %v3669
  %v3671 = vadd.f32 %v3670, 1.0
  %v3672 = vrcp.pop %v3671
  %v3673 = vmul.f32 1.0, %v3672
  %v3674 = vmul.f32 %v3666, %v3657
  %v3675 = vadd.f32 %v3518, %v3674
  %v3676 = vtanh.pop %v3675
  %v3677 = vsub.f32 1.0, %v3673
  %v3678 = vmul.f32 %v3677, %v3676
  %v3679 = vmul.f32 %v3673, %v3512
  %v3680 = vadd.f32 %v3678, %v3679
  %s3681 = smul.u32 12, 3
  %s3682 = smul.addr %s3681, 8
  %s3683 = scalar_lea.vmem [#allocation2], %s3682
  %v3684 = vld [vmem:[%s3683] sm:$0xff]
  %v3685 = vld [vmem:[%s3683 + $0x8] sm:$0xff]
  %v3686 = vld [vmem:[%s3683 + $0x10] sm:$0xff]
  %3687 = vmatprep.subr.mxu0 %v1624
  %3688 = vmatpush1.msra.mxu0 %v1623
  %3689 = vmatprep.subr.mxu0 %v1627
  %3690 = vmatpush1.msra.mxu0 %v1626
  %3691 = vmatprep.subr.mxu0 %v1630
  %3692 = vmatpush1.msra.mxu0 %v1629
  %3693 = vmatprep.subr.mxu0 %v1633
  %3694 = vmatpush1.msra.mxu0 %v1632
  %3695 = vmatprep.subr.mxu0 %v1636
  %3696 = vmatpush1.msra.mxu0 %v1635
  %3697 = vmatprep.subr.mxu0 %v1639
  %3698 = vmatpush1.msra.mxu0 %v1638
  %3699 = vmatprep.subr.mxu0 %v1642
  %3700 = vmatpush1.msra.mxu0 %v1641
  %3701 = vmatprep.subr.mxu0 %v1645
  %3702 = vmatpush1.msra.mxu0 %v1644
  %3703 = vmatprep.subr.mxu0 %v1648
  %3704 = vmatpush1.msra.mxu0 %v1647
  %3705 = vmatprep.subr.mxu0 %v1651
  %3706 = vmatpush1.msra.mxu0 %v1650
  %3707 = vmatprep.subr.mxu0 %v1654
  %3708 = vmatpush1.msra.mxu0 %v1653
  %3709 = vmatprep.subr.mxu0 %v1657
  %3710 = vmatpush1.msra.mxu0 %v1656
  %3711 = vmatprep.subr.mxu0 %v1660
  %3712 = vmatpush1.msra.mxu0 %v1659
  %3713 = vmatprep.subr.mxu0 %v1663
  %3714 = vmatpush1.msra.mxu0 %v1662
  %3715 = vmatprep.subr.mxu0 %v1666
  %3716 = vmatpush1.msra.mxu0 %v1665
  %3717 = vmatprep.subr.mxu0 %v1669
  %3718 = vmatpush1.msra.mxu0 %v1668
  %3719 = vmatprep.subr.mxu0 0.0
  %3720 = vmatpush1.msra.mxu0 0.0
  %3721 = vmatprep.subr.mxu0 0.0
  %3722 = vmatpush1.msra.mxu0 0.0
  %3723 = vmatprep.subr.mxu0 0.0
  %3724 = vmatpush1.msra.mxu0 0.0
  %3725 = vmatprep.subr.mxu0 0.0
  %3726 = vmatpush1.msra.mxu0 0.0
  %3727 = vmatprep.subr.mxu0 0.0
  %3728 = vmatpush1.msra.mxu0 0.0
  %3729 = vmatprep.subr.mxu0 0.0
  %3730 = vmatpush1.msra.mxu0 0.0
  %3731 = vmatprep.subr.mxu0 0.0
  %3732 = vmatpush1.msra.mxu0 0.0
  %3733 = vmatprep.subr.mxu0 0.0
  %3734 = vmatpush1.msra.mxu0 0.0
  %3735 = vmatprep.subr.mxu0 0.0
  %3736 = vmatpush1.msra.mxu0 0.0
  %3737 = vmatprep.subr.mxu0 0.0
  %3738 = vmatpush1.msra.mxu0 0.0
  %3739 = vmatprep.subr.mxu0 0.0
  %3740 = vmatpush1.msra.mxu0 0.0
  %3741 = vmatprep.subr.mxu0 0.0
  %3742 = vmatpush1.msra.mxu0 0.0
  %3743 = vmatprep.subr.mxu0 0.0
  %3744 = vmatpush1.msra.mxu0 0.0
  %3745 = vmatprep.subr.mxu0 0.0
  %3746 = vmatpush1.msra.mxu0 0.0
  %3747 = vmatprep.subr.mxu0 0.0
  %3748 = vmatpush1.msra.mxu0 0.0
  %3749 = vmatprep.subr.mxu0 0.0
  %3750 = vmatpush1.msra.mxu0 0.0
  %3751 = vmatprep.mubr.f32.mxu0 0.0
  %3752 = vmatmul.mubr.f32.gmra.mrb[0].mxu0 %v3680
  %v3753 = vpop.f32.mrb[0].mxu0
  %v3754 = vadd.f32 %v1605, %v3753
  %v3755 = vpop.f32.mrb[0].mxu0
  %v3756 = vadd.f32 %v1609, %v3755
  %3757 = vdwg.mxu0
  %3758 = vmatprep.subr.mxu0 0.0
  %3759 = vmatpush1.msra.mxu0 %v1625
  %3760 = vmatprep.subr.mxu0 0.0
  %3761 = vmatpush1.msra.mxu0 %v1628
  %3762 = vmatprep.subr.mxu0 0.0
  %3763 = vmatpush1.msra.mxu0 %v1631
  %3764 = vmatprep.subr.mxu0 0.0
  %3765 = vmatpush1.msra.mxu0 %v1634
  %3766 = vmatprep.subr.mxu0 0.0
  %3767 = vmatpush1.msra.mxu0 %v1637
  %3768 = vmatprep.subr.mxu0 0.0
  %3769 = vmatpush1.msra.mxu0 %v1640
  %3770 = vmatprep.subr.mxu0 0.0
  %3771 = vmatpush1.msra.mxu0 %v1643
  %3772 = vmatprep.subr.mxu0 0.0
  %3773 = vmatpush1.msra.mxu0 %v1646
  %3774 = vmatprep.subr.mxu0 0.0
  %3775 = vmatpush1.msra.mxu0 %v1649
  %3776 = vmatprep.subr.mxu0 0.0
  %3777 = vmatpush1.msra.mxu0 %v1652
  %3778 = vmatprep.subr.mxu0 0.0
  %3779 = vmatpush1.msra.mxu0 %v1655
  %3780 = vmatprep.subr.mxu0 0.0
  %3781 = vmatpush1.msra.mxu0 %v1658
  %3782 = vmatprep.subr.mxu0 0.0
  %3783 = vmatpush1.msra.mxu0 %v1661
  %3784 = vmatprep.subr.mxu0 0.0
  %3785 = vmatpush1.msra.mxu0 %v1664
  %3786 = vmatprep.subr.mxu0 0.0
  %3787 = vmatpush1.msra.mxu0 %v1667
  %3788 = vmatprep.subr.mxu0 0.0
  %3789 = vmatpush1.msra.mxu0 %v1670
  %3790 = vmatprep.subr.mxu0 0.0
  %3791 = vmatpush1.msra.mxu0 0.0
  %3792 = vmatprep.subr.mxu0 0.0
  %3793 = vmatpush1.msra.mxu0 0.0
  %3794 = vmatprep.subr.mxu0 0.0
  %3795 = vmatpush1.msra.mxu0 0.0
  %3796 = vmatprep.subr.mxu0 0.0
  %3797 = vmatpush1.msra.mxu0 0.0
  %3798 = vmatprep.subr.mxu0 0.0
  %3799 = vmatpush1.msra.mxu0 0.0
  %3800 = vmatprep.subr.mxu0 0.0
  %3801 = vmatpush1.msra.mxu0 0.0
  %3802 = vmatprep.subr.mxu0 0.0
  %3803 = vmatpush1.msra.mxu0 0.0
  %3804 = vmatprep.subr.mxu0 0.0
  %3805 = vmatpush1.msra.mxu0 0.0
  %3806 = vmatprep.subr.mxu0 0.0
  %3807 = vmatpush1.msra.mxu0 0.0
  %3808 = vmatprep.subr.mxu0 0.0
  %3809 = vmatpush1.msra.mxu0 0.0
  %3810 = vmatprep.subr.mxu0 0.0
  %3811 = vmatpush1.msra.mxu0 0.0
  %3812 = vmatprep.subr.mxu0 0.0
  %3813 = vmatpush1.msra.mxu0 0.0
  %3814 = vmatprep.subr.mxu0 0.0
  %3815 = vmatpush1.msra.mxu0 0.0
  %3816 = vmatprep.subr.mxu0 0.0
  %3817 = vmatpush1.msra.mxu0 0.0
  %3818 = vmatprep.subr.mxu0 0.0
  %3819 = vmatpush1.msra.mxu0 0.0
  %3820 = vmatprep.subr.mxu0 0.0
  %3821 = vmatpush1.msra.mxu0 0.0
  %3822 = vmatprep.mubr.f32.mxu0 0.0
  %3823 = vmatmul.mubr.f32.gmra.mrb[0].mxu0 %v3680
  %v3824 = vpop.f32.mrb[0].mxu0
  %v3825 = vadd.f32 %v1613, %v3824
  %v3826 = vpop.f32.mrb[0].mxu0
  %3827 = vdwg.mxu0
  %v3828 = vadd.f32 %v3684, %v3754
  %v3829 = vxor.u32 %v3828, 2147483648
  %v3830 = vmul.f32 %v3829, 1.442695
  %v3831 = vpow.pop %v3830
  %v3832 = vadd.f32 %v3831, 1.0
  %v3833 = vrcp.pop %v3832
  %v3834 = vmul.f32 1.0, %v3833
  %v3835 = vadd.f32 %v3685, %v3756
  %v3836 = vxor.u32 %v3835, 2147483648
  %v3837 = vmul.f32 %v3836, 1.442695
  %v3838 = vpow.pop %v3837
  %v3839 = vadd.f32 %v3838, 1.0
  %v3840 = vrcp.pop %v3839
  %v3841 = vmul.f32 1.0, %v3840
  %v3842 = vmul.f32 %v3834, %v3825
  %v3843 = vadd.f32 %v3686, %v3842
  %v3844 = vtanh.pop %v3843
  %v3845 = vsub.f32 1.0, %v3841
  %v3846 = vmul.f32 %v3845, %v3844
  %v3847 = vmul.f32 %v3841, %v3680
  %v3848 = vadd.f32 %v3846, %v3847
  %s3849 = smul.u32 13, 3
  %s3850 = smul.addr %s3849, 8
  %s3851 = scalar_lea.vmem [#allocation2], %s3850
  %v3852 = vld [vmem:[%s3851] sm:$0xff]
  %v3853 = vld [vmem:[%s3851 + $0x8] sm:$0xff]
  %v3854 = vld [vmem:[%s3851 + $0x10] sm:$0xff]
  %3855 = vmatprep.subr.mxu0 %v1624
  %3856 = vmatpush1.msra.mxu0 %v1623
  %3857 = vmatprep.subr.mxu0 %v1627
  %3858 = vmatpush1.msra.mxu0 %v1626
  %3859 = vmatprep.subr.mxu0 %v1630
  %3860 = vmatpush1.msra.mxu0 %v1629
  %3861 = vmatprep.subr.mxu0 %v1633
  %3862 = vmatpush1.msra.mxu0 %v1632
  %3863 = vmatprep.subr.mxu0 %v1636
  %3864 = vmatpush1.msra.mxu0 %v1635
  %3865 = vmatprep.subr.mxu0 %v1639
  %3866 = vmatpush1.msra.mxu0 %v1638
  %3867 = vmatprep.subr.mxu0 %v1642
  %3868 = vmatpush1.msra.mxu0 %v1641
  %3869 = vmatprep.subr.mxu0 %v1645
  %3870 = vmatpush1.msra.mxu0 %v1644
  %3871 = vmatprep.subr.mxu0 %v1648
  %3872 = vmatpush1.msra.mxu0 %v1647
  %3873 = vmatprep.subr.mxu0 %v1651
  %3874 = vmatpush1.msra.mxu0 %v1650
  %3875 = vmatprep.subr.mxu0 %v1654
  %3876 = vmatpush1.msra.mxu0 %v1653
  %3877 = vmatprep.subr.mxu0 %v1657
  %3878 = vmatpush1.msra.mxu0 %v1656
  %3879 = vmatprep.subr.mxu0 %v1660
  %3880 = vmatpush1.msra.mxu0 %v1659
  %3881 = vmatprep.subr.mxu0 %v1663
  %3882 = vmatpush1.msra.mxu0 %v1662
  %3883 = vmatprep.subr.mxu0 %v1666
  %3884 = vmatpush1.msra.mxu0 %v1665
  %3885 = vmatprep.subr.mxu0 %v1669
  %3886 = vmatpush1.msra.mxu0 %v1668
  %3887 = vmatprep.subr.mxu0 0.0
  %3888 = vmatpush1.msra.mxu0 0.0
  %3889 = vmatprep.subr.mxu0 0.0
  %3890 = vmatpush1.msra.mxu0 0.0
  %3891 = vmatprep.subr.mxu0 0.0
  %3892 = vmatpush1.msra.mxu0 0.0
  %3893 = vmatprep.subr.mxu0 0.0
  %3894 = vmatpush1.msra.mxu0 0.0
  %3895 = vmatprep.subr.mxu0 0.0
  %3896 = vmatpush1.msra.mxu0 0.0
  %3897 = vmatprep.subr.mxu0 0.0
  %3898 = vmatpush1.msra.mxu0 0.0
  %3899 = vmatprep.subr.mxu0 0.0
  %3900 = vmatpush1.msra.mxu0 0.0
  %3901 = vmatprep.subr.mxu0 0.0
  %3902 = vmatpush1.msra.mxu0 0.0
  %3903 = vmatprep.subr.mxu0 0.0
  %3904 = vmatpush1.msra.mxu0 0.0
  %3905 = vmatprep.subr.mxu0 0.0
  %3906 = vmatpush1.msra.mxu0 0.0
  %3907 = vmatprep.subr.mxu0 0.0
  %3908 = vmatpush1.msra.mxu0 0.0
  %3909 = vmatprep.subr.mxu0 0.0
  %3910 = vmatpush1.msra.mxu0 0.0
  %3911 = vmatprep.subr.mxu0 0.0
  %3912 = vmatpush1.msra.mxu0 0.0
  %3913 = vmatprep.subr.mxu0 0.0
  %3914 = vmatpush1.msra.mxu0 0.0
  %3915 = vmatprep.subr.mxu0 0.0
  %3916 = vmatpush1.msra.mxu0 0.0
  %3917 = vmatprep.subr.mxu0 0.0
  %3918 = vmatpush1.msra.mxu0 0.0
  %3919 = vmatprep.mubr.f32.mxu0 0.0
  %3920 = vmatmul.mubr.f32.gmra.mrb[0].mxu0 %v3848
  %v3921 = vpop.f32.mrb[0].mxu0
  %v3922 = vadd.f32 %v1605, %v3921
  %v3923 = vpop.f32.mrb[0].mxu0
  %v3924 = vadd.f32 %v1609, %v3923
  %3925 = vdwg.mxu0
  %3926 = vmatprep.subr.mxu0 0.0
  %3927 = vmatpush1.msra.mxu0 %v1625
  %3928 = vmatprep.subr.mxu0 0.0
  %3929 = vmatpush1.msra.mxu0 %v1628
  %3930 = vmatprep.subr.mxu0 0.0
  %3931 = vmatpush1.msra.mxu0 %v1631
  %3932 = vmatprep.subr.mxu0 0.0
  %3933 = vmatpush1.msra.mxu0 %v1634
  %3934 = vmatprep.subr.mxu0 0.0
  %3935 = vmatpush1.msra.mxu0 %v1637
  %3936 = vmatprep.subr.mxu0 0.0
  %3937 = vmatpush1.msra.mxu0 %v1640
  %3938 = vmatprep.subr.mxu0 0.0
  %3939 = vmatpush1.msra.mxu0 %v1643
  %3940 = vmatprep.subr.mxu0 0.0
  %3941 = vmatpush1.msra.mxu0 %v1646
  %3942 = vmatprep.subr.mxu0 0.0
  %3943 = vmatpush1.msra.mxu0 %v1649
  %3944 = vmatprep.subr.mxu0 0.0
  %3945 = vmatpush1.msra.mxu0 %v1652
  %3946 = vmatprep.subr.mxu0 0.0
  %3947 = vmatpush1.msra.mxu0 %v1655
  %3948 = vmatprep.subr.mxu0 0.0
  %3949 = vmatpush1.msra.mxu0 %v1658
  %3950 = vmatprep.subr.mxu0 0.0
  %3951 = vmatpush1.msra.mxu0 %v1661
  %3952 = vmatprep.subr.mxu0 0.0
  %3953 = vmatpush1.msra.mxu0 %v1664
  %3954 = vmatprep.subr.mxu0 0.0
  %3955 = vmatpush1.msra.mxu0 %v1667
  %3956 = vmatprep.subr.mxu0 0.0
  %3957 = vmatpush1.msra.mxu0 %v1670
  %3958 = vmatprep.subr.mxu0 0.0
  %3959 = vmatpush1.msra.mxu0 0.0
  %3960 = vmatprep.subr.mxu0 0.0
  %3961 = vmatpush1.msra.mxu0 0.0
  %3962 = vmatprep.subr.mxu0 0.0
  %3963 = vmatpush1.msra.mxu0 0.0
  %3964 = vmatprep.subr.mxu0 0.0
  %3965 = vmatpush1.msra.mxu0 0.0
  %3966 = vmatprep.subr.mxu0 0.0
  %3967 = vmatpush1.msra.mxu0 0.0
  %3968 = vmatprep.subr.mxu0 0.0
  %3969 = vmatpush1.msra.mxu0 0.0
  %3970 = vmatprep.subr.mxu0 0.0
  %3971 = vmatpush1.msra.mxu0 0.0
  %3972 = vmatprep.subr.mxu0 0.0
  %3973 = vmatpush1.msra.mxu0 0.0
  %3974 = vmatprep.subr.mxu0 0.0
  %3975 = vmatpush1.msra.mxu0 0.0
  %3976 = vmatprep.subr.mxu0 0.0
  %3977 = vmatpush1.msra.mxu0 0.0
  %3978 = vmatprep.subr.mxu0 0.0
  %3979 = vmatpush1.msra.mxu0 0.0
  %3980 = vmatprep.subr.mxu0 0.0
  %3981 = vmatpush1.msra.mxu0 0.0
  %3982 = vmatprep.subr.mxu0 0.0
  %3983 = vmatpush1.msra.mxu0 0.0
  %3984 = vmatprep.subr.mxu0 0.0
  %3985 = vmatpush1.msra.mxu0 0.0
  %3986 = vmatprep.subr.mxu0 0.0
  %3987 = vmatpush1.msra.mxu0 0.0
  %3988 = vmatprep.subr.mxu0 0.0
  %3989 = vmatpush1.msra.mxu0 0.0
  %3990 = vmatprep.mubr.f32.mxu0 0.0
  %3991 = vmatmul.mubr.f32.gmra.mrb[0].mxu0 %v3848
  %v3992 = vpop.f32.mrb[0].mxu0
  %v3993 = vadd.f32 %v1613, %v3992
  %v3994 = vpop.f32.mrb[0].mxu0
  %3995 = vdwg.mxu0
  %v3996 = vadd.f32 %v3852, %v3922
  %v3997 = vxor.u32 %v3996, 2147483648
  %v3998 = vmul.f32 %v3997, 1.442695
  %v3999 = vpow.pop %v3998
  %v4000 = vadd.f32 %v3999, 1.0
  %v4001 = vrcp.pop %v4000
  %v4002 = vmul.f32 1.0, %v4001
  %v4003 = vadd.f32 %v3853, %v3924
  %v4004 = vxor.u32 %v4003, 2147483648
  %v4005 = vmul.f32 %v4004, 1.442695
  %v4006 = vpow.pop %v4005
  %v4007 = vadd.f32 %v4006, 1.0
  %v4008 = vrcp.pop %v4007
  %v4009 = vmul.f32 1.0, %v4008
  %v4010 = vmul.f32 %v4002, %v3993
  %v4011 = vadd.f32 %v3854, %v4010
  %v4012 = vtanh.pop %v4011
  %v4013 = vsub.f32 1.0, %v4009
  %v4014 = vmul.f32 %v4013, %v4012
  %v4015 = vmul.f32 %v4009, %v3848
  %v4016 = vadd.f32 %v4014, %v4015
  %s4017 = smul.u32 14, 3
  %s4018 = smul.addr %s4017, 8
  %s4019 = scalar_lea.vmem [#allocation2], %s4018
  %v4020 = vld [vmem:[%s4019] sm:$0xff]
  %v4021 = vld [vmem:[%s4019 + $0x8] sm:$0xff]
  %v4022 = vld [vmem:[%s4019 + $0x10] sm:$0xff]
  %4023 = vmatprep.subr.mxu0 %v1624
  %4024 = vmatpush1.msra.mxu0 %v1623
  %4025 = vmatprep.subr.mxu0 %v1627
  %4026 = vmatpush1.msra.mxu0 %v1626
  %4027 = vmatprep.subr.mxu0 %v1630
  %4028 = vmatpush1.msra.mxu0 %v1629
  %4029 = vmatprep.subr.mxu0 %v1633
  %4030 = vmatpush1.msra.mxu0 %v1632
  %4031 = vmatprep.subr.mxu0 %v1636
  %4032 = vmatpush1.msra.mxu0 %v1635
  %4033 = vmatprep.subr.mxu0 %v1639
  %4034 = vmatpush1.msra.mxu0 %v1638
  %4035 = vmatprep.subr.mxu0 %v1642
  %4036 = vmatpush1.msra.mxu0 %v1641
  %4037 = vmatprep.subr.mxu0 %v1645
  %4038 = vmatpush1.msra.mxu0 %v1644
  %4039 = vmatprep.subr.mxu0 %v1648
  %4040 = vmatpush1.msra.mxu0 %v1647
  %4041 = vmatprep.subr.mxu0 %v1651
  %4042 = vmatpush1.msra.mxu0 %v1650
  %4043 = vmatprep.subr.mxu0 %v1654
  %4044 = vmatpush1.msra.mxu0 %v1653
  %4045 = vmatprep.subr.mxu0 %v1657
  %4046 = vmatpush1.msra.mxu0 %v1656
  %4047 = vmatprep.subr.mxu0 %v1660
  %4048 = vmatpush1.msra.mxu0 %v1659
  %4049 = vmatprep.subr.mxu0 %v1663
  %4050 = vmatpush1.msra.mxu0 %v1662
  %4051 = vmatprep.subr.mxu0 %v1666
  %4052 = vmatpush1.msra.mxu0 %v1665
  %4053 = vmatprep.subr.mxu0 %v1669
  %4054 = vmatpush1.msra.mxu0 %v1668
  %4055 = vmatprep.subr.mxu0 0.0
  %4056 = vmatpush1.msra.mxu0 0.0
  %4057 = vmatprep.subr.mxu0 0.0
  %4058 = vmatpush1.msra.mxu0 0.0
  %4059 = vmatprep.subr.mxu0 0.0
  %4060 = vmatpush1.msra.mxu0 0.0
  %4061 = vmatprep.subr.mxu0 0.0
  %4062 = vmatpush1.msra.mxu0 0.0
  %4063 = vmatprep.subr.mxu0 0.0
  %4064 = vmatpush1.msra.mxu0 0.0
  %4065 = vmatprep.subr.mxu0 0.0
  %4066 = vmatpush1.msra.mxu0 0.0
  %4067 = vmatprep.subr.mxu0 0.0
  %4068 = vmatpush1.msra.mxu0 0.0
  %4069 = vmatprep.subr.mxu0 0.0
  %4070 = vmatpush1.msra.mxu0 0.0
  %4071 = vmatprep.subr.mxu0 0.0
  %4072 = vmatpush1.msra.mxu0 0.0
  %4073 = vmatprep.subr.mxu0 0.0
  %4074 = vmatpush1.msra.mxu0 0.0
  %4075 = vmatprep.subr.mxu0 0.0
  %4076 = vmatpush1.msra.mxu0 0.0
  %4077 = vmatprep.subr.mxu0 0.0
  %4078 = vmatpush1.msra.mxu0 0.0
  %4079 = vmatprep.subr.mxu0 0.0
  %4080 = vmatpush1.msra.mxu0 0.0
  %4081 = vmatprep.subr.mxu0 0.0
  %4082 = vmatpush1.msra.mxu0 0.0
  %4083 = vmatprep.subr.mxu0 0.0
  %4084 = vmatpush1.msra.mxu0 0.0
  %4085 = vmatprep.subr.mxu0 0.0
  %4086 = vmatpush1.msra.mxu0 0.0
  %4087 = vmatprep.mubr.f32.mxu0 0.0
  %4088 = vmatmul.mubr.f32.gmra.mrb[0].mxu0 %v4016
  %v4089 = vpop.f32.mrb[0].mxu0
  %v4090 = vadd.f32 %v1605, %v4089
  %v4091 = vpop.f32.mrb[0].mxu0
  %v4092 = vadd.f32 %v1609, %v4091
  %4093 = vdwg.mxu0
  %4094 = vmatprep.subr.mxu0 0.0
  %4095 = vmatpush1.msra.mxu0 %v1625
  %4096 = vmatprep.subr.mxu0 0.0
  %4097 = vmatpush1.msra.mxu0 %v1628
  %4098 = vmatprep.subr.mxu0 0.0
  %4099 = vmatpush1.msra.mxu0 %v1631
  %4100 = vmatprep.subr.mxu0 0.0
  %4101 = vmatpush1.msra.mxu0 %v1634
  %4102 = vmatprep.subr.mxu0 0.0
  %4103 = vmatpush1.msra.mxu0 %v1637
  %4104 = vmatprep.subr.mxu0 0.0
  %4105 = vmatpush1.msra.mxu0 %v1640
  %4106 = vmatprep.subr.mxu0 0.0
  %4107 = vmatpush1.msra.mxu0 %v1643
  %4108 = vmatprep.subr.mxu0 0.0
  %4109 = vmatpush1.msra.mxu0 %v1646
  %4110 = vmatprep.subr.mxu0 0.0
  %4111 = vmatpush1.msra.mxu0 %v1649
  %4112 = vmatprep.subr.mxu0 0.0
  %4113 = vmatpush1.msra.mxu0 %v1652
  %4114 = vmatprep.subr.mxu0 0.0
  %4115 = vmatpush1.msra.mxu0 %v1655
  %4116 = vmatprep.subr.mxu0 0.0
  %4117 = vmatpush1.msra.mxu0 %v1658
  %4118 = vmatprep.subr.mxu0 0.0
  %4119 = vmatpush1.msra.mxu0 %v1661
  %4120 = vmatprep.subr.mxu0 0.0
  %4121 = vmatpush1.msra.mxu0 %v1664
  %4122 = vmatprep.subr.mxu0 0.0
  %4123 = vmatpush1.msra.mxu0 %v1667
  %4124 = vmatprep.subr.mxu0 0.0
  %4125 = vmatpush1.msra.mxu0 %v1670
  %4126 = vmatprep.subr.mxu0 0.0
  %4127 = vmatpush1.msra.mxu0 0.0
  %4128 = vmatprep.subr.mxu0 0.0
  %4129 = vmatpush1.msra.mxu0 0.0
  %4130 = vmatprep.subr.mxu0 0.0
  %4131 = vmatpush1.msra.mxu0 0.0
  %4132 = vmatprep.subr.mxu0 0.0
  %4133 = vmatpush1.msra.mxu0 0.0
  %4134 = vmatprep.subr.mxu0 0.0
  %4135 = vmatpush1.msra.mxu0 0.0
  %4136 = vmatprep.subr.mxu0 0.0
  %4137 = vmatpush1.msra.mxu0 0.0
  %4138 = vmatprep.subr.mxu0 0.0
  %4139 = vmatpush1.msra.mxu0 0.0
  %4140 = vmatprep.subr.mxu0 0.0
  %4141 = vmatpush1.msra.mxu0 0.0
  %4142 = vmatprep.subr.mxu0 0.0
  %4143 = vmatpush1.msra.mxu0 0.0
  %4144 = vmatprep.subr.mxu0 0.0
  %4145 = vmatpush1.msra.mxu0 0.0
  %4146 = vmatprep.subr.mxu0 0.0
  %4147 = vmatpush1.msra.mxu0 0.0
  %4148 = vmatprep.subr.mxu0 0.0
  %4149 = vmatpush1.msra.mxu0 0.0
  %4150 = vmatprep.subr.mxu0 0.0
  %4151 = vmatpush1.msra.mxu0 0.0
  %4152 = vmatprep.subr.mxu0 0.0
  %4153 = vmatpush1.msra.mxu0 0.0
  %4154 = vmatprep.subr.mxu0 0.0
  %4155 = vmatpush1.msra.mxu0 0.0
  %4156 = vmatprep.subr.mxu0 0.0
  %4157 = vmatpush1.msra.mxu0 0.0
  %4158 = vmatprep.mubr.f32.mxu0 0.0
  %4159 = vmatmul.mubr.f32.gmra.mrb[0].mxu0 %v4016
  %v4160 = vpop.f32.mrb[0].mxu0
  %v4161 = vadd.f32 %v1613, %v4160
  %v4162 = vpop.f32.mrb[0].mxu0
  %4163 = vdwg.mxu0
  %v4164 = vadd.f32 %v4020, %v4090
  %v4165 = vxor.u32 %v4164, 2147483648
  %v4166 = vmul.f32 %v4165, 1.442695
  %v4167 = vpow.pop %v4166
  %v4168 = vadd.f32 %v4167, 1.0
  %v4169 = vrcp.pop %v4168
  %v4170 = vmul.f32 1.0, %v4169
  %v4171 = vadd.f32 %v4021, %v4092
  %v4172 = vxor.u32 %v4171, 2147483648
  %v4173 = vmul.f32 %v4172, 1.442695
  %v4174 = vpow.pop %v4173
  %v4175 = vadd.f32 %v4174, 1.0
  %v4176 = vrcp.pop %v4175
  %v4177 = vmul.f32 1.0, %v4176
  %v4178 = vmul.f32 %v4170, %v4161
  %v4179 = vadd.f32 %v4022, %v4178
  %v4180 = vtanh.pop %v4179
  %v4181 = vsub.f32 1.0, %v4177
  %v4182 = vmul.f32 %v4181, %v4180
  %v4183 = vmul.f32 %v4177, %v4016
  %v4184 = vadd.f32 %v4182, %v4183
  %s4185 = smul.u32 15, 3
  %s4186 = smul.addr %s4185, 8
  %s4187 = scalar_lea.vmem [#allocation2], %s4186
  %v4188 = vld [vmem:[%s4187] sm:$0xff]
  %v4189 = vld [vmem:[%s4187 + $0x8] sm:$0xff]
  %v4190 = vld [vmem:[%s4187 + $0x10] sm:$0xff]
  %4191 = vmatprep.subr.mxu0 %v1624
  %4192 = vmatpush1.msra.mxu0 %v1623
  %4193 = vmatprep.subr.mxu0 %v1627
  %4194 = vmatpush1.msra.mxu0 %v1626
  %4195 = vmatprep.subr.mxu0 %v1630
  %4196 = vmatpush1.msra.mxu0 %v1629
  %4197 = vmatprep.subr.mxu0 %v1633
  %4198 = vmatpush1.msra.mxu0 %v1632
  %4199 = vmatprep.subr.mxu0 %v1636
  %4200 = vmatpush1.msra.mxu0 %v1635
  %4201 = vmatprep.subr.mxu0 %v1639
  %4202 = vmatpush1.msra.mxu0 %v1638
  %4203 = vmatprep.subr.mxu0 %v1642
  %4204 = vmatpush1.msra.mxu0 %v1641
  %4205 = vmatprep.subr.mxu0 %v1645
  %4206 = vmatpush1.msra.mxu0 %v1644
  %4207 = vmatprep.subr.mxu0 %v1648
  %4208 = vmatpush1.msra.mxu0 %v1647
  %4209 = vmatprep.subr.mxu0 %v1651
  %4210 = vmatpush1.msra.mxu0 %v1650
  %4211 = vmatprep.subr.mxu0 %v1654
  %4212 = vmatpush1.msra.mxu0 %v1653
  %4213 = vmatprep.subr.mxu0 %v1657
  %4214 = vmatpush1.msra.mxu0 %v1656
  %4215 = vmatprep.subr.mxu0 %v1660
  %4216 = vmatpush1.msra.mxu0 %v1659
  %4217 = vmatprep.subr.mxu0 %v1663
  %4218 = vmatpush1.msra.mxu0 %v1662
  %4219 = vmatprep.subr.mxu0 %v1666
  %4220 = vmatpush1.msra.mxu0 %v1665
  %4221 = vmatprep.subr.mxu0 %v1669
  %4222 = vmatpush1.msra.mxu0 %v1668
  %4223 = vmatprep.subr.mxu0 0.0
  %4224 = vmatpush1.msra.mxu0 0.0
  %4225 = vmatprep.subr.mxu0 0.0
  %4226 = vmatpush1.msra.mxu0 0.0
  %4227 = vmatprep.subr.mxu0 0.0
  %4228 = vmatpush1.msra.mxu0 0.0
  %4229 = vmatprep.subr.mxu0 0.0
  %4230 = vmatpush1.msra.mxu0 0.0
  %4231 = vmatprep.subr.mxu0 0.0
  %4232 = vmatpush1.msra.mxu0 0.0
  %4233 = vmatprep.subr.mxu0 0.0
  %4234 = vmatpush1.msra.mxu0 0.0
  %4235 = vmatprep.subr.mxu0 0.0
  %4236 = vmatpush1.msra.mxu0 0.0
  %4237 = vmatprep.subr.mxu0 0.0
  %4238 = vmatpush1.msra.mxu0 0.0
  %4239 = vmatprep.subr.mxu0 0.0
  %4240 = vmatpush1.msra.mxu0 0.0
  %4241 = vmatprep.subr.mxu0 0.0
  %4242 = vmatpush1.msra.mxu0 0.0
  %4243 = vmatprep.subr.mxu0 0.0
  %4244 = vmatpush1.msra.mxu0 0.0
  %4245 = vmatprep.subr.mxu0 0.0
  %4246 = vmatpush1.msra.mxu0 0.0
  %4247 = vmatprep.subr.mxu0 0.0
  %4248 = vmatpush1.msra.mxu0 0.0
  %4249 = vmatprep.subr.mxu0 0.0
  %4250 = vmatpush1.msra.mxu0 0.0
  %4251 = vmatprep.subr.mxu0 0.0
  %4252 = vmatpush1.msra.mxu0 0.0
  %4253 = vmatprep.subr.mxu0 0.0
  %4254 = vmatpush1.msra.mxu0 0.0
  %4255 = vmatprep.mubr.f32.mxu0 0.0
  %4256 = vmatmul.mubr.f32.gmra.mrb[0].mxu0 %v4184
  %v4257 = vpop.f32.mrb[0].mxu0
  %v4258 = vadd.f32 %v1605, %v4257
  %v4259 = vpop.f32.mrb[0].mxu0
  %v4260 = vadd.f32 %v1609, %v4259
  %4261 = vdwg.mxu0
  %4262 = vmatprep.subr.mxu0 0.0
  %4263 = vmatpush1.msra.mxu0 %v1625
  %4264 = vmatprep.subr.mxu0 0.0
  %4265 = vmatpush1.msra.mxu0 %v1628
  %4266 = vmatprep.subr.mxu0 0.0
  %4267 = vmatpush1.msra.mxu0 %v1631
  %4268 = vmatprep.subr.mxu0 0.0
  %4269 = vmatpush1.msra.mxu0 %v1634
  %4270 = vmatprep.subr.mxu0 0.0
  %4271 = vmatpush1.msra.mxu0 %v1637
  %4272 = vmatprep.subr.mxu0 0.0
  %4273 = vmatpush1.msra.mxu0 %v1640
  %4274 = vmatprep.subr.mxu0 0.0
  %4275 = vmatpush1.msra.mxu0 %v1643
  %4276 = vmatprep.subr.mxu0 0.0
  %4277 = vmatpush1.msra.mxu0 %v1646
  %4278 = vmatprep.subr.mxu0 0.0
  %4279 = vmatpush1.msra.mxu0 %v1649
  %4280 = vmatprep.subr.mxu0 0.0
  %4281 = vmatpush1.msra.mxu0 %v1652
  %4282 = vmatprep.subr.mxu0 0.0
  %4283 = vmatpush1.msra.mxu0 %v1655
  %4284 = vmatprep.subr.mxu0 0.0
  %4285 = vmatpush1.msra.mxu0 %v1658
  %4286 = vmatprep.subr.mxu0 0.0
  %4287 = vmatpush1.msra.mxu0 %v1661
  %4288 = vmatprep.subr.mxu0 0.0
  %4289 = vmatpush1.msra.mxu0 %v1664
  %4290 = vmatprep.subr.mxu0 0.0
  %4291 = vmatpush1.msra.mxu0 %v1667
  %4292 = vmatprep.subr.mxu0 0.0
  %4293 = vmatpush1.msra.mxu0 %v1670
  %4294 = vmatprep.subr.mxu0 0.0
  %4295 = vmatpush1.msra.mxu0 0.0
  %4296 = vmatprep.subr.mxu0 0.0
  %4297 = vmatpush1.msra.mxu0 0.0
  %4298 = vmatprep.subr.mxu0 0.0
  %4299 = vmatpush1.msra.mxu0 0.0
  %4300 = vmatprep.subr.mxu0 0.0
  %4301 = vmatpush1.msra.mxu0 0.0
  %4302 = vmatprep.subr.mxu0 0.0
  %4303 = vmatpush1.msra.mxu0 0.0
  %4304 = vmatprep.subr.mxu0 0.0
  %4305 = vmatpush1.msra.mxu0 0.0
  %4306 = vmatprep.subr.mxu0 0.0
  %4307 = vmatpush1.msra.mxu0 0.0
  %4308 = vmatprep.subr.mxu0 0.0
  %4309 = vmatpush1.msra.mxu0 0.0
  %4310 = vmatprep.subr.mxu0 0.0
  %4311 = vmatpush1.msra.mxu0 0.0
  %4312 = vmatprep.subr.mxu0 0.0
  %4313 = vmatpush1.msra.mxu0 0.0
  %4314 = vmatprep.subr.mxu0 0.0
  %4315 = vmatpush1.msra.mxu0 0.0
  %4316 = vmatprep.subr.mxu0 0.0
  %4317 = vmatpush1.msra.mxu0 0.0
  %4318 = vmatprep.subr.mxu0 0.0
  %4319 = vmatpush1.msra.mxu0 0.0
  %4320 = vmatprep.subr.mxu0 0.0
  %4321 = vmatpush1.msra.mxu0 0.0
  %4322 = vmatprep.subr.mxu0 0.0
  %4323 = vmatpush1.msra.mxu0 0.0
  %4324 = vmatprep.subr.mxu0 0.0
  %4325 = vmatpush1.msra.mxu0 0.0
  %4326 = vmatprep.mubr.f32.mxu0 0.0
  %4327 = vmatmul.mubr.f32.gmra.mrb[0].mxu0 %v4184
  %v4328 = vpop.f32.mrb[0].mxu0
  %v4329 = vadd.f32 %v1613, %v4328
  %v4330 = vpop.f32.mrb[0].mxu0
  %4331 = vdwg.mxu0
  %v4332 = vadd.f32 %v4188, %v4258
  %v4333 = vxor.u32 %v4332, 2147483648
  %v4334 = vmul.f32 %v4333, 1.442695
  %v4335 = vpow.pop %v4334
  %v4336 = vadd.f32 %v4335, 1.0
  %v4337 = vrcp.pop %v4336
  %v4338 = vmul.f32 1.0, %v4337
  %v4339 = vadd.f32 %v4189, %v4260
  %v4340 = vxor.u32 %v4339, 2147483648
  %v4341 = vmul.f32 %v4340, 1.442695
  %v4342 = vpow.pop %v4341
  %v4343 = vadd.f32 %v4342, 1.0
  %v4344 = vrcp.pop %v4343
  %v4345 = vmul.f32 1.0, %v4344
  %v4346 = vmul.f32 %v4338, %v4329
  %v4347 = vadd.f32 %v4190, %v4346
  %v4348 = vtanh.pop %v4347
  %v4349 = vsub.f32 1.0, %v4345
  %v4350 = vmul.f32 %v4349, %v4348
  %v4351 = vmul.f32 %v4345, %v4184
  %v4352 = vadd.f32 %v4350, %v4351
  %v4353 = vld [vmem:[%s9] sm:$0xff]
  %v4354 = vld [vmem:[%s9 + $0x8] sm:$0xff]
  %v4355 = vld [vmem:[%s9 + $0x10] sm:$0xff]
  %v4356 = vld [vmem:[%s9 + $0x18] sm:$0xff]
  %v4357 = vld [vmem:[%s9 + $0x20] sm:$0xff]
  %v4358 = vld [vmem:[%s9 + $0x28] sm:$0xff]
  %v4359 = vld [vmem:[%s9 + $0x30] sm:$0xff]
  %v4360 = vld [vmem:[%s9 + $0x38] sm:$0xff]
  %v4361 = vld [vmem:[%s9 + $0x40] sm:$0xff]
  %v4362 = vld [vmem:[%s9 + $0x48] sm:$0xff]
  %v4363 = vld [vmem:[%s9 + $0x50] sm:$0xff]
  %v4364 = vld [vmem:[%s9 + $0x58] sm:$0xff]
  %v4365 = vld [vmem:[%s9 + $0x60] sm:$0xff]
  %v4366 = vld [vmem:[%s9 + $0x68] sm:$0xff]
  %v4367 = vld [vmem:[%s9 + $0x70] sm:$0xff]
  %v4368 = vld [vmem:[%s9 + $0x78] sm:$0xff]
  %v4369 = vld [vmem:[%s10] sm:$0x1]
  %v4371 = vlaneseq
  %v4372 = vshrl.u32 %v4371, 7
  %v4373 = vsub.s32 0, %v4372
  %v4374 = vrot.slane %v4369, %v4373
  %4376 = vmatprep.subr.mxu0 0.0
  %4377 = vmatpush1.msra.mxu0 %v4353
  %4378 = vmatprep.subr.mxu0 0.0
  %4379 = vmatpush1.msra.mxu0 %v4354
  %4380 = vmatprep.subr.mxu0 0.0
  %4381 = vmatpush1.msra.mxu0 %v4355
  %4382 = vmatprep.subr.mxu0 0.0
  %4383 = vmatpush1.msra.mxu0 %v4356
  %4384 = vmatprep.subr.mxu0 0.0
  %4385 = vmatpush1.msra.mxu0 %v4357
  %4386 = vmatprep.subr.mxu0 0.0
  %4387 = vmatpush1.msra.mxu0 %v4358
  %4388 = vmatprep.subr.mxu0 0.0
  %4389 = vmatpush1.msra.mxu0 %v4359
  %4390 = vmatprep.subr.mxu0 0.0
  %4391 = vmatpush1.msra.mxu0 %v4360
  %4392 = vmatprep.subr.mxu0 0.0
  %4393 = vmatpush1.msra.mxu0 %v4361
  %4394 = vmatprep.subr.mxu0 0.0
  %4395 = vmatpush1.msra.mxu0 %v4362
  %4396 = vmatprep.subr.mxu0 0.0
  %4397 = vmatpush1.msra.mxu0 %v4363
  %4398 = vmatprep.subr.mxu0 0.0
  %4399 = vmatpush1.msra.mxu0 %v4364
  %4400 = vmatprep.subr.mxu0 0.0
  %4401 = vmatpush1.msra.mxu0 %v4365
  %4402 = vmatprep.subr.mxu0 0.0
  %4403 = vmatpush1.msra.mxu0 %v4366
  %4404 = vmatprep.subr.mxu0 0.0
  %4405 = vmatpush1.msra.mxu0 %v4367
  %4406 = vmatprep.subr.mxu0 0.0
  %4407 = vmatpush1.msra.mxu0 %v4368
  %4408 = vmatprep.subr.mxu0 0.0
  %4409 = vmatpush1.msra.mxu0 0.0
  %4410 = vmatprep.subr.mxu0 0.0
  %4411 = vmatpush1.msra.mxu0 0.0
  %4412 = vmatprep.subr.mxu0 0.0
  %4413 = vmatpush1.msra.mxu0 0.0
  %4414 = vmatprep.subr.mxu0 0.0
  %4415 = vmatpush1.msra.mxu0 0.0
  %4416 = vmatprep.subr.mxu0 0.0
  %4417 = vmatpush1.msra.mxu0 0.0
  %4418 = vmatprep.subr.mxu0 0.0
  %4419 = vmatpush1.msra.mxu0 0.0
  %4420 = vmatprep.subr.mxu0 0.0
  %4421 = vmatpush1.msra.mxu0 0.0
  %4422 = vmatprep.subr.mxu0 0.0
  %4423 = vmatpush1.msra.mxu0 0.0
  %4424 = vmatprep.subr.mxu0 0.0
  %4425 = vmatpush1.msra.mxu0 0.0
  %4426 = vmatprep.subr.mxu0 0.0
  %4427 = vmatpush1.msra.mxu0 0.0
  %4428 = vmatprep.subr.mxu0 0.0
  %4429 = vmatpush1.msra.mxu0 0.0
  %4430 = vmatprep.subr.mxu0 0.0
  %4431 = vmatpush1.msra.mxu0 0.0
  %4432 = vmatprep.subr.mxu0 0.0
  %4433 = vmatpush1.msra.mxu0 0.0
  %4434 = vmatprep.subr.mxu0 0.0
  %4435 = vmatpush1.msra.mxu0 0.0
  %4436 = vmatprep.subr.mxu0 0.0
  %4437 = vmatpush1.msra.mxu0 0.0
  %4438 = vmatprep.subr.mxu0 0.0
  %4439 = vmatpush1.msra.mxu0 0.0
  %4440 = vmatprep.mubr.f32.mxu0 0.0
  %4441 = vmatmul.mubr.f32.gmra.mrb[0].mxu0 %v4352
  %v4442 = vpop.f32.mrb[0].mxu0
  %v4443 = vadd.f32 %v4374, %v4442
  %v4444 = vpop.f32.mrb[0].mxu0
  %4445 = vdwg.mxu0
  %vm4446 = vcmask 580608
  %4447 = vst.msk [vmem:[%s11] sm:$0xff] %vm4446, %v4443
  // Predicated region
  $region46: #{conv_rnn_classifier.1} parent=0 // pred_check
    _
  $region47: #{conv_rnn_classifier.1} parent=0 // pred_check_branch
    %4449 = sbr.rel (0) target = $region49
  $region48: #{conv_rnn_classifier.1} parent=0 // pred_region
    _
  $region49: #{conv_rnn_classifier.1} parent=0 // pred_fallthru
    _
  // Predicated region
  $region50: #{conv_rnn_classifier.1} parent=0 // pred_check
    _
  $region51: #{conv_rnn_classifier.1} parent=0 // pred_check_branch
    %4451 = sbr.rel (0) target = $region53
  $region52: #{conv_rnn_classifier.1} parent=0 // pred_region
    _
  $region53: #{conv_rnn_classifier.1} parent=0 // pred_fallthru
    _

</llo_original>
